<compile_context>
chip_gen: v5e
topology: v5e:2x2
jax: 0.10.0
libtpu: 0.0.40
codegen_flags: <defaults>
</compile_context>

<pallas_src>
import jax
import jax.numpy as jnp
from jax.experimental import pallas as pl
from jax.experimental.pallas import tpu as pltpu


def dwconv3d_kernel(xp_ref, w_ref, b_ref, o_ref):
    # xp_ref: (D+2, H+2, W+2, C)  zero-padded input volume (native dtype)
    # w_ref : (27, C)             f32 depthwise taps, tap index = kd*9 + kh*3 + kw
    # b_ref : (1, C)              f32 bias
    # o_ref : (D, H, W, C)
    D, H, W, C = o_ref.shape

    w_all = w_ref[...].astype(jnp.float32)                       # (27, C)
    bias = b_ref[...].astype(jnp.float32)                        # (1, C)

    # f32 accumulator initialized with the bias (broadcast over the spatial block).
    acc = jnp.broadcast_to(bias.reshape(1, 1, 1, C), (D, H, W, C))

    # 3x3x3 depthwise conv = 27 shifted elementwise multiply-adds (pure VPU work).
    for kd in range(3):
        for kh in range(3):
            for kw in range(3):
                tap = kd * 9 + kh * 3 + kw
                xs = xp_ref[kd:kd + D, kh:kh + H, kw:kw + W, :]   # native dtype view
                acc = acc + xs.astype(jnp.float32) * w_all[tap].reshape(1, 1, 1, C)

    o_ref[...] = acc.astype(o_ref.dtype)


def dwconv_lka(x, w, b):
    """
    Depthwise 3-D convolution, kernel 3, stride 1, padding 1, groups=C, with bias.

    Args:
        x: (B, C, D, H, W)   -- PyTorch NCDHW layout
        w: (C, 1, 3, 3, 3)   -- PyTorch Conv3d weight layout for groups=C
        b: (C,)
    Returns:
        (B, C, D, H, W)
    """
    B, C, D, H, W = x.shape

    # Channels-last so C sits on the lane axis, then zero-pad the spatial dims by 1.
    x_cl = jnp.transpose(x, (0, 2, 3, 4, 1))                              # (B, D, H, W, C)
    x_pad = jnp.pad(x_cl, ((0, 0), (1, 1), (1, 1), (1, 1), (0, 0)))       # (B, D+2, H+2, W+2, C)
    # Fold B into the (padded) depth axis so all kernel blocks are 4-D.
    x_pad = x_pad.reshape(B * (D + 2), H + 2, W + 2, C)

    # Taps as (27, C): one per-channel weight vector per kernel position.
    w_taps = jnp.transpose(w.reshape(C, 27), (1, 0)).astype(jnp.float32)  # (27, C)
    b2 = b.reshape(1, C).astype(jnp.float32)                              # (1, C)

    out_flat = pl.pallas_call(
        dwconv3d_kernel,
        out_shape=jax.ShapeDtypeStruct((B * D, H, W, C), x.dtype),
        grid_spec=pltpu.PrefetchScalarGridSpec(
            num_scalar_prefetch=0,
            grid=(B,),
            in_specs=[
                # One full padded volume per batch element per grid step.
                pl.BlockSpec((D + 2, H + 2, W + 2, C), lambda bb: (bb, 0, 0, 0)),
                # Tiny static weights / bias: constant index_map -> DMA'd once, resident.
                pl.BlockSpec((27, C), lambda bb: (0, 0)),
                pl.BlockSpec((1, C), lambda bb: (0, 0)),
            ],
            out_specs=pl.BlockSpec((D, H, W, C), lambda bb: (bb, 0, 0, 0)),
        ),
        compiler_params=pltpu.CompilerParams(
            dimension_semantics=("parallel",),          # shard batch across TCs (v7x megacore)
            vmem_limit_bytes=32 * 1024 * 1024,          # safe on v5e/v6e/v7x; raises v5e's 16 MiB default
        ),
    )(x_pad, w_taps, b2)

    out_cl = out_flat.reshape(B, D, H, W, C)
    return jnp.transpose(out_cl, (0, 4, 1, 2, 3))                          # back to NCDHW


def dwconv_lka_ref(x, w, b):
    """Pure-JAX reference mirroring the PyTorch forward (depthwise Conv3d + bias)."""
    C = x.shape[1]
    out = jax.lax.conv_general_dilated(
        x, w,
        window_strides=(1, 1, 1),
        padding=((1, 1), (1, 1), (1, 1)),
        dimension_numbers=("NCDHW", "OIDHW", "NCDHW"),
        feature_group_count=C,
    )
    return out + b[None, :, None, None, None]


if __name__ == "__main__":
    # Small shapes consistent with the module: NCDHW input, dim = C channels.
    B, C, D, H, W = 2, 128, 8, 8, 8

    key = jax.random.PRNGKey(0)
    kx, kw, kb = jax.random.split(key, 3)

    x = jax.random.normal(kx, (B, C, D, H, W), dtype=jnp.float32)
    # PyTorch Conv3d(groups=C) weight layout: (out_channels, in_channels/groups, kD, kH, kW)
    w = jax.random.normal(kw, (C, 1, 3, 3, 3), dtype=jnp.float32) * (1.0 / jnp.sqrt(27.0))
    b = jax.random.normal(kb, (C,), dtype=jnp.float32) * 0.1

    out = dwconv_lka(x, w, b)
    out = jax.block_until_ready(out)

    ref = dwconv_lka_ref(x, w, b)
    assert out.shape == (B, C, D, H, W)
    assert jnp.allclose(out, ref, atol=1e-4, rtol=1e-4), "mismatch vs reference"

    print("KERNEL_OK")
</pallas_src>

<mosaic_0001>
module attributes {stable_mosaic.version = 11 : i64} {
  func.func @dwconv3d_kernel(%arg0: i32, %arg1: memref<10x10x10x128xf32, #tpu.memory_space<vmem>>, %arg2: memref<27x128xf32, #tpu.memory_space<vmem>>, %arg3: memref<1x128xf32, #tpu.memory_space<vmem>>, %arg4: memref<8x8x8x128xf32, #tpu.memory_space<vmem>>) attributes {dimension_semantics = [#tpu.dimension_semantics<parallel>], iteration_bounds = array<i64: 2>, scalar_prefetch = 0 : i64, scratch_operands = 0 : i64, tpu.core_type = #tpu.core_type<tc>, window_params = [{transform_indices = @transform_0, window_bounds = array<i64: 10, 10, 10, 128>}, {pipeline_mode = #tpu.pipeline_mode<synchronous>, transform_indices = @transform_1, window_bounds = array<i64: 27, 128>}, {pipeline_mode = #tpu.pipeline_mode<synchronous>, transform_indices = @transform_2, window_bounds = array<i64: 1, 128>}, {transform_indices = @transform_3, window_bounds = array<i64: 8, 8, 8, 128>}]} {
    %c0 = arith.constant 0 : index
    %c0_0 = arith.constant 0 : index
    %0 = vector.load %arg2[%c0, %c0_0] : memref<27x128xf32, #tpu.memory_space<vmem>>, vector<27x128xf32>
    %c0_1 = arith.constant 0 : index
    %c0_2 = arith.constant 0 : index
    %1 = vector.load %arg3[%c0_1, %c0_2] : memref<1x128xf32, #tpu.memory_space<vmem>>, vector<1x128xf32>
    %2 = vector.shape_cast %1 : vector<1x128xf32> to vector<1x1x1x128xf32>
    %3 = vector.shape_cast %2 : vector<1x1x1x128xf32> to vector<1x1x1x128xf32>
    %4 = vector.broadcast %3 : vector<1x1x1x128xf32> to vector<8x8x8x128xf32>
    %c0_3 = arith.constant 0 : index
    %c0_4 = arith.constant 0 : index
    %c0_5 = arith.constant 0 : index
    %c0_6 = arith.constant 0 : index
    %5 = vector.load %arg1[%c0_3, %c0_4, %c0_5, %c0_6] : memref<10x10x10x128xf32, #tpu.memory_space<vmem>>, vector<8x8x8x128xf32>
    %6 = vector.extract_strided_slice %0 {offsets = [0, 0], sizes = [1, 128], strides = [1, 1]} : vector<27x128xf32> to vector<1x128xf32>
    %7 = vector.shape_cast %6 : vector<1x128xf32> to vector<128xf32>
    %8 = vector.shape_cast %7 : vector<128xf32> to vector<1x1x1x128xf32>
    %9 = vector.broadcast %8 : vector<1x1x1x128xf32> to vector<8x8x8x128xf32>
    %10 = arith.mulf %5, %9 : vector<8x8x8x128xf32>
    %11 = arith.addf %4, %10 : vector<8x8x8x128xf32>
    %c0_7 = arith.constant 0 : index
    %c0_8 = arith.constant 0 : index
    %c1 = arith.constant 1 : index
    %c0_9 = arith.constant 0 : index
    %12 = vector.load %arg1[%c0_7, %c0_8, %c1, %c0_9] : memref<10x10x10x128xf32, #tpu.memory_space<vmem>>, vector<8x8x8x128xf32>
    %13 = vector.extract_strided_slice %0 {offsets = [1, 0], sizes = [1, 128], strides = [1, 1]} : vector<27x128xf32> to vector<1x128xf32>
    %14 = vector.shape_cast %13 : vector<1x128xf32> to vector<128xf32>
    %15 = vector.shape_cast %14 : vector<128xf32> to vector<1x1x1x128xf32>
    %16 = vector.broadcast %15 : vector<1x1x1x128xf32> to vector<8x8x8x128xf32>
    %17 = arith.mulf %12, %16 : vector<8x8x8x128xf32>
    %18 = arith.addf %11, %17 : vector<8x8x8x128xf32>
    %c0_10 = arith.constant 0 : index
    %c0_11 = arith.constant 0 : index
    %c2 = arith.constant 2 : index
    %c0_12 = arith.constant 0 : index
    %19 = vector.load %arg1[%c0_10, %c0_11, %c2, %c0_12] : memref<10x10x10x128xf32, #tpu.memory_space<vmem>>, vector<8x8x8x128xf32>
    %20 = vector.extract_strided_slice %0 {offsets = [2, 0], sizes = [1, 128], strides = [1, 1]} : vector<27x128xf32> to vector<1x128xf32>
    %21 = vector.shape_cast %20 : vector<1x128xf32> to vector<128xf32>
    %22 = vector.shape_cast %21 : vector<128xf32> to vector<1x1x1x128xf32>
    %23 = vector.broadcast %22 : vector<1x1x1x128xf32> to vector<8x8x8x128xf32>
    %24 = arith.mulf %19, %23 : vector<8x8x8x128xf32>
    %25 = arith.addf %18, %24 : vector<8x8x8x128xf32>
    %c0_13 = arith.constant 0 : index
    %c1_14 = arith.constant 1 : index
    %c0_15 = arith.constant 0 : index
    %c0_16 = arith.constant 0 : index
    %26 = vector.load %arg1[%c0_13, %c1_14, %c0_15, %c0_16] : memref<10x10x10x128xf32, #tpu.memory_space<vmem>>, vector<8x8x8x128xf32>
    %27 = vector.extract_strided_slice %0 {offsets = [3, 0], sizes = [1, 128], strides = [1, 1]} : vector<27x128xf32> to vector<1x128xf32>
    %28 = vector.shape_cast %27 : vector<1x128xf32> to vector<128xf32>
    %29 = vector.shape_cast %28 : vector<128xf32> to vector<1x1x1x128xf32>
    %30 = vector.broadcast %29 : vector<1x1x1x128xf32> to vector<8x8x8x128xf32>
    %31 = arith.mulf %26, %30 : vector<8x8x8x128xf32>
    %32 = arith.addf %25, %31 : vector<8x8x8x128xf32>
    %c0_17 = arith.constant 0 : index
    %c1_18 = arith.constant 1 : index
    %c1_19 = arith.constant 1 : index
    %c0_20 = arith.constant 0 : index
    %33 = vector.load %arg1[%c0_17, %c1_18, %c1_19, %c0_20] : memref<10x10x10x128xf32, #tpu.memory_space<vmem>>, vector<8x8x8x128xf32>
    %34 = vector.extract_strided_slice %0 {offsets = [4, 0], sizes = [1, 128], strides = [1, 1]} : vector<27x128xf32> to vector<1x128xf32>
    %35 = vector.shape_cast %34 : vector<1x128xf32> to vector<128xf32>
    %36 = vector.shape_cast %35 : vector<128xf32> to vector<1x1x1x128xf32>
    %37 = vector.broadcast %36 : vector<1x1x1x128xf32> to vector<8x8x8x128xf32>
    %38 = arith.mulf %33, %37 : vector<8x8x8x128xf32>
    %39 = arith.addf %32, %38 : vector<8x8x8x128xf32>
    %c0_21 = arith.constant 0 : index
    %c1_22 = arith.constant 1 : index
    %c2_23 = arith.constant 2 : index
    %c0_24 = arith.constant 0 : index
    %40 = vector.load %arg1[%c0_21, %c1_22, %c2_23, %c0_24] : memref<10x10x10x128xf32, #tpu.memory_space<vmem>>, vector<8x8x8x128xf32>
    %41 = vector.extract_strided_slice %0 {offsets = [5, 0], sizes = [1, 128], strides = [1, 1]} : vector<27x128xf32> to vector<1x128xf32>
    %42 = vector.shape_cast %41 : vector<1x128xf32> to vector<128xf32>
    %43 = vector.shape_cast %42 : vector<128xf32> to vector<1x1x1x128xf32>
    %44 = vector.broadcast %43 : vector<1x1x1x128xf32> to vector<8x8x8x128xf32>
    %45 = arith.mulf %40, %44 : vector<8x8x8x128xf32>
    %46 = arith.addf %39, %45 : vector<8x8x8x128xf32>
    %c0_25 = arith.constant 0 : index
    %c2_26 = arith.constant 2 : index
    %c0_27 = arith.constant 0 : index
    %c0_28 = arith.constant 0 : index
    %47 = vector.load %arg1[%c0_25, %c2_26, %c0_27, %c0_28] : memref<10x10x10x128xf32, #tpu.memory_space<vmem>>, vector<8x8x8x128xf32>
    %48 = vector.extract_strided_slice %0 {offsets = [6, 0], sizes = [1, 128], strides = [1, 1]} : vector<27x128xf32> to vector<1x128xf32>
    %49 = vector.shape_cast %48 : vector<1x128xf32> to vector<128xf32>
    %50 = vector.shape_cast %49 : vector<128xf32> to vector<1x1x1x128xf32>
    %51 = vector.broadcast %50 : vector<1x1x1x128xf32> to vector<8x8x8x128xf32>
    %52 = arith.mulf %47, %51 : vector<8x8x8x128xf32>
    %53 = arith.addf %46, %52 : vector<8x8x8x128xf32>
    %c0_29 = arith.constant 0 : index
    %c2_30 = arith.constant 2 : index
    %c1_31 = arith.constant 1 : index
    %c0_32 = arith.constant 0 : index
    %54 = vector.load %arg1[%c0_29, %c2_30, %c1_31, %c0_32] : memref<10x10x10x128xf32, #tpu.memory_space<vmem>>, vector<8x8x8x128xf32>
    %55 = vector.extract_strided_slice %0 {offsets = [7, 0], sizes = [1, 128], strides = [1, 1]} : vector<27x128xf32> to vector<1x128xf32>
    %56 = vector.shape_cast %55 : vector<1x128xf32> to vector<128xf32>
    %57 = vector.shape_cast %56 : vector<128xf32> to vector<1x1x1x128xf32>
    %58 = vector.broadcast %57 : vector<1x1x1x128xf32> to vector<8x8x8x128xf32>
    %59 = arith.mulf %54, %58 : vector<8x8x8x128xf32>
    %60 = arith.addf %53, %59 : vector<8x8x8x128xf32>
    %c0_33 = arith.constant 0 : index
    %c2_34 = arith.constant 2 : index
    %c2_35 = arith.constant 2 : index
    %c0_36 = arith.constant 0 : index
    %61 = vector.load %arg1[%c0_33, %c2_34, %c2_35, %c0_36] : memref<10x10x10x128xf32, #tpu.memory_space<vmem>>, vector<8x8x8x128xf32>
    %62 = vector.extract_strided_slice %0 {offsets = [8, 0], sizes = [1, 128], strides = [1, 1]} : vector<27x128xf32> to vector<1x128xf32>
    %63 = vector.shape_cast %62 : vector<1x128xf32> to vector<128xf32>
    %64 = vector.shape_cast %63 : vector<128xf32> to vector<1x1x1x128xf32>
    %65 = vector.broadcast %64 : vector<1x1x1x128xf32> to vector<8x8x8x128xf32>
    %66 = arith.mulf %61, %65 : vector<8x8x8x128xf32>
    %67 = arith.addf %60, %66 : vector<8x8x8x128xf32>
    %c1_37 = arith.constant 1 : index
    %c0_38 = arith.constant 0 : index
    %c0_39 = arith.constant 0 : index
    %c0_40 = arith.constant 0 : index
    %68 = vector.load %arg1[%c1_37, %c0_38, %c0_39, %c0_40] : memref<10x10x10x128xf32, #tpu.memory_space<vmem>>, vector<8x8x8x128xf32>
    %69 = vector.extract_strided_slice %0 {offsets = [9, 0], sizes = [1, 128], strides = [1, 1]} : vector<27x128xf32> to vector<1x128xf32>
    %70 = vector.shape_cast %69 : vector<1x128xf32> to vector<128xf32>
    %71 = vector.shape_cast %70 : vector<128xf32> to vector<1x1x1x128xf32>
    %72 = vector.broadcast %71 : vector<1x1x1x128xf32> to vector<8x8x8x128xf32>
    %73 = arith.mulf %68, %72 : vector<8x8x8x128xf32>
    %74 = arith.addf %67, %73 : vector<8x8x8x128xf32>
    %c1_41 = arith.constant 1 : index
    %c0_42 = arith.constant 0 : index
    %c1_43 = arith.constant 1 : index
    %c0_44 = arith.constant 0 : index
    %75 = vector.load %arg1[%c1_41, %c0_42, %c1_43, %c0_44] : memref<10x10x10x128xf32, #tpu.memory_space<vmem>>, vector<8x8x8x128xf32>
    %76 = vector.extract_strided_slice %0 {offsets = [10, 0], sizes = [1, 128], strides = [1, 1]} : vector<27x128xf32> to vector<1x128xf32>
    %77 = vector.shape_cast %76 : vector<1x128xf32> to vector<128xf32>
    %78 = vector.shape_cast %77 : vector<128xf32> to vector<1x1x1x128xf32>
    %79 = vector.broadcast %78 : vector<1x1x1x128xf32> to vector<8x8x8x128xf32>
    %80 = arith.mulf %75, %79 : vector<8x8x8x128xf32>
    %81 = arith.addf %74, %80 : vector<8x8x8x128xf32>
    %c1_45 = arith.constant 1 : index
    %c0_46 = arith.constant 0 : index
    %c2_47 = arith.constant 2 : index
    %c0_48 = arith.constant 0 : index
    %82 = vector.load %arg1[%c1_45, %c0_46, %c2_47, %c0_48] : memref<10x10x10x128xf32, #tpu.memory_space<vmem>>, vector<8x8x8x128xf32>
    %83 = vector.extract_strided_slice %0 {offsets = [11, 0], sizes = [1, 128], strides = [1, 1]} : vector<27x128xf32> to vector<1x128xf32>
    %84 = vector.shape_cast %83 : vector<1x128xf32> to vector<128xf32>
    %85 = vector.shape_cast %84 : vector<128xf32> to vector<1x1x1x128xf32>
    %86 = vector.broadcast %85 : vector<1x1x1x128xf32> to vector<8x8x8x128xf32>
    %87 = arith.mulf %82, %86 : vector<8x8x8x128xf32>
    %88 = arith.addf %81, %87 : vector<8x8x8x128xf32>
    %c1_49 = arith.constant 1 : index
    %c1_50 = arith.constant 1 : index
    %c0_51 = arith.constant 0 : index
    %c0_52 = arith.constant 0 : index
    %89 = vector.load %arg1[%c1_49, %c1_50, %c0_51, %c0_52] : memref<10x10x10x128xf32, #tpu.memory_space<vmem>>, vector<8x8x8x128xf32>
    %90 = vector.extract_strided_slice %0 {offsets = [12, 0], sizes = [1, 128], strides = [1, 1]} : vector<27x128xf32> to vector<1x128xf32>
    %91 = vector.shape_cast %90 : vector<1x128xf32> to vector<128xf32>
    %92 = vector.shape_cast %91 : vector<128xf32> to vector<1x1x1x128xf32>
    %93 = vector.broadcast %92 : vector<1x1x1x128xf32> to vector<8x8x8x128xf32>
    %94 = arith.mulf %89, %93 : vector<8x8x8x128xf32>
    %95 = arith.addf %88, %94 : vector<8x8x8x128xf32>
    %c1_53 = arith.constant 1 : index
    %c1_54 = arith.constant 1 : index
    %c1_55 = arith.constant 1 : index
    %c0_56 = arith.constant 0 : index
    %96 = vector.load %arg1[%c1_53, %c1_54, %c1_55, %c0_56] : memref<10x10x10x128xf32, #tpu.memory_space<vmem>>, vector<8x8x8x128xf32>
    %97 = vector.extract_strided_slice %0 {offsets = [13, 0], sizes = [1, 128], strides = [1, 1]} : vector<27x128xf32> to vector<1x128xf32>
    %98 = vector.shape_cast %97 : vector<1x128xf32> to vector<128xf32>
    %99 = vector.shape_cast %98 : vector<128xf32> to vector<1x1x1x128xf32>
    %100 = vector.broadcast %99 : vector<1x1x1x128xf32> to vector<8x8x8x128xf32>
    %101 = arith.mulf %96, %100 : vector<8x8x8x128xf32>
    %102 = arith.addf %95, %101 : vector<8x8x8x128xf32>
    %c1_57 = arith.constant 1 : index
    %c1_58 = arith.constant 1 : index
    %c2_59 = arith.constant 2 : index
    %c0_60 = arith.constant 0 : index
    %103 = vector.load %arg1[%c1_57, %c1_58, %c2_59, %c0_60] : memref<10x10x10x128xf32, #tpu.memory_space<vmem>>, vector<8x8x8x128xf32>
    %104 = vector.extract_strided_slice %0 {offsets = [14, 0], sizes = [1, 128], strides = [1, 1]} : vector<27x128xf32> to vector<1x128xf32>
    %105 = vector.shape_cast %104 : vector<1x128xf32> to vector<128xf32>
    %106 = vector.shape_cast %105 : vector<128xf32> to vector<1x1x1x128xf32>
    %107 = vector.broadcast %106 : vector<1x1x1x128xf32> to vector<8x8x8x128xf32>
    %108 = arith.mulf %103, %107 : vector<8x8x8x128xf32>
    %109 = arith.addf %102, %108 : vector<8x8x8x128xf32>
    %c1_61 = arith.constant 1 : index
    %c2_62 = arith.constant 2 : index
    %c0_63 = arith.constant 0 : index
    %c0_64 = arith.constant 0 : index
    %110 = vector.load %arg1[%c1_61, %c2_62, %c0_63, %c0_64] : memref<10x10x10x128xf32, #tpu.memory_space<vmem>>, vector<8x8x8x128xf32>
    %111 = vector.extract_strided_slice %0 {offsets = [15, 0], sizes = [1, 128], strides = [1, 1]} : vector<27x128xf32> to vector<1x128xf32>
    %112 = vector.shape_cast %111 : vector<1x128xf32> to vector<128xf32>
    %113 = vector.shape_cast %112 : vector<128xf32> to vector<1x1x1x128xf32>
    %114 = vector.broadcast %113 : vector<1x1x1x128xf32> to vector<8x8x8x128xf32>
    %115 = arith.mulf %110, %114 : vector<8x8x8x128xf32>
    %116 = arith.addf %109, %115 : vector<8x8x8x128xf32>
    %c1_65 = arith.constant 1 : index
    %c2_66 = arith.constant 2 : index
    %c1_67 = arith.constant 1 : index
    %c0_68 = arith.constant 0 : index
    %117 = vector.load %arg1[%c1_65, %c2_66, %c1_67, %c0_68] : memref<10x10x10x128xf32, #tpu.memory_space<vmem>>, vector<8x8x8x128xf32>
    %118 = vector.extract_strided_slice %0 {offsets = [16, 0], sizes = [1, 128], strides = [1, 1]} : vector<27x128xf32> to vector<1x128xf32>
    %119 = vector.shape_cast %118 : vector<1x128xf32> to vector<128xf32>
    %120 = vector.shape_cast %119 : vector<128xf32> to vector<1x1x1x128xf32>
    %121 = vector.broadcast %120 : vector<1x1x1x128xf32> to vector<8x8x8x128xf32>
    %122 = arith.mulf %117, %121 : vector<8x8x8x128xf32>
    %123 = arith.addf %116, %122 : vector<8x8x8x128xf32>
    %c1_69 = arith.constant 1 : index
    %c2_70 = arith.constant 2 : index
    %c2_71 = arith.constant 2 : index
    %c0_72 = arith.constant 0 : index
    %124 = vector.load %arg1[%c1_69, %c2_70, %c2_71, %c0_72] : memref<10x10x10x128xf32, #tpu.memory_space<vmem>>, vector<8x8x8x128xf32>
    %125 = vector.extract_strided_slice %0 {offsets = [17, 0], sizes = [1, 128], strides = [1, 1]} : vector<27x128xf32> to vector<1x128xf32>
    %126 = vector.shape_cast %125 : vector<1x128xf32> to vector<128xf32>
    %127 = vector.shape_cast %126 : vector<128xf32> to vector<1x1x1x128xf32>
    %128 = vector.broadcast %127 : vector<1x1x1x128xf32> to vector<8x8x8x128xf32>
    %129 = arith.mulf %124, %128 : vector<8x8x8x128xf32>
    %130 = arith.addf %123, %129 : vector<8x8x8x128xf32>
    %c2_73 = arith.constant 2 : index
    %c0_74 = arith.constant 0 : index
    %c0_75 = arith.constant 0 : index
    %c0_76 = arith.constant 0 : index
    %131 = vector.load %arg1[%c2_73, %c0_74, %c0_75, %c0_76] : memref<10x10x10x128xf32, #tpu.memory_space<vmem>>, vector<8x8x8x128xf32>
    %132 = vector.extract_strided_slice %0 {offsets = [18, 0], sizes = [1, 128], strides = [1, 1]} : vector<27x128xf32> to vector<1x128xf32>
    %133 = vector.shape_cast %132 : vector<1x128xf32> to vector<128xf32>
    %134 = vector.shape_cast %133 : vector<128xf32> to vector<1x1x1x128xf32>
    %135 = vector.broadcast %134 : vector<1x1x1x128xf32> to vector<8x8x8x128xf32>
    %136 = arith.mulf %131, %135 : vector<8x8x8x128xf32>
    %137 = arith.addf %130, %136 : vector<8x8x8x128xf32>
    %c2_77 = arith.constant 2 : index
    %c0_78 = arith.constant 0 : index
    %c1_79 = arith.constant 1 : index
    %c0_80 = arith.constant 0 : index
    %138 = vector.load %arg1[%c2_77, %c0_78, %c1_79, %c0_80] : memref<10x10x10x128xf32, #tpu.memory_space<vmem>>, vector<8x8x8x128xf32>
    %139 = vector.extract_strided_slice %0 {offsets = [19, 0], sizes = [1, 128], strides = [1, 1]} : vector<27x128xf32> to vector<1x128xf32>
    %140 = vector.shape_cast %139 : vector<1x128xf32> to vector<128xf32>
    %141 = vector.shape_cast %140 : vector<128xf32> to vector<1x1x1x128xf32>
    %142 = vector.broadcast %141 : vector<1x1x1x128xf32> to vector<8x8x8x128xf32>
    %143 = arith.mulf %138, %142 : vector<8x8x8x128xf32>
    %144 = arith.addf %137, %143 : vector<8x8x8x128xf32>
    %c2_81 = arith.constant 2 : index
    %c0_82 = arith.constant 0 : index
    %c2_83 = arith.constant 2 : index
    %c0_84 = arith.constant 0 : index
    %145 = vector.load %arg1[%c2_81, %c0_82, %c2_83, %c0_84] : memref<10x10x10x128xf32, #tpu.memory_space<vmem>>, vector<8x8x8x128xf32>
    %146 = vector.extract_strided_slice %0 {offsets = [20, 0], sizes = [1, 128], strides = [1, 1]} : vector<27x128xf32> to vector<1x128xf32>
    %147 = vector.shape_cast %146 : vector<1x128xf32> to vector<128xf32>
    %148 = vector.shape_cast %147 : vector<128xf32> to vector<1x1x1x128xf32>
    %149 = vector.broadcast %148 : vector<1x1x1x128xf32> to vector<8x8x8x128xf32>
    %150 = arith.mulf %145, %149 : vector<8x8x8x128xf32>
    %151 = arith.addf %144, %150 : vector<8x8x8x128xf32>
    %c2_85 = arith.constant 2 : index
    %c1_86 = arith.constant 1 : index
    %c0_87 = arith.constant 0 : index
    %c0_88 = arith.constant 0 : index
    %152 = vector.load %arg1[%c2_85, %c1_86, %c0_87, %c0_88] : memref<10x10x10x128xf32, #tpu.memory_space<vmem>>, vector<8x8x8x128xf32>
    %153 = vector.extract_strided_slice %0 {offsets = [21, 0], sizes = [1, 128], strides = [1, 1]} : vector<27x128xf32> to vector<1x128xf32>
    %154 = vector.shape_cast %153 : vector<1x128xf32> to vector<128xf32>
    %155 = vector.shape_cast %154 : vector<128xf32> to vector<1x1x1x128xf32>
    %156 = vector.broadcast %155 : vector<1x1x1x128xf32> to vector<8x8x8x128xf32>
    %157 = arith.mulf %152, %156 : vector<8x8x8x128xf32>
    %158 = arith.addf %151, %157 : vector<8x8x8x128xf32>
    %c2_89 = arith.constant 2 : index
    %c1_90 = arith.constant 1 : index
    %c1_91 = arith.constant 1 : index
    %c0_92 = arith.constant 0 : index
    %159 = vector.load %arg1[%c2_89, %c1_90, %c1_91, %c0_92] : memref<10x10x10x128xf32, #tpu.memory_space<vmem>>, vector<8x8x8x128xf32>
    %160 = vector.extract_strided_slice %0 {offsets = [22, 0], sizes = [1, 128], strides = [1, 1]} : vector<27x128xf32> to vector<1x128xf32>
    %161 = vector.shape_cast %160 : vector<1x128xf32> to vector<128xf32>
    %162 = vector.shape_cast %161 : vector<128xf32> to vector<1x1x1x128xf32>
    %163 = vector.broadcast %162 : vector<1x1x1x128xf32> to vector<8x8x8x128xf32>
    %164 = arith.mulf %159, %163 : vector<8x8x8x128xf32>
    %165 = arith.addf %158, %164 : vector<8x8x8x128xf32>
    %c2_93 = arith.constant 2 : index
    %c1_94 = arith.constant 1 : index
    %c2_95 = arith.constant 2 : index
    %c0_96 = arith.constant 0 : index
    %166 = vector.load %arg1[%c2_93, %c1_94, %c2_95, %c0_96] : memref<10x10x10x128xf32, #tpu.memory_space<vmem>>, vector<8x8x8x128xf32>
    %167 = vector.extract_strided_slice %0 {offsets = [23, 0], sizes = [1, 128], strides = [1, 1]} : vector<27x128xf32> to vector<1x128xf32>
    %168 = vector.shape_cast %167 : vector<1x128xf32> to vector<128xf32>
    %169 = vector.shape_cast %168 : vector<128xf32> to vector<1x1x1x128xf32>
    %170 = vector.broadcast %169 : vector<1x1x1x128xf32> to vector<8x8x8x128xf32>
    %171 = arith.mulf %166, %170 : vector<8x8x8x128xf32>
    %172 = arith.addf %165, %171 : vector<8x8x8x128xf32>
    %c2_97 = arith.constant 2 : index
    %c2_98 = arith.constant 2 : index
    %c0_99 = arith.constant 0 : index
    %c0_100 = arith.constant 0 : index
    %173 = vector.load %arg1[%c2_97, %c2_98, %c0_99, %c0_100] : memref<10x10x10x128xf32, #tpu.memory_space<vmem>>, vector<8x8x8x128xf32>
    %174 = vector.extract_strided_slice %0 {offsets = [24, 0], sizes = [1, 128], strides = [1, 1]} : vector<27x128xf32> to vector<1x128xf32>
    %175 = vector.shape_cast %174 : vector<1x128xf32> to vector<128xf32>
    %176 = vector.shape_cast %175 : vector<128xf32> to vector<1x1x1x128xf32>
    %177 = vector.broadcast %176 : vector<1x1x1x128xf32> to vector<8x8x8x128xf32>
    %178 = arith.mulf %173, %177 : vector<8x8x8x128xf32>
    %179 = arith.addf %172, %178 : vector<8x8x8x128xf32>
    %c2_101 = arith.constant 2 : index
    %c2_102 = arith.constant 2 : index
    %c1_103 = arith.constant 1 : index
    %c0_104 = arith.constant 0 : index
    %180 = vector.load %arg1[%c2_101, %c2_102, %c1_103, %c0_104] : memref<10x10x10x128xf32, #tpu.memory_space<vmem>>, vector<8x8x8x128xf32>
    %181 = vector.extract_strided_slice %0 {offsets = [25, 0], sizes = [1, 128], strides = [1, 1]} : vector<27x128xf32> to vector<1x128xf32>
    %182 = vector.shape_cast %181 : vector<1x128xf32> to vector<128xf32>
    %183 = vector.shape_cast %182 : vector<128xf32> to vector<1x1x1x128xf32>
    %184 = vector.broadcast %183 : vector<1x1x1x128xf32> to vector<8x8x8x128xf32>
    %185 = arith.mulf %180, %184 : vector<8x8x8x128xf32>
    %186 = arith.addf %179, %185 : vector<8x8x8x128xf32>
    %c2_105 = arith.constant 2 : index
    %c2_106 = arith.constant 2 : index
    %c2_107 = arith.constant 2 : index
    %c0_108 = arith.constant 0 : index
    %187 = vector.load %arg1[%c2_105, %c2_106, %c2_107, %c0_108] : memref<10x10x10x128xf32, #tpu.memory_space<vmem>>, vector<8x8x8x128xf32>
    %188 = vector.extract_strided_slice %0 {offsets = [26, 0], sizes = [1, 128], strides = [1, 1]} : vector<27x128xf32> to vector<1x128xf32>
    %189 = vector.shape_cast %188 : vector<1x128xf32> to vector<128xf32>
    %190 = vector.shape_cast %189 : vector<128xf32> to vector<1x1x1x128xf32>
    %191 = vector.broadcast %190 : vector<1x1x1x128xf32> to vector<8x8x8x128xf32>
    %192 = arith.mulf %187, %191 : vector<8x8x8x128xf32>
    %193 = arith.addf %186, %192 : vector<8x8x8x128xf32>
    %c0_109 = arith.constant 0 : index
    %c0_110 = arith.constant 0 : index
    %c0_111 = arith.constant 0 : index
    %c0_112 = arith.constant 0 : index
    %194 = vector.load %arg4[%c0_109, %c0_110, %c0_111, %c0_112] : memref<8x8x8x128xf32, #tpu.memory_space<vmem>>, vector<8x8x8x128xf32>
    tpu.vector_store %arg4[%c0_109, %c0_110, %c0_111, %c0_112], %193 {strides = array<i32>} : memref<8x8x8x128xf32, #tpu.memory_space<vmem>>, vector<8x8x8x128xf32>,
    return
  }
  func.func @transform_0(%arg0: i32) -> (i32, i32, i32, i32) {
    %c0_i32 = arith.constant 0 : i32
    %c0_i32_0 = arith.constant 0 : i32
    %c0_i32_1 = arith.constant 0 : i32
    %c0_i32_2 = arith.constant 0 : i32
    return %arg0, %c0_i32, %c0_i32_0, %c0_i32_1 : i32, i32, i32, i32
  }
  func.func @transform_1(%arg0: i32) -> (i32, i32) {
    %c0_i32 = arith.constant 0 : i32
    %c0_i32_0 = arith.constant 0 : i32
    %c0_i32_1 = arith.constant 0 : i32
    return %c0_i32, %c0_i32_0 : i32, i32
  }
  func.func @transform_2(%arg0: i32) -> (i32, i32) {
    %c0_i32 = arith.constant 0 : i32
    %c0_i32_0 = arith.constant 0 : i32
    %c0_i32_1 = arith.constant 0 : i32
    return %c0_i32, %c0_i32_0 : i32, i32
  }
  func.func @transform_3(%arg0: i32) -> (i32, i32, i32, i32) {
    %c0_i32 = arith.constant 0 : i32
    %c0_i32_0 = arith.constant 0 : i32
    %c0_i32_1 = arith.constant 0 : i32
    %c0_i32_2 = arith.constant 0 : i32
    return %arg0, %c0_i32, %c0_i32_0, %c0_i32_1 : i32, i32, i32, i32
  }
}

</mosaic_0001>

<llo_original>
// kernel: tpu_custom_call.1
$region0: #{tpu_custom_call.1}
  #allocation0 [shape = 'u32[]', space=smem, size = 0x4, offset = 0x4, fixed_abs, tag = 'smem constant byte address 0x4 - core index']
  #allocation1 [shape = 'u32[72,128]{1,0:T(1,128)}', space=vmem, size = 0x9000, scoped, tag = 'internal scratch']
  %s0 = inlined_call_operand.vmem [shape: f32[20,10,10,128], index: 0, kind: input, shape index: {}]
  %s1 = inlined_call_operand.vmem [shape: f32[27,128], index: 1, kind: input, shape index: {}]
  %s2 = inlined_call_operand.vmem [shape: f32[1,128], index: 2, kind: input, shape index: {}]
  %s3 = inlined_call_operand.hbm [shape: f32[16,8,8,128], index: 3, kind: output, shape index: {}]
  %s4 = sld [smem:[#allocation0]]
  $region45: #{tpu_custom_call.1} parent=0
    _
  %s6 = ssub.s32 1, %s4
  %s7 = scalar_select 0, %s6, %s4
  $region1: #{tpu_custom_call.1} parent=0
    #allocation2 [shape = 'u8[524288]{0}', space=vmem, size = 0x80000, scoped, tag = 'output window, operand 0']
    #allocation3 [shape = 's32[2]{0}', space=sflag, size = 0x8, scoped, tag = 'scoped memory for tpu_custom_call.1']
    %8 = vsyncpa [#allocation3], 0
    %s9 = scalar_lea.sflag [#allocation3], 1
    %10 = vsyncpa %s9, 0
    loop: start=0, step=1, limit=4
    $region2: #{tpu_custom_call.1} parent=1 // loop_pre_header
      _
    $region3: #{tpu_custom_call.1} parent=1 // loop_header
      %s12 = sphi 0, %s16
      %p13 = scmp.ge.s32.totalorder %s12, 4
      %s22 = sphi 0, %s24
      %s25 = sphi 0, %s22
      %s26 = sphi 0, %s25
      %s42 = sphi 0, %s26
      %s46 = sphi 0, %s46
      %s48 = sphi 0, %s46
      %s49 = sphi 0, %s48
      %s63 = sphi 0, %s49
      %s67 = sphi 0, %s67
      %s69 = sphi 0, %s67
      %s70 = sphi 0, %s69
      %s84 = sphi 0, %s70
      %s90 = sphi 0, %s92
      %s93 = sphi 0, %s90
      %s94 = sphi 0, %s93
      %s110 = sphi 0, %s94
    $region4: #{tpu_custom_call.1} parent=1 // loop_header_branch
      %15 = sbr.rel (%p13) target = $region8
    $region5: #{tpu_custom_call.1} parent=1 // loop_body
      %s17 = ssub.s32 %s12, 1
      %s18 = ssub.s32 %s12, 2
      %s19 = sadd.s32 %s12, 1
      %s20 = ssub.s32 %s12, %s19
      %p21 = scmp.eq.s32.totalorder %s20, 0
      %s23 = sadd.s32 %s22, 1
      %s24 = scalar_select %p21, %s22, %s23
      %p27 = pneg %p21
      %p28 = scmp.eq.s32.totalorder %s12, 1
      %p29 = por %p27, %p28
      %p30 = scmp.ne.s32.totalorder %s22, %s25
      %p31 = scmp.eq.s32.totalorder %s12, 0
      %p32 = por %p30, %p31
      %p33 = scmp.ne.s32.totalorder %s22, %s25
      %p34 = scmp.eq.s32.totalorder %s17, 1
      %p35 = por %p33, %p34
      %p36 = scmp.ne.s32.totalorder %s25, %s26
      %p37 = scmp.eq.s32.totalorder %s17, 0
      %p38 = por %p36, %p37
      %p39 = scmp.ne.s32.totalorder %s25, %s26
      %p40 = scmp.eq.s32.totalorder %s18, 1
      %p41 = por %p39, %p40
      %p43 = scmp.ne.s32.totalorder %s26, %s42
      %p44 = scmp.eq.s32.totalorder %s18, 0
      %p45 = por %p43, %p44
      %s47 = sadd.s32 %s46, 1
      %p50 = scmp.eq.s32.totalorder %s12, 1
      %p51 = scmp.ne.s32.totalorder %s46, %s48
      %p52 = scmp.eq.s32.totalorder %s12, 0
      %p53 = por %p51, %p52
      %p54 = scmp.ne.s32.totalorder %s46, %s48
      %p55 = scmp.eq.s32.totalorder %s17, 1
      %p56 = por %p54, %p55
      %p57 = scmp.ne.s32.totalorder %s48, %s49
      %p58 = scmp.eq.s32.totalorder %s17, 0
      %p59 = por %p57, %p58
      %p60 = scmp.ne.s32.totalorder %s48, %s49
      %p61 = scmp.eq.s32.totalorder %s18, 1
      %p62 = por %p60, %p61
      %p64 = scmp.ne.s32.totalorder %s49, %s63
      %p65 = scmp.eq.s32.totalorder %s18, 0
      %p66 = por %p64, %p65
      %s68 = sadd.s32 %s67, 1
      %p71 = scmp.eq.s32.totalorder %s12, 1
      %p72 = scmp.ne.s32.totalorder %s67, %s69
      %p73 = scmp.eq.s32.totalorder %s12, 0
      %p74 = por %p72, %p73
      %p75 = scmp.ne.s32.totalorder %s67, %s69
      %p76 = scmp.eq.s32.totalorder %s17, 1
      %p77 = por %p75, %p76
      %p78 = scmp.ne.s32.totalorder %s69, %s70
      %p79 = scmp.eq.s32.totalorder %s17, 0
      %p80 = por %p78, %p79
      %p81 = scmp.ne.s32.totalorder %s69, %s70
      %p82 = scmp.eq.s32.totalorder %s18, 1
      %p83 = por %p81, %p82
      %p85 = scmp.ne.s32.totalorder %s70, %s84
      %p86 = scmp.eq.s32.totalorder %s18, 0
      %p87 = por %p85, %p86
      %s88 = ssub.s32 %s12, %s19
      %p89 = scmp.eq.s32.totalorder %s88, 0
      %s91 = sadd.s32 %s90, 1
      %s92 = scalar_select %p89, %s90, %s91
      %p95 = pneg %p89
      %p96 = scmp.eq.s32.totalorder %s12, 1
      %p97 = por %p95, %p96
      %p98 = scmp.ne.s32.totalorder %s90, %s93
      %p99 = scmp.eq.s32.totalorder %s12, 0
      %p100 = por %p98, %p99
      %p101 = scmp.ne.s32.totalorder %s90, %s93
      %p102 = scmp.eq.s32.totalorder %s17, 1
      %p103 = por %p101, %p102
      %p104 = scmp.ne.s32.totalorder %s93, %s94
      %p105 = scmp.eq.s32.totalorder %s17, 0
      %p106 = por %p104, %p105
      %p107 = scmp.ne.s32.totalorder %s93, %s94
      %p108 = scmp.eq.s32.totalorder %s18, 1
      %p109 = por %p107, %p108
      %p111 = scmp.ne.s32.totalorder %s94, %s110
      %p112 = scmp.eq.s32.totalorder %s18, 0
      %p113 = por %p111, %p112
      %p114 = scmp.le.s32.totalorder 1, %s12
      %p115 = scmp.lt.s32.totalorder %s12, 3
      %p116 = pnand %p114, %p115
      %p117 = pneg %p116
      // Predicated region
      $region9: #{tpu_custom_call.1} parent=5 // pred_check
        _
      $region10: #{tpu_custom_call.1} parent=5 // pred_check_branch
        %119 = sbr.rel (%p116) target = $region12
      $region11: #{tpu_custom_call.1} parent=5 // pred_region
        %s120 = ssub.s32 %s12, 1
        // Predicated region
        $region13: #{tpu_custom_call.1} parent=11 // pred_check
          %p121 = pneg %p59
        $region14: #{tpu_custom_call.1} parent=11 // pred_check_branch
          %123 = sbr.rel (%p121) target = $region16
        $region15: #{tpu_custom_call.1} parent=11 // pred_region
          _
        $region16: #{tpu_custom_call.1} parent=11 // pred_fallthru
          _
        // Predicated region
        $region17: #{tpu_custom_call.1} parent=11 // pred_check
          %p124 = pneg %p80
        $region18: #{tpu_custom_call.1} parent=11 // pred_check_branch
          %126 = sbr.rel (%p124) target = $region20
        $region19: #{tpu_custom_call.1} parent=11 // pred_region
          _
        $region20: #{tpu_custom_call.1} parent=11 // pred_fallthru
          _
      $region12: #{tpu_custom_call.1} parent=5 // pred_fallthru
        _
      %p127 = scmp.lt.s32.totalorder %s12, 2
      // Predicated region
      $region21: #{tpu_custom_call.1} parent=5 // pred_check
        %p128 = pneg %p127
      $region22: #{tpu_custom_call.1} parent=5 // pred_check_branch
        %130 = sbr.rel (%p128) target = $region24
      $region23: #{tpu_custom_call.1} parent=5 // pred_region
        // Predicated region
        $region25: #{tpu_custom_call.1} parent=23 // pred_check
          %p131 = pneg %p32
        $region26: #{tpu_custom_call.1} parent=23 // pred_check_branch
          %133 = sbr.rel (%p131) target = $region28
        $region27: #{tpu_custom_call.1} parent=23 // pred_region
          %s134 = smul.u32 10, %s12
          %p135 = scmp.lt.s32.totalorder %s134, 19
          %s136 = scalar_select %p135, %s134, 19
          %s137 = smul.addr %s136, 20
          %s138 = smul.addr %s137, 8
          %s139 = scalar_lea.vmem %s0, %s138
          %s140 = smul.u32 10, %s12
        $region28: #{tpu_custom_call.1} parent=23 // pred_fallthru
          _
      $region24: #{tpu_custom_call.1} parent=5 // pred_fallthru
        _
      %p141 = scmp.le.s32.totalorder 1, %s12
      %p142 = scmp.lt.s32.totalorder %s12, 3
      %p143 = pnand %p141, %p142
      %p144 = pneg %p143
      // Predicated region
      $region29: #{tpu_custom_call.1} parent=5 // pred_check
        _
      $region30: #{tpu_custom_call.1} parent=5 // pred_check_branch
        %146 = sbr.rel (%p143) target = $region32
      $region31: #{tpu_custom_call.1} parent=5 // pred_region
        %s147 = ssub.s32 %s12, 1
        %s148 = smul.u32 10, %s17
        %p149 = scmp.lt.s32.totalorder %s148, 19
        %s150 = scalar_select %p149, %s148, 19
        %s151 = smul.addr %s150, 20
        %s152 = smul.addr %s151, 8
        %s153 = scalar_lea.vmem %s0, %s152
        %p154 = pneg %p38
        %p155 = pneg %p35
        %p156 = pneg %p59
        %p157 = pneg %p56
        %p158 = pneg %p80
        %p159 = pneg %p77
        %p160 = pneg %p106
        %p161 = pneg %p103
        %s162 = sand.u32 %s93, 1
        %s163 = scalar_lea.sflag [#allocation3], %s162
        %s164 = sand.u32 %s93, 1
        %s165 = smul.addr %s164, 512
        %s166 = scalar_lea.vmem [#allocation2], %s165
        %s167 = smul.u32 10, %s17
        %p168 = scmp.lt.s32.totalorder %s167, 19
        %s169 = scalar_select %p168, %s167, 19
        %s170 = smul.addr %s169, 20
        %s171 = smul.addr %s170, 8
        %s172 = scalar_lea.vmem %s0, %s171
        %s173 = smul.u32 10, %s17
        %s174 = smul.u32 8, %s17
        %v175 = vld [vmem:[%s1] sm:$0xff]
        %v176 = vld [vmem:[%s1 + $0x8] sm:$0xff]
        %v177 = vld [vmem:[%s1 + $0x10] sm:$0xff]
        %v178 = vld [vmem:[%s1 + $0x18] sm:$0x7]
        %v179 = vld [vmem:[%s2] sm:$0x1]
        %v181 = vperm.slane %v179, 0
        %v183 = vld [vmem:[%s172] sm:$0xff]
        %v184 = vld [vmem:[%s172 + $0x10] sm:$0xff]
        %v185 = vld [vmem:[%s172 + $0x20] sm:$0xff]
        %v186 = vld [vmem:[%s172 + $0x30] sm:$0xff]
        %v187 = vld [vmem:[%s172 + $0x40] sm:$0xff]
        %v188 = vld [vmem:[%s172 + $0x50] sm:$0xff]
        %v189 = vld [vmem:[%s172 + $0x60] sm:$0xff]
        %v190 = vld [vmem:[%s172 + $0x70] sm:$0xff]
        %v191 = vld [vmem:[%s172 + $0xa0] sm:$0xff]
        %v192 = vld [vmem:[%s172 + $0xb0] sm:$0xff]
        %v193 = vld [vmem:[%s172 + $0xc0] sm:$0xff]
        %v194 = vld [vmem:[%s172 + $0xd0] sm:$0xff]
        %v195 = vld [vmem:[%s172 + $0xe0] sm:$0xff]
        %v196 = vld [vmem:[%s172 + $0xf0] sm:$0xff]
        %v197 = vld [vmem:[%s172 + $0x100] sm:$0xff]
        %v198 = vld [vmem:[%s172 + $0x110] sm:$0xff]
        %v199 = vld [vmem:[%s172 + $0x140] sm:$0xff]
        %v200 = vld [vmem:[%s172 + $0x150] sm:$0xff]
        %v201 = vld [vmem:[%s172 + $0x160] sm:$0xff]
        %v202 = vld [vmem:[%s172 + $0x170] sm:$0xff]
        %v203 = vld [vmem:[%s172 + $0x180] sm:$0xff]
        %v204 = vld [vmem:[%s172 + $0x190] sm:$0xff]
        %v205 = vld [vmem:[%s172 + $0x1a0] sm:$0xff]
        %v206 = vld [vmem:[%s172 + $0x1b0] sm:$0xff]
        %v207 = vld [vmem:[%s172 + $0x1e0] sm:$0xff]
        %v208 = vld [vmem:[%s172 + $0x1f0] sm:$0xff]
        %v209 = vld [vmem:[%s172 + $0x200] sm:$0xff]
        %v210 = vld [vmem:[%s172 + $0x210] sm:$0xff]
        %v211 = vld [vmem:[%s172 + $0x220] sm:$0xff]
        %v212 = vld [vmem:[%s172 + $0x230] sm:$0xff]
        %v213 = vld [vmem:[%s172 + $0x240] sm:$0xff]
        %v214 = vld [vmem:[%s172 + $0x250] sm:$0xff]
        %v215 = vld [vmem:[%s172 + $0x280] sm:$0xff]
        %v216 = vld [vmem:[%s172 + $0x290] sm:$0xff]
        %v217 = vld [vmem:[%s172 + $0x2a0] sm:$0xff]
        %v218 = vld [vmem:[%s172 + $0x2b0] sm:$0xff]
        %v219 = vld [vmem:[%s172 + $0x2c0] sm:$0xff]
        %v220 = vld [vmem:[%s172 + $0x2d0] sm:$0xff]
        %v221 = vld [vmem:[%s172 + $0x2e0] sm:$0xff]
        %v222 = vld [vmem:[%s172 + $0x2f0] sm:$0xff]
        %v223 = vld [vmem:[%s172 + $0x320] sm:$0xff]
        %v224 = vld [vmem:[%s172 + $0x330] sm:$0xff]
        %v225 = vld [vmem:[%s172 + $0x340] sm:$0xff]
        %v226 = vld [vmem:[%s172 + $0x350] sm:$0xff]
        %v227 = vld [vmem:[%s172 + $0x360] sm:$0xff]
        %v228 = vld [vmem:[%s172 + $0x370] sm:$0xff]
        %v229 = vld [vmem:[%s172 + $0x380] sm:$0xff]
        %v230 = vld [vmem:[%s172 + $0x390] sm:$0xff]
        %v231 = vld [vmem:[%s172 + $0x3c0] sm:$0xff]
        %v232 = vld [vmem:[%s172 + $0x3d0] sm:$0xff]
        %v233 = vld [vmem:[%s172 + $0x3e0] sm:$0xff]
        %v234 = vld [vmem:[%s172 + $0x3f0] sm:$0xff]
        %v235 = vld [vmem:[%s172 + $0x400] sm:$0xff]
        %v236 = vld [vmem:[%s172 + $0x410] sm:$0xff]
        %v237 = vld [vmem:[%s172 + $0x420] sm:$0xff]
        %v238 = vld [vmem:[%s172 + $0x430] sm:$0xff]
        %v239 = vld [vmem:[%s172 + $0x460] sm:$0xff]
        %v240 = vld [vmem:[%s172 + $0x470] sm:$0xff]
        %v241 = vld [vmem:[%s172 + $0x480] sm:$0xff]
        %v242 = vld [vmem:[%s172 + $0x490] sm:$0xff]
        %v243 = vld [vmem:[%s172 + $0x4a0] sm:$0xff]
        %v244 = vld [vmem:[%s172 + $0x4b0] sm:$0xff]
        %v245 = vld [vmem:[%s172 + $0x4c0] sm:$0xff]
        %v246 = vld [vmem:[%s172 + $0x4d0] sm:$0xff]
        %v247 = vperm.slane %v175, 0
        %v248 = vmul.f32 %v183, %v247
        %v249 = vmul.f32 %v184, %v247
        %v250 = vmul.f32 %v185, %v247
        %v251 = vmul.f32 %v186, %v247
        %v252 = vmul.f32 %v187, %v247
        %v253 = vmul.f32 %v188, %v247
        %v254 = vmul.f32 %v189, %v247
        %v255 = vmul.f32 %v190, %v247
        %v256 = vmul.f32 %v191, %v247
        %v257 = vmul.f32 %v192, %v247
        %v258 = vmul.f32 %v193, %v247
        %v259 = vmul.f32 %v194, %v247
        %v260 = vmul.f32 %v195, %v247
        %v261 = vmul.f32 %v196, %v247
        %v262 = vmul.f32 %v197, %v247
        %v263 = vmul.f32 %v198, %v247
        %v264 = vmul.f32 %v199, %v247
        %v265 = vmul.f32 %v200, %v247
        %v266 = vmul.f32 %v201, %v247
        %v267 = vmul.f32 %v202, %v247
        %v268 = vmul.f32 %v203, %v247
        %v269 = vmul.f32 %v204, %v247
        %v270 = vmul.f32 %v205, %v247
        %v271 = vmul.f32 %v206, %v247
        %v272 = vmul.f32 %v207, %v247
        %v273 = vmul.f32 %v208, %v247
        %v274 = vmul.f32 %v209, %v247
        %v275 = vmul.f32 %v210, %v247
        %v276 = vmul.f32 %v211, %v247
        %v277 = vmul.f32 %v212, %v247
        %v278 = vmul.f32 %v213, %v247
        %v279 = vmul.f32 %v214, %v247
        %v280 = vmul.f32 %v215, %v247
        %v281 = vmul.f32 %v216, %v247
        %v282 = vmul.f32 %v217, %v247
        %v283 = vmul.f32 %v218, %v247
        %v284 = vmul.f32 %v219, %v247
        %v285 = vmul.f32 %v220, %v247
        %v286 = vmul.f32 %v221, %v247
        %v287 = vmul.f32 %v222, %v247
        %v288 = vmul.f32 %v223, %v247
        %v289 = vmul.f32 %v224, %v247
        %v290 = vmul.f32 %v225, %v247
        %v291 = vmul.f32 %v226, %v247
        %v292 = vmul.f32 %v227, %v247
        %v293 = vmul.f32 %v228, %v247
        %v294 = vmul.f32 %v229, %v247
        %v295 = vmul.f32 %v230, %v247
        %v296 = vmul.f32 %v231, %v247
        %v297 = vmul.f32 %v232, %v247
        %v298 = vmul.f32 %v233, %v247
        %v299 = vmul.f32 %v234, %v247
        %v300 = vmul.f32 %v235, %v247
        %v301 = vmul.f32 %v236, %v247
        %v302 = vmul.f32 %v237, %v247
        %v303 = vmul.f32 %v238, %v247
        %v304 = vmul.f32 %v239, %v247
        %v305 = vmul.f32 %v240, %v247
        %v306 = vmul.f32 %v241, %v247
        %v307 = vmul.f32 %v242, %v247
        %v308 = vmul.f32 %v243, %v247
        %v309 = vmul.f32 %v244, %v247
        %v310 = vmul.f32 %v245, %v247
        %v311 = vmul.f32 %v246, %v247
        %v312 = vadd.f32 %v181, %v248
        %v313 = vadd.f32 %v181, %v249
        %v314 = vadd.f32 %v181, %v250
        %v315 = vadd.f32 %v181, %v251
        %v316 = vadd.f32 %v181, %v252
        %v317 = vadd.f32 %v181, %v253
        %v318 = vadd.f32 %v181, %v254
        %v319 = vadd.f32 %v181, %v255
        %v320 = vadd.f32 %v181, %v256
        %v321 = vadd.f32 %v181, %v257
        %v322 = vadd.f32 %v181, %v258
        %v323 = vadd.f32 %v181, %v259
        %v324 = vadd.f32 %v181, %v260
        %v325 = vadd.f32 %v181, %v261
        %v326 = vadd.f32 %v181, %v262
        %v327 = vadd.f32 %v181, %v263
        %v328 = vadd.f32 %v181, %v264
        %v329 = vadd.f32 %v181, %v265
        %v330 = vadd.f32 %v181, %v266
        %v331 = vadd.f32 %v181, %v267
        %v332 = vadd.f32 %v181, %v268
        %v333 = vadd.f32 %v181, %v269
        %v334 = vadd.f32 %v181, %v270
        %v335 = vadd.f32 %v181, %v271
        %v336 = vadd.f32 %v181, %v272
        %v337 = vadd.f32 %v181, %v273
        %v338 = vadd.f32 %v181, %v274
        %v339 = vadd.f32 %v181, %v275
        %v340 = vadd.f32 %v181, %v276
        %v341 = vadd.f32 %v181, %v277
        %v342 = vadd.f32 %v181, %v278
        %v343 = vadd.f32 %v181, %v279
        %v344 = vadd.f32 %v181, %v280
        %v345 = vadd.f32 %v181, %v281
        %v346 = vadd.f32 %v181, %v282
        %v347 = vadd.f32 %v181, %v283
        %v348 = vadd.f32 %v181, %v284
        %v349 = vadd.f32 %v181, %v285
        %v350 = vadd.f32 %v181, %v286
        %v351 = vadd.f32 %v181, %v287
        %v352 = vadd.f32 %v181, %v288
        %v353 = vadd.f32 %v181, %v289
        %v354 = vadd.f32 %v181, %v290
        %v355 = vadd.f32 %v181, %v291
        %v356 = vadd.f32 %v181, %v292
        %v357 = vadd.f32 %v181, %v293
        %v358 = vadd.f32 %v181, %v294
        %v359 = vadd.f32 %v181, %v295
        %v360 = vadd.f32 %v181, %v296
        %v361 = vadd.f32 %v181, %v297
        %v362 = vadd.f32 %v181, %v298
        %v363 = vadd.f32 %v181, %v299
        %v364 = vadd.f32 %v181, %v300
        %v365 = vadd.f32 %v181, %v301
        %v366 = vadd.f32 %v181, %v302
        %v367 = vadd.f32 %v181, %v303
        %v368 = vadd.f32 %v181, %v304
        %v369 = vadd.f32 %v181, %v305
        %v370 = vadd.f32 %v181, %v306
        %v371 = vadd.f32 %v181, %v307
        %v372 = vadd.f32 %v181, %v308
        %v373 = vadd.f32 %v181, %v309
        %v374 = vadd.f32 %v181, %v310
        %v375 = vadd.f32 %v181, %v311
        %v376 = vld [vmem:[%s172 + $0x1] sm:$0xff]
        %v377 = vld [vmem:[%s172 + $0x11] sm:$0xff]
        %v378 = vld [vmem:[%s172 + $0x21] sm:$0xff]
        %v379 = vld [vmem:[%s172 + $0x31] sm:$0xff]
        %v380 = vld [vmem:[%s172 + $0x41] sm:$0xff]
        %v381 = vld [vmem:[%s172 + $0x51] sm:$0xff]
        %v382 = vld [vmem:[%s172 + $0x61] sm:$0xff]
        %v383 = vld [vmem:[%s172 + $0x71] sm:$0xff]
        %v384 = vld [vmem:[%s172 + $0xa1] sm:$0xff]
        %v385 = vld [vmem:[%s172 + $0xb1] sm:$0xff]
        %v386 = vld [vmem:[%s172 + $0xc1] sm:$0xff]
        %v387 = vld [vmem:[%s172 + $0xd1] sm:$0xff]
        %v388 = vld [vmem:[%s172 + $0xe1] sm:$0xff]
        %v389 = vld [vmem:[%s172 + $0xf1] sm:$0xff]
        %v390 = vld [vmem:[%s172 + $0x101] sm:$0xff]
        %v391 = vld [vmem:[%s172 + $0x111] sm:$0xff]
        %v392 = vld [vmem:[%s172 + $0x141] sm:$0xff]
        %v393 = vld [vmem:[%s172 + $0x151] sm:$0xff]
        %v394 = vld [vmem:[%s172 + $0x161] sm:$0xff]
        %v395 = vld [vmem:[%s172 + $0x171] sm:$0xff]
        %v396 = vld [vmem:[%s172 + $0x181] sm:$0xff]
        %v397 = vld [vmem:[%s172 + $0x191] sm:$0xff]
        %v398 = vld [vmem:[%s172 + $0x1a1] sm:$0xff]
        %v399 = vld [vmem:[%s172 + $0x1b1] sm:$0xff]
        %v400 = vld [vmem:[%s172 + $0x1e1] sm:$0xff]
        %v401 = vld [vmem:[%s172 + $0x1f1] sm:$0xff]
        %v402 = vld [vmem:[%s172 + $0x201] sm:$0xff]
        %v403 = vld [vmem:[%s172 + $0x211] sm:$0xff]
        %v404 = vld [vmem:[%s172 + $0x221] sm:$0xff]
        %v405 = vld [vmem:[%s172 + $0x231] sm:$0xff]
        %v406 = vld [vmem:[%s172 + $0x241] sm:$0xff]
        %v407 = vld [vmem:[%s172 + $0x251] sm:$0xff]
        %v408 = vld [vmem:[%s172 + $0x281] sm:$0xff]
        %v409 = vld [vmem:[%s172 + $0x291] sm:$0xff]
        %v410 = vld [vmem:[%s172 + $0x2a1] sm:$0xff]
        %v411 = vld [vmem:[%s172 + $0x2b1] sm:$0xff]
        %v412 = vld [vmem:[%s172 + $0x2c1] sm:$0xff]
        %v413 = vld [vmem:[%s172 + $0x2d1] sm:$0xff]
        %v414 = vld [vmem:[%s172 + $0x2e1] sm:$0xff]
        %v415 = vld [vmem:[%s172 + $0x2f1] sm:$0xff]
        %v416 = vld [vmem:[%s172 + $0x321] sm:$0xff]
        %v417 = vld [vmem:[%s172 + $0x331] sm:$0xff]
        %v418 = vld [vmem:[%s172 + $0x341] sm:$0xff]
        %v419 = vld [vmem:[%s172 + $0x351] sm:$0xff]
        %v420 = vld [vmem:[%s172 + $0x361] sm:$0xff]
        %v421 = vld [vmem:[%s172 + $0x371] sm:$0xff]
        %v422 = vld [vmem:[%s172 + $0x381] sm:$0xff]
        %v423 = vld [vmem:[%s172 + $0x391] sm:$0xff]
        %v424 = vld [vmem:[%s172 + $0x3c1] sm:$0xff]
        %v425 = vld [vmem:[%s172 + $0x3d1] sm:$0xff]
        %v426 = vld [vmem:[%s172 + $0x3e1] sm:$0xff]
        %v427 = vld [vmem:[%s172 + $0x3f1] sm:$0xff]
        %v428 = vld [vmem:[%s172 + $0x401] sm:$0xff]
        %v429 = vld [vmem:[%s172 + $0x411] sm:$0xff]
        %v430 = vld [vmem:[%s172 + $0x421] sm:$0xff]
        %v431 = vld [vmem:[%s172 + $0x431] sm:$0xff]
        %v432 = vld [vmem:[%s172 + $0x461] sm:$0xff]
        %v433 = vld [vmem:[%s172 + $0x471] sm:$0xff]
        %v434 = vld [vmem:[%s172 + $0x481] sm:$0xff]
        %v435 = vld [vmem:[%s172 + $0x491] sm:$0xff]
        %v436 = vld [vmem:[%s172 + $0x4a1] sm:$0xff]
        %v437 = vld [vmem:[%s172 + $0x4b1] sm:$0xff]
        %v438 = vld [vmem:[%s172 + $0x4c1] sm:$0xff]
        %v439 = vld [vmem:[%s172 + $0x4d1] sm:$0xff]
        %v440 = vperm.slane %v175, 1
        %v441 = vmul.f32 %v376, %v440
        %v442 = vmul.f32 %v377, %v440
        %v443 = vmul.f32 %v378, %v440
        %v444 = vmul.f32 %v379, %v440
        %v445 = vmul.f32 %v380, %v440
        %v446 = vmul.f32 %v381, %v440
        %v447 = vmul.f32 %v382, %v440
        %v448 = vmul.f32 %v383, %v440
        %v449 = vmul.f32 %v384, %v440
        %v450 = vmul.f32 %v385, %v440
        %v451 = vmul.f32 %v386, %v440
        %v452 = vmul.f32 %v387, %v440
        %v453 = vmul.f32 %v388, %v440
        %v454 = vmul.f32 %v389, %v440
        %v455 = vmul.f32 %v390, %v440
        %v456 = vmul.f32 %v391, %v440
        %v457 = vmul.f32 %v392, %v440
        %v458 = vmul.f32 %v393, %v440
        %v459 = vmul.f32 %v394, %v440
        %v460 = vmul.f32 %v395, %v440
        %v461 = vmul.f32 %v396, %v440
        %v462 = vmul.f32 %v397, %v440
        %v463 = vmul.f32 %v398, %v440
        %v464 = vmul.f32 %v399, %v440
        %v465 = vmul.f32 %v400, %v440
        %v466 = vmul.f32 %v401, %v440
        %v467 = vmul.f32 %v402, %v440
        %v468 = vmul.f32 %v403, %v440
        %v469 = vmul.f32 %v404, %v440
        %v470 = vmul.f32 %v405, %v440
        %v471 = vmul.f32 %v406, %v440
        %v472 = vmul.f32 %v407, %v440
        %v473 = vmul.f32 %v408, %v440
        %v474 = vmul.f32 %v409, %v440
        %v475 = vmul.f32 %v410, %v440
        %v476 = vmul.f32 %v411, %v440
        %v477 = vmul.f32 %v412, %v440
        %v478 = vmul.f32 %v413, %v440
        %v479 = vmul.f32 %v414, %v440
        %v480 = vmul.f32 %v415, %v440
        %v481 = vmul.f32 %v416, %v440
        %v482 = vmul.f32 %v417, %v440
        %v483 = vmul.f32 %v418, %v440
        %v484 = vmul.f32 %v419, %v440
        %v485 = vmul.f32 %v420, %v440
        %v486 = vmul.f32 %v421, %v440
        %v487 = vmul.f32 %v422, %v440
        %v488 = vmul.f32 %v423, %v440
        %v489 = vmul.f32 %v424, %v440
        %v490 = vmul.f32 %v425, %v440
        %v491 = vmul.f32 %v426, %v440
        %v492 = vmul.f32 %v427, %v440
        %v493 = vmul.f32 %v428, %v440
        %v494 = vmul.f32 %v429, %v440
        %v495 = vmul.f32 %v430, %v440
        %v496 = vmul.f32 %v431, %v440
        %v497 = vmul.f32 %v432, %v440
        %v498 = vmul.f32 %v433, %v440
        %v499 = vmul.f32 %v434, %v440
        %v500 = vmul.f32 %v435, %v440
        %v501 = vmul.f32 %v436, %v440
        %v502 = vmul.f32 %v437, %v440
        %v503 = vmul.f32 %v438, %v440
        %v504 = vmul.f32 %v439, %v440
        %v505 = vadd.f32 %v312, %v441
        %v506 = vadd.f32 %v313, %v442
        %v507 = vadd.f32 %v314, %v443
        %v508 = vadd.f32 %v315, %v444
        %v509 = vadd.f32 %v316, %v445
        %v510 = vadd.f32 %v317, %v446
        %v511 = vadd.f32 %v318, %v447
        %v512 = vadd.f32 %v319, %v448
        %v513 = vadd.f32 %v320, %v449
        %v514 = vadd.f32 %v321, %v450
        %v515 = vadd.f32 %v322, %v451
        %v516 = vadd.f32 %v323, %v452
        %v517 = vadd.f32 %v324, %v453
        %v518 = vadd.f32 %v325, %v454
        %v519 = vadd.f32 %v326, %v455
        %v520 = vadd.f32 %v327, %v456
        %v521 = vadd.f32 %v328, %v457
        %v522 = vadd.f32 %v329, %v458
        %v523 = vadd.f32 %v330, %v459
        %v524 = vadd.f32 %v331, %v460
        %v525 = vadd.f32 %v332, %v461
        %v526 = vadd.f32 %v333, %v462
        %v527 = vadd.f32 %v334, %v463
        %v528 = vadd.f32 %v335, %v464
        %v529 = vadd.f32 %v336, %v465
        %v530 = vadd.f32 %v337, %v466
        %v531 = vadd.f32 %v338, %v467
        %v532 = vadd.f32 %v339, %v468
        %v533 = vadd.f32 %v340, %v469
        %v534 = vadd.f32 %v341, %v470
        %v535 = vadd.f32 %v342, %v471
        %v536 = vadd.f32 %v343, %v472
        %v537 = vadd.f32 %v344, %v473
        %v538 = vadd.f32 %v345, %v474
        %v539 = vadd.f32 %v346, %v475
        %v540 = vadd.f32 %v347, %v476
        %v541 = vadd.f32 %v348, %v477
        %v542 = vadd.f32 %v349, %v478
        %v543 = vadd.f32 %v350, %v479
        %v544 = vadd.f32 %v351, %v480
        %v545 = vadd.f32 %v352, %v481
        %v546 = vadd.f32 %v353, %v482
        %v547 = vadd.f32 %v354, %v483
        %v548 = vadd.f32 %v355, %v484
        %v549 = vadd.f32 %v356, %v485
        %v550 = vadd.f32 %v357, %v486
        %v551 = vadd.f32 %v358, %v487
        %v552 = vadd.f32 %v359, %v488
        %v553 = vadd.f32 %v360, %v489
        %v554 = vadd.f32 %v361, %v490
        %v555 = vadd.f32 %v362, %v491
        %v556 = vadd.f32 %v363, %v492
        %v557 = vadd.f32 %v364, %v493
        %v558 = vadd.f32 %v365, %v494
        %v559 = vadd.f32 %v366, %v495
        %v560 = vadd.f32 %v367, %v496
        %v561 = vadd.f32 %v368, %v497
        %v562 = vadd.f32 %v369, %v498
        %v563 = vadd.f32 %v370, %v499
        %v564 = vadd.f32 %v371, %v500
        %v565 = vadd.f32 %v372, %v501
        %v566 = vadd.f32 %v373, %v502
        %v567 = vadd.f32 %v374, %v503
        %v568 = vadd.f32 %v375, %v504
        %v569 = vld [vmem:[%s172 + $0x2] sm:$0xff]
        %v570 = vld [vmem:[%s172 + $0x12] sm:$0xff]
        %v571 = vld [vmem:[%s172 + $0x22] sm:$0xff]
        %v572 = vld [vmem:[%s172 + $0x32] sm:$0xff]
        %v573 = vld [vmem:[%s172 + $0x42] sm:$0xff]
        %v574 = vld [vmem:[%s172 + $0x52] sm:$0xff]
        %v575 = vld [vmem:[%s172 + $0x62] sm:$0xff]
        %v576 = vld [vmem:[%s172 + $0x72] sm:$0xff]
        %v577 = vld [vmem:[%s172 + $0xa2] sm:$0xff]
        %v578 = vld [vmem:[%s172 + $0xb2] sm:$0xff]
        %v579 = vld [vmem:[%s172 + $0xc2] sm:$0xff]
        %v580 = vld [vmem:[%s172 + $0xd2] sm:$0xff]
        %v581 = vld [vmem:[%s172 + $0xe2] sm:$0xff]
        %v582 = vld [vmem:[%s172 + $0xf2] sm:$0xff]
        %v583 = vld [vmem:[%s172 + $0x102] sm:$0xff]
        %v584 = vld [vmem:[%s172 + $0x112] sm:$0xff]
        %v585 = vld [vmem:[%s172 + $0x142] sm:$0xff]
        %v586 = vld [vmem:[%s172 + $0x152] sm:$0xff]
        %v587 = vld [vmem:[%s172 + $0x162] sm:$0xff]
        %v588 = vld [vmem:[%s172 + $0x172] sm:$0xff]
        %v589 = vld [vmem:[%s172 + $0x182] sm:$0xff]
        %v590 = vld [vmem:[%s172 + $0x192] sm:$0xff]
        %v591 = vld [vmem:[%s172 + $0x1a2] sm:$0xff]
        %v592 = vld [vmem:[%s172 + $0x1b2] sm:$0xff]
        %v593 = vld [vmem:[%s172 + $0x1e2] sm:$0xff]
        %v594 = vld [vmem:[%s172 + $0x1f2] sm:$0xff]
        %v595 = vld [vmem:[%s172 + $0x202] sm:$0xff]
        %v596 = vld [vmem:[%s172 + $0x212] sm:$0xff]
        %v597 = vld [vmem:[%s172 + $0x222] sm:$0xff]
        %v598 = vld [vmem:[%s172 + $0x232] sm:$0xff]
        %v599 = vld [vmem:[%s172 + $0x242] sm:$0xff]
        %v600 = vld [vmem:[%s172 + $0x252] sm:$0xff]
        %v601 = vld [vmem:[%s172 + $0x282] sm:$0xff]
        %v602 = vld [vmem:[%s172 + $0x292] sm:$0xff]
        %v603 = vld [vmem:[%s172 + $0x2a2] sm:$0xff]
        %v604 = vld [vmem:[%s172 + $0x2b2] sm:$0xff]
        %v605 = vld [vmem:[%s172 + $0x2c2] sm:$0xff]
        %v606 = vld [vmem:[%s172 + $0x2d2] sm:$0xff]
        %v607 = vld [vmem:[%s172 + $0x2e2] sm:$0xff]
        %v608 = vld [vmem:[%s172 + $0x2f2] sm:$0xff]
        %v609 = vld [vmem:[%s172 + $0x322] sm:$0xff]
        %v610 = vld [vmem:[%s172 + $0x332] sm:$0xff]
        %v611 = vld [vmem:[%s172 + $0x342] sm:$0xff]
        %v612 = vld [vmem:[%s172 + $0x352] sm:$0xff]
        %v613 = vld [vmem:[%s172 + $0x362] sm:$0xff]
        %v614 = vld [vmem:[%s172 + $0x372] sm:$0xff]
        %v615 = vld [vmem:[%s172 + $0x382] sm:$0xff]
        %v616 = vld [vmem:[%s172 + $0x392] sm:$0xff]
        %v617 = vld [vmem:[%s172 + $0x3c2] sm:$0xff]
        %v618 = vld [vmem:[%s172 + $0x3d2] sm:$0xff]
        %v619 = vld [vmem:[%s172 + $0x3e2] sm:$0xff]
        %v620 = vld [vmem:[%s172 + $0x3f2] sm:$0xff]
        %v621 = vld [vmem:[%s172 + $0x402] sm:$0xff]
        %v622 = vld [vmem:[%s172 + $0x412] sm:$0xff]
        %v623 = vld [vmem:[%s172 + $0x422] sm:$0xff]
        %v624 = vld [vmem:[%s172 + $0x432] sm:$0xff]
        %v625 = vld [vmem:[%s172 + $0x462] sm:$0xff]
        %v626 = vld [vmem:[%s172 + $0x472] sm:$0xff]
        %v627 = vld [vmem:[%s172 + $0x482] sm:$0xff]
        %v628 = vld [vmem:[%s172 + $0x492] sm:$0xff]
        %v629 = vld [vmem:[%s172 + $0x4a2] sm:$0xff]
        %v630 = vld [vmem:[%s172 + $0x4b2] sm:$0xff]
        %v631 = vld [vmem:[%s172 + $0x4c2] sm:$0xff]
        %v632 = vld [vmem:[%s172 + $0x4d2] sm:$0xff]
        %v633 = vperm.slane %v175, 2
        %v634 = vmul.f32 %v569, %v633
        %v635 = vmul.f32 %v570, %v633
        %v636 = vmul.f32 %v571, %v633
        %v637 = vmul.f32 %v572, %v633
        %v638 = vmul.f32 %v573, %v633
        %v639 = vmul.f32 %v574, %v633
        %v640 = vmul.f32 %v575, %v633
        %v641 = vmul.f32 %v576, %v633
        %v642 = vmul.f32 %v577, %v633
        %v643 = vmul.f32 %v578, %v633
        %v644 = vmul.f32 %v579, %v633
        %v645 = vmul.f32 %v580, %v633
        %v646 = vmul.f32 %v581, %v633
        %v647 = vmul.f32 %v582, %v633
        %v648 = vmul.f32 %v583, %v633
        %v649 = vmul.f32 %v584, %v633
        %v650 = vmul.f32 %v585, %v633
        %v651 = vmul.f32 %v586, %v633
        %v652 = vmul.f32 %v587, %v633
        %v653 = vmul.f32 %v588, %v633
        %v654 = vmul.f32 %v589, %v633
        %v655 = vmul.f32 %v590, %v633
        %v656 = vmul.f32 %v591, %v633
        %v657 = vmul.f32 %v592, %v633
        %v658 = vmul.f32 %v593, %v633
        %v659 = vmul.f32 %v594, %v633
        %v660 = vmul.f32 %v595, %v633
        %v661 = vmul.f32 %v596, %v633
        %v662 = vmul.f32 %v597, %v633
        %v663 = vmul.f32 %v598, %v633
        %v664 = vmul.f32 %v599, %v633
        %v665 = vmul.f32 %v600, %v633
        %v666 = vmul.f32 %v601, %v633
        %v667 = vmul.f32 %v602, %v633
        %v668 = vmul.f32 %v603, %v633
        %v669 = vmul.f32 %v604, %v633
        %v670 = vmul.f32 %v605, %v633
        %v671 = vmul.f32 %v606, %v633
        %v672 = vmul.f32 %v607, %v633
        %v673 = vmul.f32 %v608, %v633
        %v674 = vmul.f32 %v609, %v633
        %v675 = vmul.f32 %v610, %v633
        %v676 = vmul.f32 %v611, %v633
        %v677 = vmul.f32 %v612, %v633
        %v678 = vmul.f32 %v613, %v633
        %v679 = vmul.f32 %v614, %v633
        %v680 = vmul.f32 %v615, %v633
        %v681 = vmul.f32 %v616, %v633
        %v682 = vmul.f32 %v617, %v633
        %v683 = vmul.f32 %v618, %v633
        %v684 = vmul.f32 %v619, %v633
        %v685 = vmul.f32 %v620, %v633
        %v686 = vmul.f32 %v621, %v633
        %v687 = vmul.f32 %v622, %v633
        %v688 = vmul.f32 %v623, %v633
        %v689 = vmul.f32 %v624, %v633
        %v690 = vmul.f32 %v625, %v633
        %v691 = vmul.f32 %v626, %v633
        %v692 = vmul.f32 %v627, %v633
        %v693 = vmul.f32 %v628, %v633
        %v694 = vmul.f32 %v629, %v633
        %v695 = vmul.f32 %v630, %v633
        %v696 = vmul.f32 %v631, %v633
        %v697 = vmul.f32 %v632, %v633
        %v698 = vadd.f32 %v505, %v634
        %v699 = vadd.f32 %v506, %v635
        %v700 = vadd.f32 %v507, %v636
        %v701 = vadd.f32 %v508, %v637
        %v702 = vadd.f32 %v509, %v638
        %v703 = vadd.f32 %v510, %v639
        %v704 = vadd.f32 %v511, %v640
        %v705 = vadd.f32 %v512, %v641
        %v706 = vadd.f32 %v513, %v642
        %v707 = vadd.f32 %v514, %v643
        %v708 = vadd.f32 %v515, %v644
        %v709 = vadd.f32 %v516, %v645
        %v710 = vadd.f32 %v517, %v646
        %v711 = vadd.f32 %v518, %v647
        %v712 = vadd.f32 %v519, %v648
        %v713 = vadd.f32 %v520, %v649
        %v714 = vadd.f32 %v521, %v650
        %v715 = vadd.f32 %v522, %v651
        %v716 = vadd.f32 %v523, %v652
        %v717 = vadd.f32 %v524, %v653
        %v718 = vadd.f32 %v525, %v654
        %v719 = vadd.f32 %v526, %v655
        %v720 = vadd.f32 %v527, %v656
        %v721 = vadd.f32 %v528, %v657
        %v722 = vadd.f32 %v529, %v658
        %v723 = vadd.f32 %v530, %v659
        %v724 = vadd.f32 %v531, %v660
        %v725 = vadd.f32 %v532, %v661
        %v726 = vadd.f32 %v533, %v662
        %v727 = vadd.f32 %v534, %v663
        %v728 = vadd.f32 %v535, %v664
        %v729 = vadd.f32 %v536, %v665
        %v730 = vadd.f32 %v537, %v666
        %v731 = vadd.f32 %v538, %v667
        %v732 = vadd.f32 %v539, %v668
        %v733 = vadd.f32 %v540, %v669
        %v734 = vadd.f32 %v541, %v670
        %v735 = vadd.f32 %v542, %v671
        %v736 = vadd.f32 %v543, %v672
        %v737 = vadd.f32 %v544, %v673
        %v738 = vadd.f32 %v545, %v674
        %v739 = vadd.f32 %v546, %v675
        %v740 = vadd.f32 %v547, %v676
        %v741 = vadd.f32 %v548, %v677
        %v742 = vadd.f32 %v549, %v678
        %v743 = vadd.f32 %v550, %v679
        %v744 = vadd.f32 %v551, %v680
        %v745 = vadd.f32 %v552, %v681
        %v746 = vadd.f32 %v553, %v682
        %v747 = vadd.f32 %v554, %v683
        %v748 = vadd.f32 %v555, %v684
        %v749 = vadd.f32 %v556, %v685
        %v750 = vadd.f32 %v557, %v686
        %v751 = vadd.f32 %v558, %v687
        %v752 = vadd.f32 %v559, %v688
        %v753 = vadd.f32 %v560, %v689
        %v754 = vadd.f32 %v561, %v690
        %v755 = vadd.f32 %v562, %v691
        %v756 = vadd.f32 %v563, %v692
        %v757 = vadd.f32 %v564, %v693
        %v758 = vadd.f32 %v565, %v694
        %v759 = vadd.f32 %v566, %v695
        %v760 = vadd.f32 %v567, %v696
        %v761 = vadd.f32 %v568, %v697
        %s762 = scalar_lea.vmem %s172, 16
        %v763 = vld [vmem:[%s762] sm:$0xff]
        %v764 = vld [vmem:[%s762 + $0x10] sm:$0xff]
        %v765 = vld [vmem:[%s762 + $0x20] sm:$0xff]
        %v766 = vld [vmem:[%s762 + $0x30] sm:$0xff]
        %v767 = vld [vmem:[%s762 + $0x40] sm:$0xff]
        %v768 = vld [vmem:[%s762 + $0x50] sm:$0xff]
        %v769 = vld [vmem:[%s762 + $0x60] sm:$0xff]
        %v770 = vld [vmem:[%s762 + $0x70] sm:$0xff]
        %v771 = vld [vmem:[%s762 + $0xa0] sm:$0xff]
        %v772 = vld [vmem:[%s762 + $0xb0] sm:$0xff]
        %v773 = vld [vmem:[%s762 + $0xc0] sm:$0xff]
        %v774 = vld [vmem:[%s762 + $0xd0] sm:$0xff]
        %v775 = vld [vmem:[%s762 + $0xe0] sm:$0xff]
        %v776 = vld [vmem:[%s762 + $0xf0] sm:$0xff]
        %v777 = vld [vmem:[%s762 + $0x100] sm:$0xff]
        %v778 = vld [vmem:[%s762 + $0x110] sm:$0xff]
        %v779 = vld [vmem:[%s762 + $0x140] sm:$0xff]
        %v780 = vld [vmem:[%s762 + $0x150] sm:$0xff]
        %v781 = vld [vmem:[%s762 + $0x160] sm:$0xff]
        %v782 = vld [vmem:[%s762 + $0x170] sm:$0xff]
        %v783 = vld [vmem:[%s762 + $0x180] sm:$0xff]
        %v784 = vld [vmem:[%s762 + $0x190] sm:$0xff]
        %v785 = vld [vmem:[%s762 + $0x1a0] sm:$0xff]
        %v786 = vld [vmem:[%s762 + $0x1b0] sm:$0xff]
        %v787 = vld [vmem:[%s762 + $0x1e0] sm:$0xff]
        %v788 = vld [vmem:[%s762 + $0x1f0] sm:$0xff]
        %v789 = vld [vmem:[%s762 + $0x200] sm:$0xff]
        %v790 = vld [vmem:[%s762 + $0x210] sm:$0xff]
        %v791 = vld [vmem:[%s762 + $0x220] sm:$0xff]
        %v792 = vld [vmem:[%s762 + $0x230] sm:$0xff]
        %v793 = vld [vmem:[%s762 + $0x240] sm:$0xff]
        %v794 = vld [vmem:[%s762 + $0x250] sm:$0xff]
        %v795 = vld [vmem:[%s762 + $0x280] sm:$0xff]
        %v796 = vld [vmem:[%s762 + $0x290] sm:$0xff]
        %v797 = vld [vmem:[%s762 + $0x2a0] sm:$0xff]
        %v798 = vld [vmem:[%s762 + $0x2b0] sm:$0xff]
        %v799 = vld [vmem:[%s762 + $0x2c0] sm:$0xff]
        %v800 = vld [vmem:[%s762 + $0x2d0] sm:$0xff]
        %v801 = vld [vmem:[%s762 + $0x2e0] sm:$0xff]
        %v802 = vld [vmem:[%s762 + $0x2f0] sm:$0xff]
        %v803 = vld [vmem:[%s762 + $0x320] sm:$0xff]
        %v804 = vld [vmem:[%s762 + $0x330] sm:$0xff]
        %v805 = vld [vmem:[%s762 + $0x340] sm:$0xff]
        %v806 = vld [vmem:[%s762 + $0x350] sm:$0xff]
        %v807 = vld [vmem:[%s762 + $0x360] sm:$0xff]
        %v808 = vld [vmem:[%s762 + $0x370] sm:$0xff]
        %v809 = vld [vmem:[%s762 + $0x380] sm:$0xff]
        %v810 = vld [vmem:[%s762 + $0x390] sm:$0xff]
        %v811 = vld [vmem:[%s762 + $0x3c0] sm:$0xff]
        %v812 = vld [vmem:[%s762 + $0x3d0] sm:$0xff]
        %v813 = vld [vmem:[%s762 + $0x3e0] sm:$0xff]
        %v814 = vld [vmem:[%s762 + $0x3f0] sm:$0xff]
        %v815 = vld [vmem:[%s762 + $0x400] sm:$0xff]
        %v816 = vld [vmem:[%s762 + $0x410] sm:$0xff]
        %v817 = vld [vmem:[%s762 + $0x420] sm:$0xff]
        %v818 = vld [vmem:[%s762 + $0x430] sm:$0xff]
        %v819 = vld [vmem:[%s762 + $0x460] sm:$0xff]
        %v820 = vld [vmem:[%s762 + $0x470] sm:$0xff]
        %v821 = vld [vmem:[%s762 + $0x480] sm:$0xff]
        %v822 = vld [vmem:[%s762 + $0x490] sm:$0xff]
        %v823 = vld [vmem:[%s762 + $0x4a0] sm:$0xff]
        %v824 = vld [vmem:[%s762 + $0x4b0] sm:$0xff]
        %v825 = vld [vmem:[%s762 + $0x4c0] sm:$0xff]
        %v826 = vld [vmem:[%s762 + $0x4d0] sm:$0xff]
        %v827 = vperm.slane %v175, 3
        %v828 = vmul.f32 %v763, %v827
        %v829 = vmul.f32 %v764, %v827
        %v830 = vmul.f32 %v765, %v827
        %v831 = vmul.f32 %v766, %v827
        %v832 = vmul.f32 %v767, %v827
        %v833 = vmul.f32 %v768, %v827
        %v834 = vmul.f32 %v769, %v827
        %v835 = vmul.f32 %v770, %v827
        %v836 = vmul.f32 %v771, %v827
        %v837 = vmul.f32 %v772, %v827
        %v838 = vmul.f32 %v773, %v827
        %v839 = vmul.f32 %v774, %v827
        %v840 = vmul.f32 %v775, %v827
        %v841 = vmul.f32 %v776, %v827
        %v842 = vmul.f32 %v777, %v827
        %v843 = vmul.f32 %v778, %v827
        %v844 = vmul.f32 %v779, %v827
        %v845 = vmul.f32 %v780, %v827
        %v846 = vmul.f32 %v781, %v827
        %v847 = vmul.f32 %v782, %v827
        %v848 = vmul.f32 %v783, %v827
        %v849 = vmul.f32 %v784, %v827
        %v850 = vmul.f32 %v785, %v827
        %v851 = vmul.f32 %v786, %v827
        %v852 = vmul.f32 %v787, %v827
        %v853 = vmul.f32 %v788, %v827
        %v854 = vmul.f32 %v789, %v827
        %v855 = vmul.f32 %v790, %v827
        %v856 = vmul.f32 %v791, %v827
        %v857 = vmul.f32 %v792, %v827
        %v858 = vmul.f32 %v793, %v827
        %v859 = vmul.f32 %v794, %v827
        %v860 = vmul.f32 %v795, %v827
        %v861 = vmul.f32 %v796, %v827
        %v862 = vmul.f32 %v797, %v827
        %v863 = vmul.f32 %v798, %v827
        %v864 = vmul.f32 %v799, %v827
        %v865 = vmul.f32 %v800, %v827
        %v866 = vmul.f32 %v801, %v827
        %v867 = vmul.f32 %v802, %v827
        %v868 = vmul.f32 %v803, %v827
        %v869 = vmul.f32 %v804, %v827
        %v870 = vmul.f32 %v805, %v827
        %v871 = vmul.f32 %v806, %v827
        %v872 = vmul.f32 %v807, %v827
        %v873 = vmul.f32 %v808, %v827
        %v874 = vmul.f32 %v809, %v827
        %v875 = vmul.f32 %v810, %v827
        %v876 = vmul.f32 %v811, %v827
        %v877 = vmul.f32 %v812, %v827
        %v878 = vmul.f32 %v813, %v827
        %v879 = vmul.f32 %v814, %v827
        %v880 = vmul.f32 %v815, %v827
        %v881 = vmul.f32 %v816, %v827
        %v882 = vmul.f32 %v817, %v827
        %v883 = vmul.f32 %v818, %v827
        %v884 = vmul.f32 %v819, %v827
        %v885 = vmul.f32 %v820, %v827
        %v886 = vmul.f32 %v821, %v827
        %v887 = vmul.f32 %v822, %v827
        %v888 = vmul.f32 %v823, %v827
        %v889 = vmul.f32 %v824, %v827
        %v890 = vmul.f32 %v825, %v827
        %v891 = vmul.f32 %v826, %v827
        %v892 = vadd.f32 %v698, %v828
        %v893 = vadd.f32 %v699, %v829
        %v894 = vadd.f32 %v700, %v830
        %v895 = vadd.f32 %v701, %v831
        %v896 = vadd.f32 %v702, %v832
        %v897 = vadd.f32 %v703, %v833
        %v898 = vadd.f32 %v704, %v834
        %v899 = vadd.f32 %v705, %v835
        %v900 = vadd.f32 %v706, %v836
        %v901 = vadd.f32 %v707, %v837
        %v902 = vadd.f32 %v708, %v838
        %v903 = vadd.f32 %v709, %v839
        %v904 = vadd.f32 %v710, %v840
        %v905 = vadd.f32 %v711, %v841
        %v906 = vadd.f32 %v712, %v842
        %v907 = vadd.f32 %v713, %v843
        %v908 = vadd.f32 %v714, %v844
        %v909 = vadd.f32 %v715, %v845
        %v910 = vadd.f32 %v716, %v846
        %v911 = vadd.f32 %v717, %v847
        %v912 = vadd.f32 %v718, %v848
        %v913 = vadd.f32 %v719, %v849
        %v914 = vadd.f32 %v720, %v850
        %v915 = vadd.f32 %v721, %v851
        %v916 = vadd.f32 %v722, %v852
        %v917 = vadd.f32 %v723, %v853
        %v918 = vadd.f32 %v724, %v854
        %v919 = vadd.f32 %v725, %v855
        %v920 = vadd.f32 %v726, %v856
        %v921 = vadd.f32 %v727, %v857
        %v922 = vadd.f32 %v728, %v858
        %v923 = vadd.f32 %v729, %v859
        %v924 = vadd.f32 %v730, %v860
        %v925 = vadd.f32 %v731, %v861
        %v926 = vadd.f32 %v732, %v862
        %v927 = vadd.f32 %v733, %v863
        %v928 = vadd.f32 %v734, %v864
        %v929 = vadd.f32 %v735, %v865
        %v930 = vadd.f32 %v736, %v866
        %v931 = vadd.f32 %v737, %v867
        %v932 = vadd.f32 %v738, %v868
        %v933 = vadd.f32 %v739, %v869
        %v934 = vadd.f32 %v740, %v870
        %v935 = vadd.f32 %v741, %v871
        %v936 = vadd.f32 %v742, %v872
        %v937 = vadd.f32 %v743, %v873
        %v938 = vadd.f32 %v744, %v874
        %v939 = vadd.f32 %v745, %v875
        %v940 = vadd.f32 %v746, %v876
        %v941 = vadd.f32 %v747, %v877
        %v942 = vadd.f32 %v748, %v878
        %v943 = vadd.f32 %v749, %v879
        %v944 = vadd.f32 %v750, %v880
        %v945 = vadd.f32 %v751, %v881
        %v946 = vadd.f32 %v752, %v882
        %v947 = vadd.f32 %v753, %v883
        %v948 = vadd.f32 %v754, %v884
        %v949 = vadd.f32 %v755, %v885
        %v950 = vadd.f32 %v756, %v886
        %v951 = vadd.f32 %v757, %v887
        %v952 = vadd.f32 %v758, %v888
        %v953 = vadd.f32 %v759, %v889
        %v954 = vadd.f32 %v760, %v890
        %v955 = vadd.f32 %v761, %v891
        %v956 = vld [vmem:[%s762 + $0x1] sm:$0xff]
        %v957 = vld [vmem:[%s762 + $0x11] sm:$0xff]
        %v958 = vld [vmem:[%s762 + $0x21] sm:$0xff]
        %v959 = vld [vmem:[%s762 + $0x31] sm:$0xff]
        %v960 = vld [vmem:[%s762 + $0x41] sm:$0xff]
        %v961 = vld [vmem:[%s762 + $0x51] sm:$0xff]
        %v962 = vld [vmem:[%s762 + $0x61] sm:$0xff]
        %v963 = vld [vmem:[%s762 + $0x71] sm:$0xff]
        %v964 = vld [vmem:[%s762 + $0xa1] sm:$0xff]
        %v965 = vld [vmem:[%s762 + $0xb1] sm:$0xff]
        %v966 = vld [vmem:[%s762 + $0xc1] sm:$0xff]
        %v967 = vld [vmem:[%s762 + $0xd1] sm:$0xff]
        %v968 = vld [vmem:[%s762 + $0xe1] sm:$0xff]
        %v969 = vld [vmem:[%s762 + $0xf1] sm:$0xff]
        %v970 = vld [vmem:[%s762 + $0x101] sm:$0xff]
        %v971 = vld [vmem:[%s762 + $0x111] sm:$0xff]
        %v972 = vld [vmem:[%s762 + $0x141] sm:$0xff]
        %v973 = vld [vmem:[%s762 + $0x151] sm:$0xff]
        %v974 = vld [vmem:[%s762 + $0x161] sm:$0xff]
        %v975 = vld [vmem:[%s762 + $0x171] sm:$0xff]
        %v976 = vld [vmem:[%s762 + $0x181] sm:$0xff]
        %v977 = vld [vmem:[%s762 + $0x191] sm:$0xff]
        %v978 = vld [vmem:[%s762 + $0x1a1] sm:$0xff]
        %v979 = vld [vmem:[%s762 + $0x1b1] sm:$0xff]
        %v980 = vld [vmem:[%s762 + $0x1e1] sm:$0xff]
        %v981 = vld [vmem:[%s762 + $0x1f1] sm:$0xff]
        %v982 = vld [vmem:[%s762 + $0x201] sm:$0xff]
        %v983 = vld [vmem:[%s762 + $0x211] sm:$0xff]
        %v984 = vld [vmem:[%s762 + $0x221] sm:$0xff]
        %v985 = vld [vmem:[%s762 + $0x231] sm:$0xff]
        %v986 = vld [vmem:[%s762 + $0x241] sm:$0xff]
        %v987 = vld [vmem:[%s762 + $0x251] sm:$0xff]
        %v988 = vld [vmem:[%s762 + $0x281] sm:$0xff]
        %v989 = vld [vmem:[%s762 + $0x291] sm:$0xff]
        %v990 = vld [vmem:[%s762 + $0x2a1] sm:$0xff]
        %v991 = vld [vmem:[%s762 + $0x2b1] sm:$0xff]
        %v992 = vld [vmem:[%s762 + $0x2c1] sm:$0xff]
        %v993 = vld [vmem:[%s762 + $0x2d1] sm:$0xff]
        %v994 = vld [vmem:[%s762 + $0x2e1] sm:$0xff]
        %v995 = vld [vmem:[%s762 + $0x2f1] sm:$0xff]
        %v996 = vld [vmem:[%s762 + $0x321] sm:$0xff]
        %v997 = vld [vmem:[%s762 + $0x331] sm:$0xff]
        %v998 = vld [vmem:[%s762 + $0x341] sm:$0xff]
        %v999 = vld [vmem:[%s762 + $0x351] sm:$0xff]
        %v1000 = vld [vmem:[%s762 + $0x361] sm:$0xff]
        %v1001 = vld [vmem:[%s762 + $0x371] sm:$0xff]
        %v1002 = vld [vmem:[%s762 + $0x381] sm:$0xff]
        %v1003 = vld [vmem:[%s762 + $0x391] sm:$0xff]
        %v1004 = vld [vmem:[%s762 + $0x3c1] sm:$0xff]
        %v1005 = vld [vmem:[%s762 + $0x3d1] sm:$0xff]
        %v1006 = vld [vmem:[%s762 + $0x3e1] sm:$0xff]
        %v1007 = vld [vmem:[%s762 + $0x3f1] sm:$0xff]
        %v1008 = vld [vmem:[%s762 + $0x401] sm:$0xff]
        %v1009 = vld [vmem:[%s762 + $0x411] sm:$0xff]
        %v1010 = vld [vmem:[%s762 + $0x421] sm:$0xff]
        %v1011 = vld [vmem:[%s762 + $0x431] sm:$0xff]
        %v1012 = vld [vmem:[%s762 + $0x461] sm:$0xff]
        %v1013 = vld [vmem:[%s762 + $0x471] sm:$0xff]
        %v1014 = vld [vmem:[%s762 + $0x481] sm:$0xff]
        %v1015 = vld [vmem:[%s762 + $0x491] sm:$0xff]
        %v1016 = vld [vmem:[%s762 + $0x4a1] sm:$0xff]
        %v1017 = vld [vmem:[%s762 + $0x4b1] sm:$0xff]
        %v1018 = vld [vmem:[%s762 + $0x4c1] sm:$0xff]
        %v1019 = vld [vmem:[%s762 + $0x4d1] sm:$0xff]
        %v1020 = vperm.slane %v175, 4
        %v1021 = vmul.f32 %v956, %v1020
        %v1022 = vmul.f32 %v957, %v1020
        %v1023 = vmul.f32 %v958, %v1020
        %v1024 = vmul.f32 %v959, %v1020
        %v1025 = vmul.f32 %v960, %v1020
        %v1026 = vmul.f32 %v961, %v1020
        %v1027 = vmul.f32 %v962, %v1020
        %v1028 = vmul.f32 %v963, %v1020
        %v1029 = vmul.f32 %v964, %v1020
        %v1030 = vmul.f32 %v965, %v1020
        %v1031 = vmul.f32 %v966, %v1020
        %v1032 = vmul.f32 %v967, %v1020
        %v1033 = vmul.f32 %v968, %v1020
        %v1034 = vmul.f32 %v969, %v1020
        %v1035 = vmul.f32 %v970, %v1020
        %v1036 = vmul.f32 %v971, %v1020
        %v1037 = vmul.f32 %v972, %v1020
        %v1038 = vmul.f32 %v973, %v1020
        %v1039 = vmul.f32 %v974, %v1020
        %v1040 = vmul.f32 %v975, %v1020
        %v1041 = vmul.f32 %v976, %v1020
        %v1042 = vmul.f32 %v977, %v1020
        %v1043 = vmul.f32 %v978, %v1020
        %v1044 = vmul.f32 %v979, %v1020
        %v1045 = vmul.f32 %v980, %v1020
        %v1046 = vmul.f32 %v981, %v1020
        %v1047 = vmul.f32 %v982, %v1020
        %v1048 = vmul.f32 %v983, %v1020
        %v1049 = vmul.f32 %v984, %v1020
        %v1050 = vmul.f32 %v985, %v1020
        %v1051 = vmul.f32 %v986, %v1020
        %v1052 = vmul.f32 %v987, %v1020
        %v1053 = vmul.f32 %v988, %v1020
        %v1054 = vmul.f32 %v989, %v1020
        %v1055 = vmul.f32 %v990, %v1020
        %v1056 = vmul.f32 %v991, %v1020
        %v1057 = vmul.f32 %v992, %v1020
        %v1058 = vmul.f32 %v993, %v1020
        %v1059 = vmul.f32 %v994, %v1020
        %v1060 = vmul.f32 %v995, %v1020
        %v1061 = vmul.f32 %v996, %v1020
        %v1062 = vmul.f32 %v997, %v1020
        %v1063 = vmul.f32 %v998, %v1020
        %v1064 = vmul.f32 %v999, %v1020
        %v1065 = vmul.f32 %v1000, %v1020
        %v1066 = vmul.f32 %v1001, %v1020
        %v1067 = vmul.f32 %v1002, %v1020
        %v1068 = vmul.f32 %v1003, %v1020
        %v1069 = vmul.f32 %v1004, %v1020
        %v1070 = vmul.f32 %v1005, %v1020
        %v1071 = vmul.f32 %v1006, %v1020
        %v1072 = vmul.f32 %v1007, %v1020
        %v1073 = vmul.f32 %v1008, %v1020
        %v1074 = vmul.f32 %v1009, %v1020
        %v1075 = vmul.f32 %v1010, %v1020
        %v1076 = vmul.f32 %v1011, %v1020
        %v1077 = vmul.f32 %v1012, %v1020
        %v1078 = vmul.f32 %v1013, %v1020
        %v1079 = vmul.f32 %v1014, %v1020
        %v1080 = vmul.f32 %v1015, %v1020
        %v1081 = vmul.f32 %v1016, %v1020
        %v1082 = vmul.f32 %v1017, %v1020
        %v1083 = vmul.f32 %v1018, %v1020
        %v1084 = vmul.f32 %v1019, %v1020
        %v1085 = vadd.f32 %v892, %v1021
        %v1086 = vadd.f32 %v893, %v1022
        %v1087 = vadd.f32 %v894, %v1023
        %v1088 = vadd.f32 %v895, %v1024
        %v1089 = vadd.f32 %v896, %v1025
        %v1090 = vadd.f32 %v897, %v1026
        %v1091 = vadd.f32 %v898, %v1027
        %v1092 = vadd.f32 %v899, %v1028
        %v1093 = vadd.f32 %v900, %v1029
        %v1094 = vadd.f32 %v901, %v1030
        %v1095 = vadd.f32 %v902, %v1031
        %v1096 = vadd.f32 %v903, %v1032
        %v1097 = vadd.f32 %v904, %v1033
        %v1098 = vadd.f32 %v905, %v1034
        %v1099 = vadd.f32 %v906, %v1035
        %v1100 = vadd.f32 %v907, %v1036
        %v1101 = vadd.f32 %v908, %v1037
        %v1102 = vadd.f32 %v909, %v1038
        %v1103 = vadd.f32 %v910, %v1039
        %v1104 = vadd.f32 %v911, %v1040
        %v1105 = vadd.f32 %v912, %v1041
        %v1106 = vadd.f32 %v913, %v1042
        %v1107 = vadd.f32 %v914, %v1043
        %v1108 = vadd.f32 %v915, %v1044
        %v1109 = vadd.f32 %v916, %v1045
        %v1110 = vadd.f32 %v917, %v1046
        %v1111 = vadd.f32 %v918, %v1047
        %v1112 = vadd.f32 %v919, %v1048
        %v1113 = vadd.f32 %v920, %v1049
        %v1114 = vadd.f32 %v921, %v1050
        %v1115 = vadd.f32 %v922, %v1051
        %v1116 = vadd.f32 %v923, %v1052
        %v1117 = vadd.f32 %v924, %v1053
        %v1118 = vadd.f32 %v925, %v1054
        %v1119 = vadd.f32 %v926, %v1055
        %v1120 = vadd.f32 %v927, %v1056
        %v1121 = vadd.f32 %v928, %v1057
        %v1122 = vadd.f32 %v929, %v1058
        %v1123 = vadd.f32 %v930, %v1059
        %v1124 = vadd.f32 %v931, %v1060
        %v1125 = vadd.f32 %v932, %v1061
        %v1126 = vadd.f32 %v933, %v1062
        %v1127 = vadd.f32 %v934, %v1063
        %v1128 = vadd.f32 %v935, %v1064
        %v1129 = vadd.f32 %v936, %v1065
        %v1130 = vadd.f32 %v937, %v1066
        %v1131 = vadd.f32 %v938, %v1067
        %v1132 = vadd.f32 %v939, %v1068
        %v1133 = vadd.f32 %v940, %v1069
        %v1134 = vadd.f32 %v941, %v1070
        %v1135 = vadd.f32 %v942, %v1071
        %v1136 = vadd.f32 %v943, %v1072
        %v1137 = vadd.f32 %v944, %v1073
        %v1138 = vadd.f32 %v945, %v1074
        %v1139 = vadd.f32 %v946, %v1075
        %v1140 = vadd.f32 %v947, %v1076
        %v1141 = vadd.f32 %v948, %v1077
        %v1142 = vadd.f32 %v949, %v1078
        %v1143 = vadd.f32 %v950, %v1079
        %v1144 = vadd.f32 %v951, %v1080
        %v1145 = vadd.f32 %v952, %v1081
        %v1146 = vadd.f32 %v953, %v1082
        %v1147 = vadd.f32 %v954, %v1083
        %v1148 = vadd.f32 %v955, %v1084
        %v1149 = vld [vmem:[%s762 + $0x2] sm:$0xff]
        %v1150 = vld [vmem:[%s762 + $0x12] sm:$0xff]
        %v1151 = vld [vmem:[%s762 + $0x22] sm:$0xff]
        %v1152 = vld [vmem:[%s762 + $0x32] sm:$0xff]
        %v1153 = vld [vmem:[%s762 + $0x42] sm:$0xff]
        %v1154 = vld [vmem:[%s762 + $0x52] sm:$0xff]
        %v1155 = vld [vmem:[%s762 + $0x62] sm:$0xff]
        %v1156 = vld [vmem:[%s762 + $0x72] sm:$0xff]
        %v1157 = vld [vmem:[%s762 + $0xa2] sm:$0xff]
        %v1158 = vld [vmem:[%s762 + $0xb2] sm:$0xff]
        %v1159 = vld [vmem:[%s762 + $0xc2] sm:$0xff]
        %v1160 = vld [vmem:[%s762 + $0xd2] sm:$0xff]
        %v1161 = vld [vmem:[%s762 + $0xe2] sm:$0xff]
        %v1162 = vld [vmem:[%s762 + $0xf2] sm:$0xff]
        %v1163 = vld [vmem:[%s762 + $0x102] sm:$0xff]
        %v1164 = vld [vmem:[%s762 + $0x112] sm:$0xff]
        %v1165 = vld [vmem:[%s762 + $0x142] sm:$0xff]
        %v1166 = vld [vmem:[%s762 + $0x152] sm:$0xff]
        %v1167 = vld [vmem:[%s762 + $0x162] sm:$0xff]
        %v1168 = vld [vmem:[%s762 + $0x172] sm:$0xff]
        %v1169 = vld [vmem:[%s762 + $0x182] sm:$0xff]
        %v1170 = vld [vmem:[%s762 + $0x192] sm:$0xff]
        %v1171 = vld [vmem:[%s762 + $0x1a2] sm:$0xff]
        %v1172 = vld [vmem:[%s762 + $0x1b2] sm:$0xff]
        %v1173 = vld [vmem:[%s762 + $0x1e2] sm:$0xff]
        %v1174 = vld [vmem:[%s762 + $0x1f2] sm:$0xff]
        %v1175 = vld [vmem:[%s762 + $0x202] sm:$0xff]
        %v1176 = vld [vmem:[%s762 + $0x212] sm:$0xff]
        %v1177 = vld [vmem:[%s762 + $0x222] sm:$0xff]
        %v1178 = vld [vmem:[%s762 + $0x232] sm:$0xff]
        %v1179 = vld [vmem:[%s762 + $0x242] sm:$0xff]
        %v1180 = vld [vmem:[%s762 + $0x252] sm:$0xff]
        %v1181 = vld [vmem:[%s762 + $0x282] sm:$0xff]
        %v1182 = vld [vmem:[%s762 + $0x292] sm:$0xff]
        %v1183 = vld [vmem:[%s762 + $0x2a2] sm:$0xff]
        %v1184 = vld [vmem:[%s762 + $0x2b2] sm:$0xff]
        %v1185 = vld [vmem:[%s762 + $0x2c2] sm:$0xff]
        %v1186 = vld [vmem:[%s762 + $0x2d2] sm:$0xff]
        %v1187 = vld [vmem:[%s762 + $0x2e2] sm:$0xff]
        %v1188 = vld [vmem:[%s762 + $0x2f2] sm:$0xff]
        %v1189 = vld [vmem:[%s762 + $0x322] sm:$0xff]
        %v1190 = vld [vmem:[%s762 + $0x332] sm:$0xff]
        %v1191 = vld [vmem:[%s762 + $0x342] sm:$0xff]
        %v1192 = vld [vmem:[%s762 + $0x352] sm:$0xff]
        %v1193 = vld [vmem:[%s762 + $0x362] sm:$0xff]
        %v1194 = vld [vmem:[%s762 + $0x372] sm:$0xff]
        %v1195 = vld [vmem:[%s762 + $0x382] sm:$0xff]
        %v1196 = vld [vmem:[%s762 + $0x392] sm:$0xff]
        %v1197 = vld [vmem:[%s762 + $0x3c2] sm:$0xff]
        %v1198 = vld [vmem:[%s762 + $0x3d2] sm:$0xff]
        %v1199 = vld [vmem:[%s762 + $0x3e2] sm:$0xff]
        %v1200 = vld [vmem:[%s762 + $0x3f2] sm:$0xff]
        %v1201 = vld [vmem:[%s762 + $0x402] sm:$0xff]
        %v1202 = vld [vmem:[%s762 + $0x412] sm:$0xff]
        %v1203 = vld [vmem:[%s762 + $0x422] sm:$0xff]
        %v1204 = vld [vmem:[%s762 + $0x432] sm:$0xff]
        %v1205 = vld [vmem:[%s762 + $0x462] sm:$0xff]
        %v1206 = vld [vmem:[%s762 + $0x472] sm:$0xff]
        %v1207 = vld [vmem:[%s762 + $0x482] sm:$0xff]
        %v1208 = vld [vmem:[%s762 + $0x492] sm:$0xff]
        %v1209 = vld [vmem:[%s762 + $0x4a2] sm:$0xff]
        %v1210 = vld [vmem:[%s762 + $0x4b2] sm:$0xff]
        %v1211 = vld [vmem:[%s762 + $0x4c2] sm:$0xff]
        %v1212 = vld [vmem:[%s762 + $0x4d2] sm:$0xff]
        %v1213 = vperm.slane %v175, 5
        %v1214 = vmul.f32 %v1149, %v1213
        %v1215 = vmul.f32 %v1150, %v1213
        %v1216 = vmul.f32 %v1151, %v1213
        %v1217 = vmul.f32 %v1152, %v1213
        %v1218 = vmul.f32 %v1153, %v1213
        %v1219 = vmul.f32 %v1154, %v1213
        %v1220 = vmul.f32 %v1155, %v1213
        %v1221 = vmul.f32 %v1156, %v1213
        %v1222 = vmul.f32 %v1157, %v1213
        %v1223 = vmul.f32 %v1158, %v1213
        %v1224 = vmul.f32 %v1159, %v1213
        %v1225 = vmul.f32 %v1160, %v1213
        %v1226 = vmul.f32 %v1161, %v1213
        %v1227 = vmul.f32 %v1162, %v1213
        %v1228 = vmul.f32 %v1163, %v1213
        %v1229 = vmul.f32 %v1164, %v1213
        %v1230 = vmul.f32 %v1165, %v1213
        %v1231 = vmul.f32 %v1166, %v1213
        %v1232 = vmul.f32 %v1167, %v1213
        %v1233 = vmul.f32 %v1168, %v1213
        %v1234 = vmul.f32 %v1169, %v1213
        %v1235 = vmul.f32 %v1170, %v1213
        %v1236 = vmul.f32 %v1171, %v1213
        %v1237 = vmul.f32 %v1172, %v1213
        %v1238 = vmul.f32 %v1173, %v1213
        %v1239 = vmul.f32 %v1174, %v1213
        %v1240 = vmul.f32 %v1175, %v1213
        %v1241 = vmul.f32 %v1176, %v1213
        %v1242 = vmul.f32 %v1177, %v1213
        %v1243 = vmul.f32 %v1178, %v1213
        %v1244 = vmul.f32 %v1179, %v1213
        %v1245 = vmul.f32 %v1180, %v1213
        %v1246 = vmul.f32 %v1181, %v1213
        %v1247 = vmul.f32 %v1182, %v1213
        %v1248 = vmul.f32 %v1183, %v1213
        %v1249 = vmul.f32 %v1184, %v1213
        %v1250 = vmul.f32 %v1185, %v1213
        %v1251 = vmul.f32 %v1186, %v1213
        %v1252 = vmul.f32 %v1187, %v1213
        %v1253 = vmul.f32 %v1188, %v1213
        %v1254 = vmul.f32 %v1189, %v1213
        %v1255 = vmul.f32 %v1190, %v1213
        %v1256 = vmul.f32 %v1191, %v1213
        %v1257 = vmul.f32 %v1192, %v1213
        %v1258 = vmul.f32 %v1193, %v1213
        %v1259 = vmul.f32 %v1194, %v1213
        %v1260 = vmul.f32 %v1195, %v1213
        %v1261 = vmul.f32 %v1196, %v1213
        %v1262 = vmul.f32 %v1197, %v1213
        %v1263 = vmul.f32 %v1198, %v1213
        %v1264 = vmul.f32 %v1199, %v1213
        %v1265 = vmul.f32 %v1200, %v1213
        %v1266 = vmul.f32 %v1201, %v1213
        %v1267 = vmul.f32 %v1202, %v1213
        %v1268 = vmul.f32 %v1203, %v1213
        %v1269 = vmul.f32 %v1204, %v1213
        %v1270 = vmul.f32 %v1205, %v1213
        %v1271 = vmul.f32 %v1206, %v1213
        %v1272 = vmul.f32 %v1207, %v1213
        %v1273 = vmul.f32 %v1208, %v1213
        %v1274 = vmul.f32 %v1209, %v1213
        %v1275 = vmul.f32 %v1210, %v1213
        %v1276 = vmul.f32 %v1211, %v1213
        %v1277 = vmul.f32 %v1212, %v1213
        %v1278 = vadd.f32 %v1085, %v1214
        %v1279 = vadd.f32 %v1086, %v1215
        %v1280 = vadd.f32 %v1087, %v1216
        %v1281 = vadd.f32 %v1088, %v1217
        %v1282 = vadd.f32 %v1089, %v1218
        %v1283 = vadd.f32 %v1090, %v1219
        %v1284 = vadd.f32 %v1091, %v1220
        %v1285 = vadd.f32 %v1092, %v1221
        %v1286 = vadd.f32 %v1093, %v1222
        %v1287 = vadd.f32 %v1094, %v1223
        %v1288 = vadd.f32 %v1095, %v1224
        %v1289 = vadd.f32 %v1096, %v1225
        %v1290 = vadd.f32 %v1097, %v1226
        %v1291 = vadd.f32 %v1098, %v1227
        %v1292 = vadd.f32 %v1099, %v1228
        %v1293 = vadd.f32 %v1100, %v1229
        %v1294 = vadd.f32 %v1101, %v1230
        %v1295 = vadd.f32 %v1102, %v1231
        %v1296 = vadd.f32 %v1103, %v1232
        %v1297 = vadd.f32 %v1104, %v1233
        %v1298 = vadd.f32 %v1105, %v1234
        %v1299 = vadd.f32 %v1106, %v1235
        %v1300 = vadd.f32 %v1107, %v1236
        %v1301 = vadd.f32 %v1108, %v1237
        %v1302 = vadd.f32 %v1109, %v1238
        %v1303 = vadd.f32 %v1110, %v1239
        %v1304 = vadd.f32 %v1111, %v1240
        %v1305 = vadd.f32 %v1112, %v1241
        %v1306 = vadd.f32 %v1113, %v1242
        %v1307 = vadd.f32 %v1114, %v1243
        %v1308 = vadd.f32 %v1115, %v1244
        %v1309 = vadd.f32 %v1116, %v1245
        %v1310 = vadd.f32 %v1117, %v1246
        %v1311 = vadd.f32 %v1118, %v1247
        %v1312 = vadd.f32 %v1119, %v1248
        %v1313 = vadd.f32 %v1120, %v1249
        %v1314 = vadd.f32 %v1121, %v1250
        %v1315 = vadd.f32 %v1122, %v1251
        %v1316 = vadd.f32 %v1123, %v1252
        %v1317 = vadd.f32 %v1124, %v1253
        %v1318 = vadd.f32 %v1125, %v1254
        %v1319 = vadd.f32 %v1126, %v1255
        %v1320 = vadd.f32 %v1127, %v1256
        %v1321 = vadd.f32 %v1128, %v1257
        %v1322 = vadd.f32 %v1129, %v1258
        %v1323 = vadd.f32 %v1130, %v1259
        %v1324 = vadd.f32 %v1131, %v1260
        %v1325 = vadd.f32 %v1132, %v1261
        %v1326 = vadd.f32 %v1133, %v1262
        %v1327 = vadd.f32 %v1134, %v1263
        %v1328 = vadd.f32 %v1135, %v1264
        %v1329 = vadd.f32 %v1136, %v1265
        %v1330 = vadd.f32 %v1137, %v1266
        %v1331 = vadd.f32 %v1138, %v1267
        %v1332 = vadd.f32 %v1139, %v1268
        %v1333 = vadd.f32 %v1140, %v1269
        %v1334 = vadd.f32 %v1141, %v1270
        %v1335 = vadd.f32 %v1142, %v1271
        %v1336 = vadd.f32 %v1143, %v1272
        %v1337 = vadd.f32 %v1144, %v1273
        %v1338 = vadd.f32 %v1145, %v1274
        %v1339 = vadd.f32 %v1146, %v1275
        %v1340 = vadd.f32 %v1147, %v1276
        %v1341 = vadd.f32 %v1148, %v1277
        %s1342 = scalar_lea.vmem %s172, 32
        %v1343 = vld [vmem:[%s1342] sm:$0xff]
        %v1344 = vld [vmem:[%s1342 + $0x10] sm:$0xff]
        %v1345 = vld [vmem:[%s1342 + $0x20] sm:$0xff]
        %v1346 = vld [vmem:[%s1342 + $0x30] sm:$0xff]
        %v1347 = vld [vmem:[%s1342 + $0x40] sm:$0xff]
        %v1348 = vld [vmem:[%s1342 + $0x50] sm:$0xff]
        %v1349 = vld [vmem:[%s1342 + $0x60] sm:$0xff]
        %v1350 = vld [vmem:[%s1342 + $0x70] sm:$0xff]
        %v1351 = vld [vmem:[%s1342 + $0xa0] sm:$0xff]
        %v1352 = vld [vmem:[%s1342 + $0xb0] sm:$0xff]
        %v1353 = vld [vmem:[%s1342 + $0xc0] sm:$0xff]
        %v1354 = vld [vmem:[%s1342 + $0xd0] sm:$0xff]
        %v1355 = vld [vmem:[%s1342 + $0xe0] sm:$0xff]
        %v1356 = vld [vmem:[%s1342 + $0xf0] sm:$0xff]
        %v1357 = vld [vmem:[%s1342 + $0x100] sm:$0xff]
        %v1358 = vld [vmem:[%s1342 + $0x110] sm:$0xff]
        %v1359 = vld [vmem:[%s1342 + $0x140] sm:$0xff]
        %v1360 = vld [vmem:[%s1342 + $0x150] sm:$0xff]
        %v1361 = vld [vmem:[%s1342 + $0x160] sm:$0xff]
        %v1362 = vld [vmem:[%s1342 + $0x170] sm:$0xff]
        %v1363 = vld [vmem:[%s1342 + $0x180] sm:$0xff]
        %v1364 = vld [vmem:[%s1342 + $0x190] sm:$0xff]
        %v1365 = vld [vmem:[%s1342 + $0x1a0] sm:$0xff]
        %v1366 = vld [vmem:[%s1342 + $0x1b0] sm:$0xff]
        %v1367 = vld [vmem:[%s1342 + $0x1e0] sm:$0xff]
        %v1368 = vld [vmem:[%s1342 + $0x1f0] sm:$0xff]
        %v1369 = vld [vmem:[%s1342 + $0x200] sm:$0xff]
        %v1370 = vld [vmem:[%s1342 + $0x210] sm:$0xff]
        %v1371 = vld [vmem:[%s1342 + $0x220] sm:$0xff]
        %v1372 = vld [vmem:[%s1342 + $0x230] sm:$0xff]
        %v1373 = vld [vmem:[%s1342 + $0x240] sm:$0xff]
        %v1374 = vld [vmem:[%s1342 + $0x250] sm:$0xff]
        %v1375 = vld [vmem:[%s1342 + $0x280] sm:$0xff]
        %v1376 = vld [vmem:[%s1342 + $0x290] sm:$0xff]
        %v1377 = vld [vmem:[%s1342 + $0x2a0] sm:$0xff]
        %v1378 = vld [vmem:[%s1342 + $0x2b0] sm:$0xff]
        %v1379 = vld [vmem:[%s1342 + $0x2c0] sm:$0xff]
        %v1380 = vld [vmem:[%s1342 + $0x2d0] sm:$0xff]
        %v1381 = vld [vmem:[%s1342 + $0x2e0] sm:$0xff]
        %v1382 = vld [vmem:[%s1342 + $0x2f0] sm:$0xff]
        %v1383 = vld [vmem:[%s1342 + $0x320] sm:$0xff]
        %v1384 = vld [vmem:[%s1342 + $0x330] sm:$0xff]
        %v1385 = vld [vmem:[%s1342 + $0x340] sm:$0xff]
        %v1386 = vld [vmem:[%s1342 + $0x350] sm:$0xff]
        %v1387 = vld [vmem:[%s1342 + $0x360] sm:$0xff]
        %v1388 = vld [vmem:[%s1342 + $0x370] sm:$0xff]
        %v1389 = vld [vmem:[%s1342 + $0x380] sm:$0xff]
        %v1390 = vld [vmem:[%s1342 + $0x390] sm:$0xff]
        %v1391 = vld [vmem:[%s1342 + $0x3c0] sm:$0xff]
        %v1392 = vld [vmem:[%s1342 + $0x3d0] sm:$0xff]
        %v1393 = vld [vmem:[%s1342 + $0x3e0] sm:$0xff]
        %v1394 = vld [vmem:[%s1342 + $0x3f0] sm:$0xff]
        %v1395 = vld [vmem:[%s1342 + $0x400] sm:$0xff]
        %v1396 = vld [vmem:[%s1342 + $0x410] sm:$0xff]
        %v1397 = vld [vmem:[%s1342 + $0x420] sm:$0xff]
        %v1398 = vld [vmem:[%s1342 + $0x430] sm:$0xff]
        %v1399 = vld [vmem:[%s1342 + $0x460] sm:$0xff]
        %v1400 = vld [vmem:[%s1342 + $0x470] sm:$0xff]
        %v1401 = vld [vmem:[%s1342 + $0x480] sm:$0xff]
        %v1402 = vld [vmem:[%s1342 + $0x490] sm:$0xff]
        %v1403 = vld [vmem:[%s1342 + $0x4a0] sm:$0xff]
        %v1404 = vld [vmem:[%s1342 + $0x4b0] sm:$0xff]
        %v1405 = vld [vmem:[%s1342 + $0x4c0] sm:$0xff]
        %v1406 = vld [vmem:[%s1342 + $0x4d0] sm:$0xff]
        %v1407 = vperm.slane %v175, 6
        %v1408 = vmul.f32 %v1343, %v1407
        %v1409 = vmul.f32 %v1344, %v1407
        %v1410 = vmul.f32 %v1345, %v1407
        %v1411 = vmul.f32 %v1346, %v1407
        %v1412 = vmul.f32 %v1347, %v1407
        %v1413 = vmul.f32 %v1348, %v1407
        %v1414 = vmul.f32 %v1349, %v1407
        %v1415 = vmul.f32 %v1350, %v1407
        %v1416 = vmul.f32 %v1351, %v1407
        %v1417 = vmul.f32 %v1352, %v1407
        %v1418 = vmul.f32 %v1353, %v1407
        %v1419 = vmul.f32 %v1354, %v1407
        %v1420 = vmul.f32 %v1355, %v1407
        %v1421 = vmul.f32 %v1356, %v1407
        %v1422 = vmul.f32 %v1357, %v1407
        %v1423 = vmul.f32 %v1358, %v1407
        %v1424 = vmul.f32 %v1359, %v1407
        %v1425 = vmul.f32 %v1360, %v1407
        %v1426 = vmul.f32 %v1361, %v1407
        %v1427 = vmul.f32 %v1362, %v1407
        %v1428 = vmul.f32 %v1363, %v1407
        %v1429 = vmul.f32 %v1364, %v1407
        %v1430 = vmul.f32 %v1365, %v1407
        %v1431 = vmul.f32 %v1366, %v1407
        %v1432 = vmul.f32 %v1367, %v1407
        %v1433 = vmul.f32 %v1368, %v1407
        %v1434 = vmul.f32 %v1369, %v1407
        %v1435 = vmul.f32 %v1370, %v1407
        %v1436 = vmul.f32 %v1371, %v1407
        %v1437 = vmul.f32 %v1372, %v1407
        %v1438 = vmul.f32 %v1373, %v1407
        %v1439 = vmul.f32 %v1374, %v1407
        %v1440 = vmul.f32 %v1375, %v1407
        %v1441 = vmul.f32 %v1376, %v1407
        %v1442 = vmul.f32 %v1377, %v1407
        %v1443 = vmul.f32 %v1378, %v1407
        %v1444 = vmul.f32 %v1379, %v1407
        %v1445 = vmul.f32 %v1380, %v1407
        %v1446 = vmul.f32 %v1381, %v1407
        %v1447 = vmul.f32 %v1382, %v1407
        %v1448 = vmul.f32 %v1383, %v1407
        %v1449 = vmul.f32 %v1384, %v1407
        %v1450 = vmul.f32 %v1385, %v1407
        %v1451 = vmul.f32 %v1386, %v1407
        %v1452 = vmul.f32 %v1387, %v1407
        %v1453 = vmul.f32 %v1388, %v1407
        %v1454 = vmul.f32 %v1389, %v1407
        %v1455 = vmul.f32 %v1390, %v1407
        %v1456 = vmul.f32 %v1391, %v1407
        %v1457 = vmul.f32 %v1392, %v1407
        %v1458 = vmul.f32 %v1393, %v1407
        %v1459 = vmul.f32 %v1394, %v1407
        %v1460 = vmul.f32 %v1395, %v1407
        %v1461 = vmul.f32 %v1396, %v1407
        %v1462 = vmul.f32 %v1397, %v1407
        %v1463 = vmul.f32 %v1398, %v1407
        %v1464 = vmul.f32 %v1399, %v1407
        %v1465 = vmul.f32 %v1400, %v1407
        %v1466 = vmul.f32 %v1401, %v1407
        %v1467 = vmul.f32 %v1402, %v1407
        %v1468 = vmul.f32 %v1403, %v1407
        %v1469 = vmul.f32 %v1404, %v1407
        %v1470 = vmul.f32 %v1405, %v1407
        %v1471 = vmul.f32 %v1406, %v1407
        %v1472 = vadd.f32 %v1278, %v1408
        %v1473 = vadd.f32 %v1279, %v1409
        %v1474 = vadd.f32 %v1280, %v1410
        %v1475 = vadd.f32 %v1281, %v1411
        %v1476 = vadd.f32 %v1282, %v1412
        %v1477 = vadd.f32 %v1283, %v1413
        %v1478 = vadd.f32 %v1284, %v1414
        %v1479 = vadd.f32 %v1285, %v1415
        %v1480 = vadd.f32 %v1286, %v1416
        %v1481 = vadd.f32 %v1287, %v1417
        %v1482 = vadd.f32 %v1288, %v1418
        %v1483 = vadd.f32 %v1289, %v1419
        %v1484 = vadd.f32 %v1290, %v1420
        %v1485 = vadd.f32 %v1291, %v1421
        %v1486 = vadd.f32 %v1292, %v1422
        %v1487 = vadd.f32 %v1293, %v1423
        %v1488 = vadd.f32 %v1294, %v1424
        %v1489 = vadd.f32 %v1295, %v1425
        %v1490 = vadd.f32 %v1296, %v1426
        %v1491 = vadd.f32 %v1297, %v1427
        %v1492 = vadd.f32 %v1298, %v1428
        %v1493 = vadd.f32 %v1299, %v1429
        %v1494 = vadd.f32 %v1300, %v1430
        %v1495 = vadd.f32 %v1301, %v1431
        %v1496 = vadd.f32 %v1302, %v1432
        %v1497 = vadd.f32 %v1303, %v1433
        %v1498 = vadd.f32 %v1304, %v1434
        %v1499 = vadd.f32 %v1305, %v1435
        %v1500 = vadd.f32 %v1306, %v1436
        %v1501 = vadd.f32 %v1307, %v1437
        %v1502 = vadd.f32 %v1308, %v1438
        %v1503 = vadd.f32 %v1309, %v1439
        %v1504 = vadd.f32 %v1310, %v1440
        %v1505 = vadd.f32 %v1311, %v1441
        %v1506 = vadd.f32 %v1312, %v1442
        %v1507 = vadd.f32 %v1313, %v1443
        %v1508 = vadd.f32 %v1314, %v1444
        %v1509 = vadd.f32 %v1315, %v1445
        %v1510 = vadd.f32 %v1316, %v1446
        %v1511 = vadd.f32 %v1317, %v1447
        %v1512 = vadd.f32 %v1318, %v1448
        %v1513 = vadd.f32 %v1319, %v1449
        %v1514 = vadd.f32 %v1320, %v1450
        %v1515 = vadd.f32 %v1321, %v1451
        %v1516 = vadd.f32 %v1322, %v1452
        %v1517 = vadd.f32 %v1323, %v1453
        %v1518 = vadd.f32 %v1324, %v1454
        %v1519 = vadd.f32 %v1325, %v1455
        %v1520 = vadd.f32 %v1326, %v1456
        %v1521 = vadd.f32 %v1327, %v1457
        %v1522 = vadd.f32 %v1328, %v1458
        %v1523 = vadd.f32 %v1329, %v1459
        %v1524 = vadd.f32 %v1330, %v1460
        %v1525 = vadd.f32 %v1331, %v1461
        %v1526 = vadd.f32 %v1332, %v1462
        %v1527 = vadd.f32 %v1333, %v1463
        %v1528 = vadd.f32 %v1334, %v1464
        %v1529 = vadd.f32 %v1335, %v1465
        %v1530 = vadd.f32 %v1336, %v1466
        %v1531 = vadd.f32 %v1337, %v1467
        %v1532 = vadd.f32 %v1338, %v1468
        %v1533 = vadd.f32 %v1339, %v1469
        %v1534 = vadd.f32 %v1340, %v1470
        %v1535 = vadd.f32 %v1341, %v1471
        %v1536 = vld [vmem:[%s1342 + $0x1] sm:$0xff]
        %v1537 = vld [vmem:[%s1342 + $0x11] sm:$0xff]
        %v1538 = vld [vmem:[%s1342 + $0x21] sm:$0xff]
        %v1539 = vld [vmem:[%s1342 + $0x31] sm:$0xff]
        %v1540 = vld [vmem:[%s1342 + $0x41] sm:$0xff]
        %v1541 = vld [vmem:[%s1342 + $0x51] sm:$0xff]
        %v1542 = vld [vmem:[%s1342 + $0x61] sm:$0xff]
        %v1543 = vld [vmem:[%s1342 + $0x71] sm:$0xff]
        %v1544 = vld [vmem:[%s1342 + $0xa1] sm:$0xff]
        %v1545 = vld [vmem:[%s1342 + $0xb1] sm:$0xff]
        %v1546 = vld [vmem:[%s1342 + $0xc1] sm:$0xff]
        %v1547 = vld [vmem:[%s1342 + $0xd1] sm:$0xff]
        %v1548 = vld [vmem:[%s1342 + $0xe1] sm:$0xff]
        %v1549 = vld [vmem:[%s1342 + $0xf1] sm:$0xff]
        %v1550 = vld [vmem:[%s1342 + $0x101] sm:$0xff]
        %v1551 = vld [vmem:[%s1342 + $0x111] sm:$0xff]
        %v1552 = vld [vmem:[%s1342 + $0x141] sm:$0xff]
        %v1553 = vld [vmem:[%s1342 + $0x151] sm:$0xff]
        %v1554 = vld [vmem:[%s1342 + $0x161] sm:$0xff]
        %v1555 = vld [vmem:[%s1342 + $0x171] sm:$0xff]
        %v1556 = vld [vmem:[%s1342 + $0x181] sm:$0xff]
        %v1557 = vld [vmem:[%s1342 + $0x191] sm:$0xff]
        %v1558 = vld [vmem:[%s1342 + $0x1a1] sm:$0xff]
        %v1559 = vld [vmem:[%s1342 + $0x1b1] sm:$0xff]
        %v1560 = vld [vmem:[%s1342 + $0x1e1] sm:$0xff]
        %v1561 = vld [vmem:[%s1342 + $0x1f1] sm:$0xff]
        %v1562 = vld [vmem:[%s1342 + $0x201] sm:$0xff]
        %v1563 = vld [vmem:[%s1342 + $0x211] sm:$0xff]
        %v1564 = vld [vmem:[%s1342 + $0x221] sm:$0xff]
        %v1565 = vld [vmem:[%s1342 + $0x231] sm:$0xff]
        %v1566 = vld [vmem:[%s1342 + $0x241] sm:$0xff]
        %v1567 = vld [vmem:[%s1342 + $0x251] sm:$0xff]
        %v1568 = vld [vmem:[%s1342 + $0x281] sm:$0xff]
        %v1569 = vld [vmem:[%s1342 + $0x291] sm:$0xff]
        %v1570 = vld [vmem:[%s1342 + $0x2a1] sm:$0xff]
        %v1571 = vld [vmem:[%s1342 + $0x2b1] sm:$0xff]
        %v1572 = vld [vmem:[%s1342 + $0x2c1] sm:$0xff]
        %v1573 = vld [vmem:[%s1342 + $0x2d1] sm:$0xff]
        %v1574 = vld [vmem:[%s1342 + $0x2e1] sm:$0xff]
        %v1575 = vld [vmem:[%s1342 + $0x2f1] sm:$0xff]
        %v1576 = vld [vmem:[%s1342 + $0x321] sm:$0xff]
        %v1577 = vld [vmem:[%s1342 + $0x331] sm:$0xff]
        %v1578 = vld [vmem:[%s1342 + $0x341] sm:$0xff]
        %v1579 = vld [vmem:[%s1342 + $0x351] sm:$0xff]
        %v1580 = vld [vmem:[%s1342 + $0x361] sm:$0xff]
        %v1581 = vld [vmem:[%s1342 + $0x371] sm:$0xff]
        %v1582 = vld [vmem:[%s1342 + $0x381] sm:$0xff]
        %v1583 = vld [vmem:[%s1342 + $0x391] sm:$0xff]
        %v1584 = vld [vmem:[%s1342 + $0x3c1] sm:$0xff]
        %v1585 = vld [vmem:[%s1342 + $0x3d1] sm:$0xff]
        %v1586 = vld [vmem:[%s1342 + $0x3e1] sm:$0xff]
        %v1587 = vld [vmem:[%s1342 + $0x3f1] sm:$0xff]
        %v1588 = vld [vmem:[%s1342 + $0x401] sm:$0xff]
        %v1589 = vld [vmem:[%s1342 + $0x411] sm:$0xff]
        %v1590 = vld [vmem:[%s1342 + $0x421] sm:$0xff]
        %v1591 = vld [vmem:[%s1342 + $0x431] sm:$0xff]
        %v1592 = vld [vmem:[%s1342 + $0x461] sm:$0xff]
        %v1593 = vld [vmem:[%s1342 + $0x471] sm:$0xff]
        %v1594 = vld [vmem:[%s1342 + $0x481] sm:$0xff]
        %v1595 = vld [vmem:[%s1342 + $0x491] sm:$0xff]
        %v1596 = vld [vmem:[%s1342 + $0x4a1] sm:$0xff]
        %v1597 = vld [vmem:[%s1342 + $0x4b1] sm:$0xff]
        %v1598 = vld [vmem:[%s1342 + $0x4c1] sm:$0xff]
        %v1599 = vld [vmem:[%s1342 + $0x4d1] sm:$0xff]
        %v1600 = vperm.slane %v175, 7
        %v1601 = vmul.f32 %v1536, %v1600
        %v1602 = vmul.f32 %v1537, %v1600
        %v1603 = vmul.f32 %v1538, %v1600
        %v1604 = vmul.f32 %v1539, %v1600
        %v1605 = vmul.f32 %v1540, %v1600
        %v1606 = vmul.f32 %v1541, %v1600
        %v1607 = vmul.f32 %v1542, %v1600
        %v1608 = vmul.f32 %v1543, %v1600
        %v1609 = vmul.f32 %v1544, %v1600
        %v1610 = vmul.f32 %v1545, %v1600
        %v1611 = vmul.f32 %v1546, %v1600
        %v1612 = vmul.f32 %v1547, %v1600
        %v1613 = vmul.f32 %v1548, %v1600
        %v1614 = vmul.f32 %v1549, %v1600
        %v1615 = vmul.f32 %v1550, %v1600
        %v1616 = vmul.f32 %v1551, %v1600
        %v1617 = vmul.f32 %v1552, %v1600
        %v1618 = vmul.f32 %v1553, %v1600
        %v1619 = vmul.f32 %v1554, %v1600
        %v1620 = vmul.f32 %v1555, %v1600
        %v1621 = vmul.f32 %v1556, %v1600
        %v1622 = vmul.f32 %v1557, %v1600
        %v1623 = vmul.f32 %v1558, %v1600
        %v1624 = vmul.f32 %v1559, %v1600
        %v1625 = vmul.f32 %v1560, %v1600
        %v1626 = vmul.f32 %v1561, %v1600
        %v1627 = vmul.f32 %v1562, %v1600
        %v1628 = vmul.f32 %v1563, %v1600
        %v1629 = vmul.f32 %v1564, %v1600
        %v1630 = vmul.f32 %v1565, %v1600
        %v1631 = vmul.f32 %v1566, %v1600
        %v1632 = vmul.f32 %v1567, %v1600
        %v1633 = vmul.f32 %v1568, %v1600
        %v1634 = vmul.f32 %v1569, %v1600
        %v1635 = vmul.f32 %v1570, %v1600
        %v1636 = vmul.f32 %v1571, %v1600
        %v1637 = vmul.f32 %v1572, %v1600
        %v1638 = vmul.f32 %v1573, %v1600
        %v1639 = vmul.f32 %v1574, %v1600
        %v1640 = vmul.f32 %v1575, %v1600
        %v1641 = vmul.f32 %v1576, %v1600
        %v1642 = vmul.f32 %v1577, %v1600
        %v1643 = vmul.f32 %v1578, %v1600
        %v1644 = vmul.f32 %v1579, %v1600
        %v1645 = vmul.f32 %v1580, %v1600
        %v1646 = vmul.f32 %v1581, %v1600
        %v1647 = vmul.f32 %v1582, %v1600
        %v1648 = vmul.f32 %v1583, %v1600
        %v1649 = vmul.f32 %v1584, %v1600
        %v1650 = vmul.f32 %v1585, %v1600
        %v1651 = vmul.f32 %v1586, %v1600
        %v1652 = vmul.f32 %v1587, %v1600
        %v1653 = vmul.f32 %v1588, %v1600
        %v1654 = vmul.f32 %v1589, %v1600
        %v1655 = vmul.f32 %v1590, %v1600
        %v1656 = vmul.f32 %v1591, %v1600
        %v1657 = vmul.f32 %v1592, %v1600
        %v1658 = vmul.f32 %v1593, %v1600
        %v1659 = vmul.f32 %v1594, %v1600
        %v1660 = vmul.f32 %v1595, %v1600
        %v1661 = vmul.f32 %v1596, %v1600
        %v1662 = vmul.f32 %v1597, %v1600
        %v1663 = vmul.f32 %v1598, %v1600
        %v1664 = vmul.f32 %v1599, %v1600
        %v1665 = vadd.f32 %v1472, %v1601
        %v1666 = vadd.f32 %v1473, %v1602
        %v1667 = vadd.f32 %v1474, %v1603
        %v1668 = vadd.f32 %v1475, %v1604
        %v1669 = vadd.f32 %v1476, %v1605
        %v1670 = vadd.f32 %v1477, %v1606
        %v1671 = vadd.f32 %v1478, %v1607
        %v1672 = vadd.f32 %v1479, %v1608
        %v1673 = vadd.f32 %v1480, %v1609
        %v1674 = vadd.f32 %v1481, %v1610
        %v1675 = vadd.f32 %v1482, %v1611
        %v1676 = vadd.f32 %v1483, %v1612
        %v1677 = vadd.f32 %v1484, %v1613
        %v1678 = vadd.f32 %v1485, %v1614
        %v1679 = vadd.f32 %v1486, %v1615
        %v1680 = vadd.f32 %v1487, %v1616
        %v1681 = vadd.f32 %v1488, %v1617
        %v1682 = vadd.f32 %v1489, %v1618
        %v1683 = vadd.f32 %v1490, %v1619
        %v1684 = vadd.f32 %v1491, %v1620
        %v1685 = vadd.f32 %v1492, %v1621
        %v1686 = vadd.f32 %v1493, %v1622
        %v1687 = vadd.f32 %v1494, %v1623
        %v1688 = vadd.f32 %v1495, %v1624
        %v1689 = vadd.f32 %v1496, %v1625
        %v1690 = vadd.f32 %v1497, %v1626
        %v1691 = vadd.f32 %v1498, %v1627
        %v1692 = vadd.f32 %v1499, %v1628
        %v1693 = vadd.f32 %v1500, %v1629
        %v1694 = vadd.f32 %v1501, %v1630
        %v1695 = vadd.f32 %v1502, %v1631
        %v1696 = vadd.f32 %v1503, %v1632
        %v1697 = vadd.f32 %v1504, %v1633
        %v1698 = vadd.f32 %v1505, %v1634
        %v1699 = vadd.f32 %v1506, %v1635
        %v1700 = vadd.f32 %v1507, %v1636
        %v1701 = vadd.f32 %v1508, %v1637
        %v1702 = vadd.f32 %v1509, %v1638
        %v1703 = vadd.f32 %v1510, %v1639
        %v1704 = vadd.f32 %v1511, %v1640
        %v1705 = vadd.f32 %v1512, %v1641
        %v1706 = vadd.f32 %v1513, %v1642
        %v1707 = vadd.f32 %v1514, %v1643
        %v1708 = vadd.f32 %v1515, %v1644
        %v1709 = vadd.f32 %v1516, %v1645
        %v1710 = vadd.f32 %v1517, %v1646
        %v1711 = vadd.f32 %v1518, %v1647
        %v1712 = vadd.f32 %v1519, %v1648
        %v1713 = vadd.f32 %v1520, %v1649
        %v1714 = vadd.f32 %v1521, %v1650
        %v1715 = vadd.f32 %v1522, %v1651
        %v1716 = vadd.f32 %v1523, %v1652
        %v1717 = vadd.f32 %v1524, %v1653
        %v1718 = vadd.f32 %v1525, %v1654
        %v1719 = vadd.f32 %v1526, %v1655
        %v1720 = vadd.f32 %v1527, %v1656
        %v1721 = vadd.f32 %v1528, %v1657
        %v1722 = vadd.f32 %v1529, %v1658
        %v1723 = vadd.f32 %v1530, %v1659
        %v1724 = vadd.f32 %v1531, %v1660
        %v1725 = vadd.f32 %v1532, %v1661
        %v1726 = vadd.f32 %v1533, %v1662
        %v1727 = vadd.f32 %v1534, %v1663
        %v1728 = vadd.f32 %v1535, %v1664
        %v1729 = vld [vmem:[%s1342 + $0x2] sm:$0xff]
        %v1730 = vld [vmem:[%s1342 + $0x12] sm:$0xff]
        %v1731 = vld [vmem:[%s1342 + $0x22] sm:$0xff]
        %v1732 = vld [vmem:[%s1342 + $0x32] sm:$0xff]
        %v1733 = vld [vmem:[%s1342 + $0x42] sm:$0xff]
        %v1734 = vld [vmem:[%s1342 + $0x52] sm:$0xff]
        %v1735 = vld [vmem:[%s1342 + $0x62] sm:$0xff]
        %v1736 = vld [vmem:[%s1342 + $0x72] sm:$0xff]
        %v1737 = vld [vmem:[%s1342 + $0xa2] sm:$0xff]
        %v1738 = vld [vmem:[%s1342 + $0xb2] sm:$0xff]
        %v1739 = vld [vmem:[%s1342 + $0xc2] sm:$0xff]
        %v1740 = vld [vmem:[%s1342 + $0xd2] sm:$0xff]
        %v1741 = vld [vmem:[%s1342 + $0xe2] sm:$0xff]
        %v1742 = vld [vmem:[%s1342 + $0xf2] sm:$0xff]
        %v1743 = vld [vmem:[%s1342 + $0x102] sm:$0xff]
        %v1744 = vld [vmem:[%s1342 + $0x112] sm:$0xff]
        %v1745 = vld [vmem:[%s1342 + $0x142] sm:$0xff]
        %v1746 = vld [vmem:[%s1342 + $0x152] sm:$0xff]
        %v1747 = vld [vmem:[%s1342 + $0x162] sm:$0xff]
        %v1748 = vld [vmem:[%s1342 + $0x172] sm:$0xff]
        %v1749 = vld [vmem:[%s1342 + $0x182] sm:$0xff]
        %v1750 = vld [vmem:[%s1342 + $0x192] sm:$0xff]
        %v1751 = vld [vmem:[%s1342 + $0x1a2] sm:$0xff]
        %v1752 = vld [vmem:[%s1342 + $0x1b2] sm:$0xff]
        %v1753 = vld [vmem:[%s1342 + $0x1e2] sm:$0xff]
        %v1754 = vld [vmem:[%s1342 + $0x1f2] sm:$0xff]
        %v1755 = vld [vmem:[%s1342 + $0x202] sm:$0xff]
        %v1756 = vld [vmem:[%s1342 + $0x212] sm:$0xff]
        %v1757 = vld [vmem:[%s1342 + $0x222] sm:$0xff]
        %v1758 = vld [vmem:[%s1342 + $0x232] sm:$0xff]
        %v1759 = vld [vmem:[%s1342 + $0x242] sm:$0xff]
        %v1760 = vld [vmem:[%s1342 + $0x252] sm:$0xff]
        %v1761 = vld [vmem:[%s1342 + $0x282] sm:$0xff]
        %v1762 = vld [vmem:[%s1342 + $0x292] sm:$0xff]
        %v1763 = vld [vmem:[%s1342 + $0x2a2] sm:$0xff]
        %v1764 = vld [vmem:[%s1342 + $0x2b2] sm:$0xff]
        %v1765 = vld [vmem:[%s1342 + $0x2c2] sm:$0xff]
        %v1766 = vld [vmem:[%s1342 + $0x2d2] sm:$0xff]
        %v1767 = vld [vmem:[%s1342 + $0x2e2] sm:$0xff]
        %v1768 = vld [vmem:[%s1342 + $0x2f2] sm:$0xff]
        %v1769 = vld [vmem:[%s1342 + $0x322] sm:$0xff]
        %v1770 = vld [vmem:[%s1342 + $0x332] sm:$0xff]
        %v1771 = vld [vmem:[%s1342 + $0x342] sm:$0xff]
        %v1772 = vld [vmem:[%s1342 + $0x352] sm:$0xff]
        %v1773 = vld [vmem:[%s1342 + $0x362] sm:$0xff]
        %v1774 = vld [vmem:[%s1342 + $0x372] sm:$0xff]
        %v1775 = vld [vmem:[%s1342 + $0x382] sm:$0xff]
        %v1776 = vld [vmem:[%s1342 + $0x392] sm:$0xff]
        %v1777 = vld [vmem:[%s1342 + $0x3c2] sm:$0xff]
        %v1778 = vld [vmem:[%s1342 + $0x3d2] sm:$0xff]
        %v1779 = vld [vmem:[%s1342 + $0x3e2] sm:$0xff]
        %v1780 = vld [vmem:[%s1342 + $0x3f2] sm:$0xff]
        %v1781 = vld [vmem:[%s1342 + $0x402] sm:$0xff]
        %v1782 = vld [vmem:[%s1342 + $0x412] sm:$0xff]
        %v1783 = vld [vmem:[%s1342 + $0x422] sm:$0xff]
        %v1784 = vld [vmem:[%s1342 + $0x432] sm:$0xff]
        %v1785 = vld [vmem:[%s1342 + $0x462] sm:$0xff]
        %v1786 = vld [vmem:[%s1342 + $0x472] sm:$0xff]
        %v1787 = vld [vmem:[%s1342 + $0x482] sm:$0xff]
        %v1788 = vld [vmem:[%s1342 + $0x492] sm:$0xff]
        %v1789 = vld [vmem:[%s1342 + $0x4a2] sm:$0xff]
        %v1790 = vld [vmem:[%s1342 + $0x4b2] sm:$0xff]
        %v1791 = vld [vmem:[%s1342 + $0x4c2] sm:$0xff]
        %v1792 = vld [vmem:[%s1342 + $0x4d2] sm:$0xff]
        %v1793 = vperm.slane %v176, 0
        %v1794 = vmul.f32 %v1729, %v1793
        %v1795 = vmul.f32 %v1730, %v1793
        %v1796 = vmul.f32 %v1731, %v1793
        %v1797 = vmul.f32 %v1732, %v1793
        %v1798 = vmul.f32 %v1733, %v1793
        %v1799 = vmul.f32 %v1734, %v1793
        %v1800 = vmul.f32 %v1735, %v1793
        %v1801 = vmul.f32 %v1736, %v1793
        %v1802 = vmul.f32 %v1737, %v1793
        %v1803 = vmul.f32 %v1738, %v1793
        %v1804 = vmul.f32 %v1739, %v1793
        %v1805 = vmul.f32 %v1740, %v1793
        %v1806 = vmul.f32 %v1741, %v1793
        %v1807 = vmul.f32 %v1742, %v1793
        %v1808 = vmul.f32 %v1743, %v1793
        %v1809 = vmul.f32 %v1744, %v1793
        %v1810 = vmul.f32 %v1745, %v1793
        %v1811 = vmul.f32 %v1746, %v1793
        %v1812 = vmul.f32 %v1747, %v1793
        %v1813 = vmul.f32 %v1748, %v1793
        %v1814 = vmul.f32 %v1749, %v1793
        %v1815 = vmul.f32 %v1750, %v1793
        %v1816 = vmul.f32 %v1751, %v1793
        %v1817 = vmul.f32 %v1752, %v1793
        %v1818 = vmul.f32 %v1753, %v1793
        %v1819 = vmul.f32 %v1754, %v1793
        %v1820 = vmul.f32 %v1755, %v1793
        %v1821 = vmul.f32 %v1756, %v1793
        %v1822 = vmul.f32 %v1757, %v1793
        %v1823 = vmul.f32 %v1758, %v1793
        %v1824 = vmul.f32 %v1759, %v1793
        %v1825 = vmul.f32 %v1760, %v1793
        %v1826 = vmul.f32 %v1761, %v1793
        %v1827 = vmul.f32 %v1762, %v1793
        %v1828 = vmul.f32 %v1763, %v1793
        %v1829 = vmul.f32 %v1764, %v1793
        %v1830 = vmul.f32 %v1765, %v1793
        %v1831 = vmul.f32 %v1766, %v1793
        %v1832 = vmul.f32 %v1767, %v1793
        %v1833 = vmul.f32 %v1768, %v1793
        %v1834 = vmul.f32 %v1769, %v1793
        %v1835 = vmul.f32 %v1770, %v1793
        %v1836 = vmul.f32 %v1771, %v1793
        %v1837 = vmul.f32 %v1772, %v1793
        %v1838 = vmul.f32 %v1773, %v1793
        %v1839 = vmul.f32 %v1774, %v1793
        %v1840 = vmul.f32 %v1775, %v1793
        %v1841 = vmul.f32 %v1776, %v1793
        %v1842 = vmul.f32 %v1777, %v1793
        %v1843 = vmul.f32 %v1778, %v1793
        %v1844 = vmul.f32 %v1779, %v1793
        %v1845 = vmul.f32 %v1780, %v1793
        %v1846 = vmul.f32 %v1781, %v1793
        %v1847 = vmul.f32 %v1782, %v1793
        %v1848 = vmul.f32 %v1783, %v1793
        %v1849 = vmul.f32 %v1784, %v1793
        %v1850 = vmul.f32 %v1785, %v1793
        %v1851 = vmul.f32 %v1786, %v1793
        %v1852 = vmul.f32 %v1787, %v1793
        %v1853 = vmul.f32 %v1788, %v1793
        %v1854 = vmul.f32 %v1789, %v1793
        %v1855 = vmul.f32 %v1790, %v1793
        %v1856 = vmul.f32 %v1791, %v1793
        %v1857 = vmul.f32 %v1792, %v1793
        %v1858 = vadd.f32 %v1665, %v1794
        %v1859 = vadd.f32 %v1666, %v1795
        %v1860 = vadd.f32 %v1667, %v1796
        %v1861 = vadd.f32 %v1668, %v1797
        %v1862 = vadd.f32 %v1669, %v1798
        %v1863 = vadd.f32 %v1670, %v1799
        %v1864 = vadd.f32 %v1671, %v1800
        %v1865 = vadd.f32 %v1672, %v1801
        %v1866 = vadd.f32 %v1673, %v1802
        %v1867 = vadd.f32 %v1674, %v1803
        %v1868 = vadd.f32 %v1675, %v1804
        %v1869 = vadd.f32 %v1676, %v1805
        %v1870 = vadd.f32 %v1677, %v1806
        %v1871 = vadd.f32 %v1678, %v1807
        %v1872 = vadd.f32 %v1679, %v1808
        %v1873 = vadd.f32 %v1680, %v1809
        %v1874 = vadd.f32 %v1681, %v1810
        %v1875 = vadd.f32 %v1682, %v1811
        %v1876 = vadd.f32 %v1683, %v1812
        %v1877 = vadd.f32 %v1684, %v1813
        %v1878 = vadd.f32 %v1685, %v1814
        %v1879 = vadd.f32 %v1686, %v1815
        %v1880 = vadd.f32 %v1687, %v1816
        %v1881 = vadd.f32 %v1688, %v1817
        %v1882 = vadd.f32 %v1689, %v1818
        %v1883 = vadd.f32 %v1690, %v1819
        %v1884 = vadd.f32 %v1691, %v1820
        %v1885 = vadd.f32 %v1692, %v1821
        %v1886 = vadd.f32 %v1693, %v1822
        %v1887 = vadd.f32 %v1694, %v1823
        %v1888 = vadd.f32 %v1695, %v1824
        %v1889 = vadd.f32 %v1696, %v1825
        %v1890 = vadd.f32 %v1697, %v1826
        %v1891 = vadd.f32 %v1698, %v1827
        %v1892 = vadd.f32 %v1699, %v1828
        %v1893 = vadd.f32 %v1700, %v1829
        %v1894 = vadd.f32 %v1701, %v1830
        %v1895 = vadd.f32 %v1702, %v1831
        %v1896 = vadd.f32 %v1703, %v1832
        %v1897 = vadd.f32 %v1704, %v1833
        %v1898 = vadd.f32 %v1705, %v1834
        %v1899 = vadd.f32 %v1706, %v1835
        %v1900 = vadd.f32 %v1707, %v1836
        %v1901 = vadd.f32 %v1708, %v1837
        %v1902 = vadd.f32 %v1709, %v1838
        %v1903 = vadd.f32 %v1710, %v1839
        %v1904 = vadd.f32 %v1711, %v1840
        %v1905 = vadd.f32 %v1712, %v1841
        %v1906 = vadd.f32 %v1713, %v1842
        %v1907 = vadd.f32 %v1714, %v1843
        %v1908 = vadd.f32 %v1715, %v1844
        %v1909 = vadd.f32 %v1716, %v1845
        %v1910 = vadd.f32 %v1717, %v1846
        %v1911 = vadd.f32 %v1718, %v1847
        %v1912 = vadd.f32 %v1719, %v1848
        %v1913 = vadd.f32 %v1720, %v1849
        %v1914 = vadd.f32 %v1721, %v1850
        %v1915 = vadd.f32 %v1722, %v1851
        %v1916 = vadd.f32 %v1723, %v1852
        %v1917 = vadd.f32 %v1724, %v1853
        %v1918 = vadd.f32 %v1725, %v1854
        %v1919 = vadd.f32 %v1726, %v1855
        %v1920 = vadd.f32 %v1727, %v1856
        %v1921 = vadd.f32 %v1728, %v1857
        %s1922 = scalar_lea.vmem %s172, 160
        %v1923 = vld [vmem:[%s1922] sm:$0xff]
        %v1924 = vld [vmem:[%s1922 + $0x10] sm:$0xff]
        %v1925 = vld [vmem:[%s1922 + $0x20] sm:$0xff]
        %v1926 = vld [vmem:[%s1922 + $0x30] sm:$0xff]
        %v1927 = vld [vmem:[%s1922 + $0x40] sm:$0xff]
        %v1928 = vld [vmem:[%s1922 + $0x50] sm:$0xff]
        %v1929 = vld [vmem:[%s1922 + $0x60] sm:$0xff]
        %v1930 = vld [vmem:[%s1922 + $0x70] sm:$0xff]
        %v1931 = vld [vmem:[%s1922 + $0xa0] sm:$0xff]
        %v1932 = vld [vmem:[%s1922 + $0xb0] sm:$0xff]
        %v1933 = vld [vmem:[%s1922 + $0xc0] sm:$0xff]
        %v1934 = vld [vmem:[%s1922 + $0xd0] sm:$0xff]
        %v1935 = vld [vmem:[%s1922 + $0xe0] sm:$0xff]
        %v1936 = vld [vmem:[%s1922 + $0xf0] sm:$0xff]
        %v1937 = vld [vmem:[%s1922 + $0x100] sm:$0xff]
        %v1938 = vld [vmem:[%s1922 + $0x110] sm:$0xff]
        %v1939 = vld [vmem:[%s1922 + $0x140] sm:$0xff]
        %v1940 = vld [vmem:[%s1922 + $0x150] sm:$0xff]
        %v1941 = vld [vmem:[%s1922 + $0x160] sm:$0xff]
        %v1942 = vld [vmem:[%s1922 + $0x170] sm:$0xff]
        %v1943 = vld [vmem:[%s1922 + $0x180] sm:$0xff]
        %v1944 = vld [vmem:[%s1922 + $0x190] sm:$0xff]
        %v1945 = vld [vmem:[%s1922 + $0x1a0] sm:$0xff]
        %v1946 = vld [vmem:[%s1922 + $0x1b0] sm:$0xff]
        %v1947 = vld [vmem:[%s1922 + $0x1e0] sm:$0xff]
        %v1948 = vld [vmem:[%s1922 + $0x1f0] sm:$0xff]
        %v1949 = vld [vmem:[%s1922 + $0x200] sm:$0xff]
        %v1950 = vld [vmem:[%s1922 + $0x210] sm:$0xff]
        %v1951 = vld [vmem:[%s1922 + $0x220] sm:$0xff]
        %v1952 = vld [vmem:[%s1922 + $0x230] sm:$0xff]
        %v1953 = vld [vmem:[%s1922 + $0x240] sm:$0xff]
        %v1954 = vld [vmem:[%s1922 + $0x250] sm:$0xff]
        %v1955 = vld [vmem:[%s1922 + $0x280] sm:$0xff]
        %v1956 = vld [vmem:[%s1922 + $0x290] sm:$0xff]
        %v1957 = vld [vmem:[%s1922 + $0x2a0] sm:$0xff]
        %v1958 = vld [vmem:[%s1922 + $0x2b0] sm:$0xff]
        %v1959 = vld [vmem:[%s1922 + $0x2c0] sm:$0xff]
        %v1960 = vld [vmem:[%s1922 + $0x2d0] sm:$0xff]
        %v1961 = vld [vmem:[%s1922 + $0x2e0] sm:$0xff]
        %v1962 = vld [vmem:[%s1922 + $0x2f0] sm:$0xff]
        %v1963 = vld [vmem:[%s1922 + $0x320] sm:$0xff]
        %v1964 = vld [vmem:[%s1922 + $0x330] sm:$0xff]
        %v1965 = vld [vmem:[%s1922 + $0x340] sm:$0xff]
        %v1966 = vld [vmem:[%s1922 + $0x350] sm:$0xff]
        %v1967 = vld [vmem:[%s1922 + $0x360] sm:$0xff]
        %v1968 = vld [vmem:[%s1922 + $0x370] sm:$0xff]
        %v1969 = vld [vmem:[%s1922 + $0x380] sm:$0xff]
        %v1970 = vld [vmem:[%s1922 + $0x390] sm:$0xff]
        %v1971 = vld [vmem:[%s1922 + $0x3c0] sm:$0xff]
        %v1972 = vld [vmem:[%s1922 + $0x3d0] sm:$0xff]
        %v1973 = vld [vmem:[%s1922 + $0x3e0] sm:$0xff]
        %v1974 = vld [vmem:[%s1922 + $0x3f0] sm:$0xff]
        %v1975 = vld [vmem:[%s1922 + $0x400] sm:$0xff]
        %v1976 = vld [vmem:[%s1922 + $0x410] sm:$0xff]
        %v1977 = vld [vmem:[%s1922 + $0x420] sm:$0xff]
        %v1978 = vld [vmem:[%s1922 + $0x430] sm:$0xff]
        %v1979 = vld [vmem:[%s1922 + $0x460] sm:$0xff]
        %v1980 = vld [vmem:[%s1922 + $0x470] sm:$0xff]
        %v1981 = vld [vmem:[%s1922 + $0x480] sm:$0xff]
        %v1982 = vld [vmem:[%s1922 + $0x490] sm:$0xff]
        %v1983 = vld [vmem:[%s1922 + $0x4a0] sm:$0xff]
        %v1984 = vld [vmem:[%s1922 + $0x4b0] sm:$0xff]
        %v1985 = vld [vmem:[%s1922 + $0x4c0] sm:$0xff]
        %v1986 = vld [vmem:[%s1922 + $0x4d0] sm:$0xff]
        %v1987 = vperm.slane %v176, 1
        %v1988 = vmul.f32 %v1923, %v1987
        %v1989 = vmul.f32 %v1924, %v1987
        %v1990 = vmul.f32 %v1925, %v1987
        %v1991 = vmul.f32 %v1926, %v1987
        %v1992 = vmul.f32 %v1927, %v1987
        %v1993 = vmul.f32 %v1928, %v1987
        %v1994 = vmul.f32 %v1929, %v1987
        %v1995 = vmul.f32 %v1930, %v1987
        %v1996 = vmul.f32 %v1931, %v1987
        %v1997 = vmul.f32 %v1932, %v1987
        %v1998 = vmul.f32 %v1933, %v1987
        %v1999 = vmul.f32 %v1934, %v1987
        %v2000 = vmul.f32 %v1935, %v1987
        %v2001 = vmul.f32 %v1936, %v1987
        %v2002 = vmul.f32 %v1937, %v1987
        %v2003 = vmul.f32 %v1938, %v1987
        %v2004 = vmul.f32 %v1939, %v1987
        %v2005 = vmul.f32 %v1940, %v1987
        %v2006 = vmul.f32 %v1941, %v1987
        %v2007 = vmul.f32 %v1942, %v1987
        %v2008 = vmul.f32 %v1943, %v1987
        %v2009 = vmul.f32 %v1944, %v1987
        %v2010 = vmul.f32 %v1945, %v1987
        %v2011 = vmul.f32 %v1946, %v1987
        %v2012 = vmul.f32 %v1947, %v1987
        %v2013 = vmul.f32 %v1948, %v1987
        %v2014 = vmul.f32 %v1949, %v1987
        %v2015 = vmul.f32 %v1950, %v1987
        %v2016 = vmul.f32 %v1951, %v1987
        %v2017 = vmul.f32 %v1952, %v1987
        %v2018 = vmul.f32 %v1953, %v1987
        %v2019 = vmul.f32 %v1954, %v1987
        %v2020 = vmul.f32 %v1955, %v1987
        %v2021 = vmul.f32 %v1956, %v1987
        %v2022 = vmul.f32 %v1957, %v1987
        %v2023 = vmul.f32 %v1958, %v1987
        %v2024 = vmul.f32 %v1959, %v1987
        %v2025 = vmul.f32 %v1960, %v1987
        %v2026 = vmul.f32 %v1961, %v1987
        %v2027 = vmul.f32 %v1962, %v1987
        %v2028 = vmul.f32 %v1963, %v1987
        %v2029 = vmul.f32 %v1964, %v1987
        %v2030 = vmul.f32 %v1965, %v1987
        %v2031 = vmul.f32 %v1966, %v1987
        %v2032 = vmul.f32 %v1967, %v1987
        %v2033 = vmul.f32 %v1968, %v1987
        %v2034 = vmul.f32 %v1969, %v1987
        %v2035 = vmul.f32 %v1970, %v1987
        %v2036 = vmul.f32 %v1971, %v1987
        %v2037 = vmul.f32 %v1972, %v1987
        %v2038 = vmul.f32 %v1973, %v1987
        %v2039 = vmul.f32 %v1974, %v1987
        %v2040 = vmul.f32 %v1975, %v1987
        %v2041 = vmul.f32 %v1976, %v1987
        %v2042 = vmul.f32 %v1977, %v1987
        %v2043 = vmul.f32 %v1978, %v1987
        %v2044 = vmul.f32 %v1979, %v1987
        %v2045 = vmul.f32 %v1980, %v1987
        %v2046 = vmul.f32 %v1981, %v1987
        %v2047 = vmul.f32 %v1982, %v1987
        %v2048 = vmul.f32 %v1983, %v1987
        %v2049 = vmul.f32 %v1984, %v1987
        %v2050 = vmul.f32 %v1985, %v1987
        %v2051 = vmul.f32 %v1986, %v1987
        %v2052 = vadd.f32 %v1858, %v1988
        %v2053 = vadd.f32 %v1859, %v1989
        %v2054 = vadd.f32 %v1860, %v1990
        %v2055 = vadd.f32 %v1861, %v1991
        %v2056 = vadd.f32 %v1862, %v1992
        %v2057 = vadd.f32 %v1863, %v1993
        %v2058 = vadd.f32 %v1864, %v1994
        %v2059 = vadd.f32 %v1865, %v1995
        %v2060 = vadd.f32 %v1866, %v1996
        %v2061 = vadd.f32 %v1867, %v1997
        %v2062 = vadd.f32 %v1868, %v1998
        %v2063 = vadd.f32 %v1869, %v1999
        %v2064 = vadd.f32 %v1870, %v2000
        %v2065 = vadd.f32 %v1871, %v2001
        %v2066 = vadd.f32 %v1872, %v2002
        %v2067 = vadd.f32 %v1873, %v2003
        %v2068 = vadd.f32 %v1874, %v2004
        %v2069 = vadd.f32 %v1875, %v2005
        %v2070 = vadd.f32 %v1876, %v2006
        %v2071 = vadd.f32 %v1877, %v2007
        %v2072 = vadd.f32 %v1878, %v2008
        %v2073 = vadd.f32 %v1879, %v2009
        %v2074 = vadd.f32 %v1880, %v2010
        %v2075 = vadd.f32 %v1881, %v2011
        %v2076 = vadd.f32 %v1882, %v2012
        %v2077 = vadd.f32 %v1883, %v2013
        %v2078 = vadd.f32 %v1884, %v2014
        %v2079 = vadd.f32 %v1885, %v2015
        %v2080 = vadd.f32 %v1886, %v2016
        %v2081 = vadd.f32 %v1887, %v2017
        %v2082 = vadd.f32 %v1888, %v2018
        %v2083 = vadd.f32 %v1889, %v2019
        %v2084 = vadd.f32 %v1890, %v2020
        %v2085 = vadd.f32 %v1891, %v2021
        %v2086 = vadd.f32 %v1892, %v2022
        %v2087 = vadd.f32 %v1893, %v2023
        %v2088 = vadd.f32 %v1894, %v2024
        %v2089 = vadd.f32 %v1895, %v2025
        %v2090 = vadd.f32 %v1896, %v2026
        %v2091 = vadd.f32 %v1897, %v2027
        %v2092 = vadd.f32 %v1898, %v2028
        %v2093 = vadd.f32 %v1899, %v2029
        %v2094 = vadd.f32 %v1900, %v2030
        %v2095 = vadd.f32 %v1901, %v2031
        %v2096 = vadd.f32 %v1902, %v2032
        %v2097 = vadd.f32 %v1903, %v2033
        %v2098 = vadd.f32 %v1904, %v2034
        %v2099 = vadd.f32 %v1905, %v2035
        %v2100 = vadd.f32 %v1906, %v2036
        %v2101 = vadd.f32 %v1907, %v2037
        %v2102 = vadd.f32 %v1908, %v2038
        %v2103 = vadd.f32 %v1909, %v2039
        %v2104 = vadd.f32 %v1910, %v2040
        %v2105 = vadd.f32 %v1911, %v2041
        %v2106 = vadd.f32 %v1912, %v2042
        %v2107 = vadd.f32 %v1913, %v2043
        %v2108 = vadd.f32 %v1914, %v2044
        %v2109 = vadd.f32 %v1915, %v2045
        %v2110 = vadd.f32 %v1916, %v2046
        %v2111 = vadd.f32 %v1917, %v2047
        %v2112 = vadd.f32 %v1918, %v2048
        %v2113 = vadd.f32 %v1919, %v2049
        %v2114 = vadd.f32 %v1920, %v2050
        %v2115 = vadd.f32 %v1921, %v2051
        %v2116 = vld [vmem:[%s1922 + $0x1] sm:$0xff]
        %v2117 = vld [vmem:[%s1922 + $0x11] sm:$0xff]
        %v2118 = vld [vmem:[%s1922 + $0x21] sm:$0xff]
        %v2119 = vld [vmem:[%s1922 + $0x31] sm:$0xff]
        %v2120 = vld [vmem:[%s1922 + $0x41] sm:$0xff]
        %v2121 = vld [vmem:[%s1922 + $0x51] sm:$0xff]
        %v2122 = vld [vmem:[%s1922 + $0x61] sm:$0xff]
        %v2123 = vld [vmem:[%s1922 + $0x71] sm:$0xff]
        %v2124 = vld [vmem:[%s1922 + $0xa1] sm:$0xff]
        %v2125 = vld [vmem:[%s1922 + $0xb1] sm:$0xff]
        %v2126 = vld [vmem:[%s1922 + $0xc1] sm:$0xff]
        %v2127 = vld [vmem:[%s1922 + $0xd1] sm:$0xff]
        %v2128 = vld [vmem:[%s1922 + $0xe1] sm:$0xff]
        %v2129 = vld [vmem:[%s1922 + $0xf1] sm:$0xff]
        %v2130 = vld [vmem:[%s1922 + $0x101] sm:$0xff]
        %v2131 = vld [vmem:[%s1922 + $0x111] sm:$0xff]
        %v2132 = vld [vmem:[%s1922 + $0x141] sm:$0xff]
        %v2133 = vld [vmem:[%s1922 + $0x151] sm:$0xff]
        %v2134 = vld [vmem:[%s1922 + $0x161] sm:$0xff]
        %v2135 = vld [vmem:[%s1922 + $0x171] sm:$0xff]
        %v2136 = vld [vmem:[%s1922 + $0x181] sm:$0xff]
        %v2137 = vld [vmem:[%s1922 + $0x191] sm:$0xff]
        %v2138 = vld [vmem:[%s1922 + $0x1a1] sm:$0xff]
        %v2139 = vld [vmem:[%s1922 + $0x1b1] sm:$0xff]
        %v2140 = vld [vmem:[%s1922 + $0x1e1] sm:$0xff]
        %v2141 = vld [vmem:[%s1922 + $0x1f1] sm:$0xff]
        %v2142 = vld [vmem:[%s1922 + $0x201] sm:$0xff]
        %v2143 = vld [vmem:[%s1922 + $0x211] sm:$0xff]
        %v2144 = vld [vmem:[%s1922 + $0x221] sm:$0xff]
        %v2145 = vld [vmem:[%s1922 + $0x231] sm:$0xff]
        %v2146 = vld [vmem:[%s1922 + $0x241] sm:$0xff]
        %v2147 = vld [vmem:[%s1922 + $0x251] sm:$0xff]
        %v2148 = vld [vmem:[%s1922 + $0x281] sm:$0xff]
        %v2149 = vld [vmem:[%s1922 + $0x291] sm:$0xff]
        %v2150 = vld [vmem:[%s1922 + $0x2a1] sm:$0xff]
        %v2151 = vld [vmem:[%s1922 + $0x2b1] sm:$0xff]
        %v2152 = vld [vmem:[%s1922 + $0x2c1] sm:$0xff]
        %v2153 = vld [vmem:[%s1922 + $0x2d1] sm:$0xff]
        %v2154 = vld [vmem:[%s1922 + $0x2e1] sm:$0xff]
        %v2155 = vld [vmem:[%s1922 + $0x2f1] sm:$0xff]
        %v2156 = vld [vmem:[%s1922 + $0x321] sm:$0xff]
        %v2157 = vld [vmem:[%s1922 + $0x331] sm:$0xff]
        %v2158 = vld [vmem:[%s1922 + $0x341] sm:$0xff]
        %v2159 = vld [vmem:[%s1922 + $0x351] sm:$0xff]
        %v2160 = vld [vmem:[%s1922 + $0x361] sm:$0xff]
        %v2161 = vld [vmem:[%s1922 + $0x371] sm:$0xff]
        %v2162 = vld [vmem:[%s1922 + $0x381] sm:$0xff]
        %v2163 = vld [vmem:[%s1922 + $0x391] sm:$0xff]
        %v2164 = vld [vmem:[%s1922 + $0x3c1] sm:$0xff]
        %v2165 = vld [vmem:[%s1922 + $0x3d1] sm:$0xff]
        %v2166 = vld [vmem:[%s1922 + $0x3e1] sm:$0xff]
        %v2167 = vld [vmem:[%s1922 + $0x3f1] sm:$0xff]
        %v2168 = vld [vmem:[%s1922 + $0x401] sm:$0xff]
        %v2169 = vld [vmem:[%s1922 + $0x411] sm:$0xff]
        %v2170 = vld [vmem:[%s1922 + $0x421] sm:$0xff]
        %v2171 = vld [vmem:[%s1922 + $0x431] sm:$0xff]
        %v2172 = vld [vmem:[%s1922 + $0x461] sm:$0xff]
        %v2173 = vld [vmem:[%s1922 + $0x471] sm:$0xff]
        %v2174 = vld [vmem:[%s1922 + $0x481] sm:$0xff]
        %v2175 = vld [vmem:[%s1922 + $0x491] sm:$0xff]
        %v2176 = vld [vmem:[%s1922 + $0x4a1] sm:$0xff]
        %v2177 = vld [vmem:[%s1922 + $0x4b1] sm:$0xff]
        %v2178 = vld [vmem:[%s1922 + $0x4c1] sm:$0xff]
        %v2179 = vld [vmem:[%s1922 + $0x4d1] sm:$0xff]
        %v2180 = vperm.slane %v176, 2
        %v2181 = vmul.f32 %v2116, %v2180
        %v2182 = vmul.f32 %v2117, %v2180
        %v2183 = vmul.f32 %v2118, %v2180
        %v2184 = vmul.f32 %v2119, %v2180
        %v2185 = vmul.f32 %v2120, %v2180
        %v2186 = vmul.f32 %v2121, %v2180
        %v2187 = vmul.f32 %v2122, %v2180
        %v2188 = vmul.f32 %v2123, %v2180
        %v2189 = vmul.f32 %v2124, %v2180
        %v2190 = vmul.f32 %v2125, %v2180
        %v2191 = vmul.f32 %v2126, %v2180
        %v2192 = vmul.f32 %v2127, %v2180
        %v2193 = vmul.f32 %v2128, %v2180
        %v2194 = vmul.f32 %v2129, %v2180
        %v2195 = vmul.f32 %v2130, %v2180
        %v2196 = vmul.f32 %v2131, %v2180
        %v2197 = vmul.f32 %v2132, %v2180
        %v2198 = vmul.f32 %v2133, %v2180
        %v2199 = vmul.f32 %v2134, %v2180
        %v2200 = vmul.f32 %v2135, %v2180
        %v2201 = vmul.f32 %v2136, %v2180
        %v2202 = vmul.f32 %v2137, %v2180
        %v2203 = vmul.f32 %v2138, %v2180
        %v2204 = vmul.f32 %v2139, %v2180
        %v2205 = vmul.f32 %v2140, %v2180
        %v2206 = vmul.f32 %v2141, %v2180
        %v2207 = vmul.f32 %v2142, %v2180
        %v2208 = vmul.f32 %v2143, %v2180
        %v2209 = vmul.f32 %v2144, %v2180
        %v2210 = vmul.f32 %v2145, %v2180
        %v2211 = vmul.f32 %v2146, %v2180
        %v2212 = vmul.f32 %v2147, %v2180
        %v2213 = vmul.f32 %v2148, %v2180
        %v2214 = vmul.f32 %v2149, %v2180
        %v2215 = vmul.f32 %v2150, %v2180
        %v2216 = vmul.f32 %v2151, %v2180
        %v2217 = vmul.f32 %v2152, %v2180
        %v2218 = vmul.f32 %v2153, %v2180
        %v2219 = vmul.f32 %v2154, %v2180
        %v2220 = vmul.f32 %v2155, %v2180
        %v2221 = vmul.f32 %v2156, %v2180
        %v2222 = vmul.f32 %v2157, %v2180
        %v2223 = vmul.f32 %v2158, %v2180
        %v2224 = vmul.f32 %v2159, %v2180
        %v2225 = vmul.f32 %v2160, %v2180
        %v2226 = vmul.f32 %v2161, %v2180
        %v2227 = vmul.f32 %v2162, %v2180
        %v2228 = vmul.f32 %v2163, %v2180
        %v2229 = vmul.f32 %v2164, %v2180
        %v2230 = vmul.f32 %v2165, %v2180
        %v2231 = vmul.f32 %v2166, %v2180
        %v2232 = vmul.f32 %v2167, %v2180
        %v2233 = vmul.f32 %v2168, %v2180
        %v2234 = vmul.f32 %v2169, %v2180
        %v2235 = vmul.f32 %v2170, %v2180
        %v2236 = vmul.f32 %v2171, %v2180
        %v2237 = vmul.f32 %v2172, %v2180
        %v2238 = vmul.f32 %v2173, %v2180
        %v2239 = vmul.f32 %v2174, %v2180
        %v2240 = vmul.f32 %v2175, %v2180
        %v2241 = vmul.f32 %v2176, %v2180
        %v2242 = vmul.f32 %v2177, %v2180
        %v2243 = vmul.f32 %v2178, %v2180
        %v2244 = vmul.f32 %v2179, %v2180
        %v2245 = vadd.f32 %v2052, %v2181
        %v2246 = vadd.f32 %v2053, %v2182
        %v2247 = vadd.f32 %v2054, %v2183
        %v2248 = vadd.f32 %v2055, %v2184
        %v2249 = vadd.f32 %v2056, %v2185
        %v2250 = vadd.f32 %v2057, %v2186
        %v2251 = vadd.f32 %v2058, %v2187
        %v2252 = vadd.f32 %v2059, %v2188
        %v2253 = vadd.f32 %v2060, %v2189
        %v2254 = vadd.f32 %v2061, %v2190
        %v2255 = vadd.f32 %v2062, %v2191
        %v2256 = vadd.f32 %v2063, %v2192
        %v2257 = vadd.f32 %v2064, %v2193
        %v2258 = vadd.f32 %v2065, %v2194
        %v2259 = vadd.f32 %v2066, %v2195
        %v2260 = vadd.f32 %v2067, %v2196
        %v2261 = vadd.f32 %v2068, %v2197
        %v2262 = vadd.f32 %v2069, %v2198
        %v2263 = vadd.f32 %v2070, %v2199
        %v2264 = vadd.f32 %v2071, %v2200
        %v2265 = vadd.f32 %v2072, %v2201
        %v2266 = vadd.f32 %v2073, %v2202
        %v2267 = vadd.f32 %v2074, %v2203
        %v2268 = vadd.f32 %v2075, %v2204
        %v2269 = vadd.f32 %v2076, %v2205
        %v2270 = vadd.f32 %v2077, %v2206
        %v2271 = vadd.f32 %v2078, %v2207
        %v2272 = vadd.f32 %v2079, %v2208
        %v2273 = vadd.f32 %v2080, %v2209
        %v2274 = vadd.f32 %v2081, %v2210
        %v2275 = vadd.f32 %v2082, %v2211
        %v2276 = vadd.f32 %v2083, %v2212
        %v2277 = vadd.f32 %v2084, %v2213
        %v2278 = vadd.f32 %v2085, %v2214
        %v2279 = vadd.f32 %v2086, %v2215
        %v2280 = vadd.f32 %v2087, %v2216
        %v2281 = vadd.f32 %v2088, %v2217
        %v2282 = vadd.f32 %v2089, %v2218
        %v2283 = vadd.f32 %v2090, %v2219
        %v2284 = vadd.f32 %v2091, %v2220
        %v2285 = vadd.f32 %v2092, %v2221
        %v2286 = vadd.f32 %v2093, %v2222
        %v2287 = vadd.f32 %v2094, %v2223
        %v2288 = vadd.f32 %v2095, %v2224
        %v2289 = vadd.f32 %v2096, %v2225
        %v2290 = vadd.f32 %v2097, %v2226
        %v2291 = vadd.f32 %v2098, %v2227
        %v2292 = vadd.f32 %v2099, %v2228
        %v2293 = vadd.f32 %v2100, %v2229
        %v2294 = vadd.f32 %v2101, %v2230
        %v2295 = vadd.f32 %v2102, %v2231
        %v2296 = vadd.f32 %v2103, %v2232
        %v2297 = vadd.f32 %v2104, %v2233
        %v2298 = vadd.f32 %v2105, %v2234
        %v2299 = vadd.f32 %v2106, %v2235
        %v2300 = vadd.f32 %v2107, %v2236
        %v2301 = vadd.f32 %v2108, %v2237
        %v2302 = vadd.f32 %v2109, %v2238
        %v2303 = vadd.f32 %v2110, %v2239
        %v2304 = vadd.f32 %v2111, %v2240
        %v2305 = vadd.f32 %v2112, %v2241
        %v2306 = vadd.f32 %v2113, %v2242
        %v2307 = vadd.f32 %v2114, %v2243
        %v2308 = vadd.f32 %v2115, %v2244
        %v2309 = vld [vmem:[%s1922 + $0x2] sm:$0xff]
        %v2310 = vld [vmem:[%s1922 + $0x12] sm:$0xff]
        %v2311 = vld [vmem:[%s1922 + $0x22] sm:$0xff]
        %v2312 = vld [vmem:[%s1922 + $0x32] sm:$0xff]
        %v2313 = vld [vmem:[%s1922 + $0x42] sm:$0xff]
        %v2314 = vld [vmem:[%s1922 + $0x52] sm:$0xff]
        %v2315 = vld [vmem:[%s1922 + $0x62] sm:$0xff]
        %v2316 = vld [vmem:[%s1922 + $0x72] sm:$0xff]
        %v2317 = vld [vmem:[%s1922 + $0xa2] sm:$0xff]
        %v2318 = vld [vmem:[%s1922 + $0xb2] sm:$0xff]
        %v2319 = vld [vmem:[%s1922 + $0xc2] sm:$0xff]
        %v2320 = vld [vmem:[%s1922 + $0xd2] sm:$0xff]
        %v2321 = vld [vmem:[%s1922 + $0xe2] sm:$0xff]
        %v2322 = vld [vmem:[%s1922 + $0xf2] sm:$0xff]
        %v2323 = vld [vmem:[%s1922 + $0x102] sm:$0xff]
        %v2324 = vld [vmem:[%s1922 + $0x112] sm:$0xff]
        %v2325 = vld [vmem:[%s1922 + $0x142] sm:$0xff]
        %v2326 = vld [vmem:[%s1922 + $0x152] sm:$0xff]
        %v2327 = vld [vmem:[%s1922 + $0x162] sm:$0xff]
        %v2328 = vld [vmem:[%s1922 + $0x172] sm:$0xff]
        %v2329 = vld [vmem:[%s1922 + $0x182] sm:$0xff]
        %v2330 = vld [vmem:[%s1922 + $0x192] sm:$0xff]
        %v2331 = vld [vmem:[%s1922 + $0x1a2] sm:$0xff]
        %v2332 = vld [vmem:[%s1922 + $0x1b2] sm:$0xff]
        %v2333 = vld [vmem:[%s1922 + $0x1e2] sm:$0xff]
        %v2334 = vld [vmem:[%s1922 + $0x1f2] sm:$0xff]
        %v2335 = vld [vmem:[%s1922 + $0x202] sm:$0xff]
        %v2336 = vld [vmem:[%s1922 + $0x212] sm:$0xff]
        %v2337 = vld [vmem:[%s1922 + $0x222] sm:$0xff]
        %v2338 = vld [vmem:[%s1922 + $0x232] sm:$0xff]
        %v2339 = vld [vmem:[%s1922 + $0x242] sm:$0xff]
        %v2340 = vld [vmem:[%s1922 + $0x252] sm:$0xff]
        %v2341 = vld [vmem:[%s1922 + $0x282] sm:$0xff]
        %v2342 = vld [vmem:[%s1922 + $0x292] sm:$0xff]
        %v2343 = vld [vmem:[%s1922 + $0x2a2] sm:$0xff]
        %v2344 = vld [vmem:[%s1922 + $0x2b2] sm:$0xff]
        %v2345 = vld [vmem:[%s1922 + $0x2c2] sm:$0xff]
        %v2346 = vld [vmem:[%s1922 + $0x2d2] sm:$0xff]
        %v2347 = vld [vmem:[%s1922 + $0x2e2] sm:$0xff]
        %v2348 = vld [vmem:[%s1922 + $0x2f2] sm:$0xff]
        %v2349 = vld [vmem:[%s1922 + $0x322] sm:$0xff]
        %v2350 = vld [vmem:[%s1922 + $0x332] sm:$0xff]
        %v2351 = vld [vmem:[%s1922 + $0x342] sm:$0xff]
        %v2352 = vld [vmem:[%s1922 + $0x352] sm:$0xff]
        %v2353 = vld [vmem:[%s1922 + $0x362] sm:$0xff]
        %v2354 = vld [vmem:[%s1922 + $0x372] sm:$0xff]
        %v2355 = vld [vmem:[%s1922 + $0x382] sm:$0xff]
        %v2356 = vld [vmem:[%s1922 + $0x392] sm:$0xff]
        %v2357 = vld [vmem:[%s1922 + $0x3c2] sm:$0xff]
        %v2358 = vld [vmem:[%s1922 + $0x3d2] sm:$0xff]
        %v2359 = vld [vmem:[%s1922 + $0x3e2] sm:$0xff]
        %v2360 = vld [vmem:[%s1922 + $0x3f2] sm:$0xff]
        %v2361 = vld [vmem:[%s1922 + $0x402] sm:$0xff]
        %v2362 = vld [vmem:[%s1922 + $0x412] sm:$0xff]
        %v2363 = vld [vmem:[%s1922 + $0x422] sm:$0xff]
        %v2364 = vld [vmem:[%s1922 + $0x432] sm:$0xff]
        %v2365 = vld [vmem:[%s1922 + $0x462] sm:$0xff]
        %v2366 = vld [vmem:[%s1922 + $0x472] sm:$0xff]
        %v2367 = vld [vmem:[%s1922 + $0x482] sm:$0xff]
        %v2368 = vld [vmem:[%s1922 + $0x492] sm:$0xff]
        %v2369 = vld [vmem:[%s1922 + $0x4a2] sm:$0xff]
        %v2370 = vld [vmem:[%s1922 + $0x4b2] sm:$0xff]
        %v2371 = vld [vmem:[%s1922 + $0x4c2] sm:$0xff]
        %v2372 = vld [vmem:[%s1922 + $0x4d2] sm:$0xff]
        %v2373 = vperm.slane %v176, 3
        %v2374 = vmul.f32 %v2309, %v2373
        %v2375 = vmul.f32 %v2310, %v2373
        %v2376 = vmul.f32 %v2311, %v2373
        %v2377 = vmul.f32 %v2312, %v2373
        %v2378 = vmul.f32 %v2313, %v2373
        %v2379 = vmul.f32 %v2314, %v2373
        %v2380 = vmul.f32 %v2315, %v2373
        %v2381 = vmul.f32 %v2316, %v2373
        %v2382 = vmul.f32 %v2317, %v2373
        %v2383 = vmul.f32 %v2318, %v2373
        %v2384 = vmul.f32 %v2319, %v2373
        %v2385 = vmul.f32 %v2320, %v2373
        %v2386 = vmul.f32 %v2321, %v2373
        %v2387 = vmul.f32 %v2322, %v2373
        %v2388 = vmul.f32 %v2323, %v2373
        %v2389 = vmul.f32 %v2324, %v2373
        %v2390 = vmul.f32 %v2325, %v2373
        %v2391 = vmul.f32 %v2326, %v2373
        %v2392 = vmul.f32 %v2327, %v2373
        %v2393 = vmul.f32 %v2328, %v2373
        %v2394 = vmul.f32 %v2329, %v2373
        %v2395 = vmul.f32 %v2330, %v2373
        %v2396 = vmul.f32 %v2331, %v2373
        %v2397 = vmul.f32 %v2332, %v2373
        %v2398 = vmul.f32 %v2333, %v2373
        %v2399 = vmul.f32 %v2334, %v2373
        %v2400 = vmul.f32 %v2335, %v2373
        %v2401 = vmul.f32 %v2336, %v2373
        %v2402 = vmul.f32 %v2337, %v2373
        %v2403 = vmul.f32 %v2338, %v2373
        %v2404 = vmul.f32 %v2339, %v2373
        %v2405 = vmul.f32 %v2340, %v2373
        %v2406 = vmul.f32 %v2341, %v2373
        %v2407 = vmul.f32 %v2342, %v2373
        %v2408 = vmul.f32 %v2343, %v2373
        %v2409 = vmul.f32 %v2344, %v2373
        %v2410 = vmul.f32 %v2345, %v2373
        %v2411 = vmul.f32 %v2346, %v2373
        %v2412 = vmul.f32 %v2347, %v2373
        %v2413 = vmul.f32 %v2348, %v2373
        %v2414 = vmul.f32 %v2349, %v2373
        %v2415 = vmul.f32 %v2350, %v2373
        %v2416 = vmul.f32 %v2351, %v2373
        %v2417 = vmul.f32 %v2352, %v2373
        %v2418 = vmul.f32 %v2353, %v2373
        %v2419 = vmul.f32 %v2354, %v2373
        %v2420 = vmul.f32 %v2355, %v2373
        %v2421 = vmul.f32 %v2356, %v2373
        %v2422 = vmul.f32 %v2357, %v2373
        %v2423 = vmul.f32 %v2358, %v2373
        %v2424 = vmul.f32 %v2359, %v2373
        %v2425 = vmul.f32 %v2360, %v2373
        %v2426 = vmul.f32 %v2361, %v2373
        %v2427 = vmul.f32 %v2362, %v2373
        %v2428 = vmul.f32 %v2363, %v2373
        %v2429 = vmul.f32 %v2364, %v2373
        %v2430 = vmul.f32 %v2365, %v2373
        %v2431 = vmul.f32 %v2366, %v2373
        %v2432 = vmul.f32 %v2367, %v2373
        %v2433 = vmul.f32 %v2368, %v2373
        %v2434 = vmul.f32 %v2369, %v2373
        %v2435 = vmul.f32 %v2370, %v2373
        %v2436 = vmul.f32 %v2371, %v2373
        %v2437 = vmul.f32 %v2372, %v2373
        %v2438 = vadd.f32 %v2245, %v2374
        %v2439 = vadd.f32 %v2246, %v2375
        %v2440 = vadd.f32 %v2247, %v2376
        %v2441 = vadd.f32 %v2248, %v2377
        %v2442 = vadd.f32 %v2249, %v2378
        %v2443 = vadd.f32 %v2250, %v2379
        %v2444 = vadd.f32 %v2251, %v2380
        %v2445 = vadd.f32 %v2252, %v2381
        %v2446 = vadd.f32 %v2253, %v2382
        %v2447 = vadd.f32 %v2254, %v2383
        %v2448 = vadd.f32 %v2255, %v2384
        %v2449 = vadd.f32 %v2256, %v2385
        %v2450 = vadd.f32 %v2257, %v2386
        %v2451 = vadd.f32 %v2258, %v2387
        %v2452 = vadd.f32 %v2259, %v2388
        %v2453 = vadd.f32 %v2260, %v2389
        %v2454 = vadd.f32 %v2261, %v2390
        %v2455 = vadd.f32 %v2262, %v2391
        %v2456 = vadd.f32 %v2263, %v2392
        %v2457 = vadd.f32 %v2264, %v2393
        %v2458 = vadd.f32 %v2265, %v2394
        %v2459 = vadd.f32 %v2266, %v2395
        %v2460 = vadd.f32 %v2267, %v2396
        %v2461 = vadd.f32 %v2268, %v2397
        %v2462 = vadd.f32 %v2269, %v2398
        %v2463 = vadd.f32 %v2270, %v2399
        %v2464 = vadd.f32 %v2271, %v2400
        %v2465 = vadd.f32 %v2272, %v2401
        %v2466 = vadd.f32 %v2273, %v2402
        %v2467 = vadd.f32 %v2274, %v2403
        %v2468 = vadd.f32 %v2275, %v2404
        %v2469 = vadd.f32 %v2276, %v2405
        %v2470 = vadd.f32 %v2277, %v2406
        %v2471 = vadd.f32 %v2278, %v2407
        %v2472 = vadd.f32 %v2279, %v2408
        %v2473 = vadd.f32 %v2280, %v2409
        %v2474 = vadd.f32 %v2281, %v2410
        %v2475 = vadd.f32 %v2282, %v2411
        %v2476 = vadd.f32 %v2283, %v2412
        %v2477 = vadd.f32 %v2284, %v2413
        %v2478 = vadd.f32 %v2285, %v2414
        %v2479 = vadd.f32 %v2286, %v2415
        %v2480 = vadd.f32 %v2287, %v2416
        %v2481 = vadd.f32 %v2288, %v2417
        %v2482 = vadd.f32 %v2289, %v2418
        %v2483 = vadd.f32 %v2290, %v2419
        %v2484 = vadd.f32 %v2291, %v2420
        %v2485 = vadd.f32 %v2292, %v2421
        %v2486 = vadd.f32 %v2293, %v2422
        %v2487 = vadd.f32 %v2294, %v2423
        %v2488 = vadd.f32 %v2295, %v2424
        %v2489 = vadd.f32 %v2296, %v2425
        %v2490 = vadd.f32 %v2297, %v2426
        %v2491 = vadd.f32 %v2298, %v2427
        %v2492 = vadd.f32 %v2299, %v2428
        %v2493 = vadd.f32 %v2300, %v2429
        %v2494 = vadd.f32 %v2301, %v2430
        %v2495 = vadd.f32 %v2302, %v2431
        %v2496 = vadd.f32 %v2303, %v2432
        %v2497 = vadd.f32 %v2304, %v2433
        %v2498 = vadd.f32 %v2305, %v2434
        %v2499 = vadd.f32 %v2306, %v2435
        %v2500 = vadd.f32 %v2307, %v2436
        %v2501 = vadd.f32 %v2308, %v2437
        %s2502 = scalar_lea.vmem %s172, 176
        %v2503 = vld [vmem:[%s2502] sm:$0xff]
        %v2504 = vld [vmem:[%s2502 + $0x10] sm:$0xff]
        %v2505 = vld [vmem:[%s2502 + $0x20] sm:$0xff]
        %v2506 = vld [vmem:[%s2502 + $0x30] sm:$0xff]
        %v2507 = vld [vmem:[%s2502 + $0x40] sm:$0xff]
        %v2508 = vld [vmem:[%s2502 + $0x50] sm:$0xff]
        %v2509 = vld [vmem:[%s2502 + $0x60] sm:$0xff]
        %v2510 = vld [vmem:[%s2502 + $0x70] sm:$0xff]
        %v2511 = vld [vmem:[%s2502 + $0xa0] sm:$0xff]
        %v2512 = vld [vmem:[%s2502 + $0xb0] sm:$0xff]
        %v2513 = vld [vmem:[%s2502 + $0xc0] sm:$0xff]
        %v2514 = vld [vmem:[%s2502 + $0xd0] sm:$0xff]
        %v2515 = vld [vmem:[%s2502 + $0xe0] sm:$0xff]
        %v2516 = vld [vmem:[%s2502 + $0xf0] sm:$0xff]
        %v2517 = vld [vmem:[%s2502 + $0x100] sm:$0xff]
        %v2518 = vld [vmem:[%s2502 + $0x110] sm:$0xff]
        %v2519 = vld [vmem:[%s2502 + $0x140] sm:$0xff]
        %v2520 = vld [vmem:[%s2502 + $0x150] sm:$0xff]
        %v2521 = vld [vmem:[%s2502 + $0x160] sm:$0xff]
        %v2522 = vld [vmem:[%s2502 + $0x170] sm:$0xff]
        %v2523 = vld [vmem:[%s2502 + $0x180] sm:$0xff]
        %v2524 = vld [vmem:[%s2502 + $0x190] sm:$0xff]
        %v2525 = vld [vmem:[%s2502 + $0x1a0] sm:$0xff]
        %v2526 = vld [vmem:[%s2502 + $0x1b0] sm:$0xff]
        %v2527 = vld [vmem:[%s2502 + $0x1e0] sm:$0xff]
        %v2528 = vld [vmem:[%s2502 + $0x1f0] sm:$0xff]
        %v2529 = vld [vmem:[%s2502 + $0x200] sm:$0xff]
        %v2530 = vld [vmem:[%s2502 + $0x210] sm:$0xff]
        %v2531 = vld [vmem:[%s2502 + $0x220] sm:$0xff]
        %v2532 = vld [vmem:[%s2502 + $0x230] sm:$0xff]
        %v2533 = vld [vmem:[%s2502 + $0x240] sm:$0xff]
        %v2534 = vld [vmem:[%s2502 + $0x250] sm:$0xff]
        %v2535 = vld [vmem:[%s2502 + $0x280] sm:$0xff]
        %v2536 = vld [vmem:[%s2502 + $0x290] sm:$0xff]
        %v2537 = vld [vmem:[%s2502 + $0x2a0] sm:$0xff]
        %v2538 = vld [vmem:[%s2502 + $0x2b0] sm:$0xff]
        %v2539 = vld [vmem:[%s2502 + $0x2c0] sm:$0xff]
        %v2540 = vld [vmem:[%s2502 + $0x2d0] sm:$0xff]
        %v2541 = vld [vmem:[%s2502 + $0x2e0] sm:$0xff]
        %v2542 = vld [vmem:[%s2502 + $0x2f0] sm:$0xff]
        %v2543 = vld [vmem:[%s2502 + $0x320] sm:$0xff]
        %v2544 = vld [vmem:[%s2502 + $0x330] sm:$0xff]
        %v2545 = vld [vmem:[%s2502 + $0x340] sm:$0xff]
        %v2546 = vld [vmem:[%s2502 + $0x350] sm:$0xff]
        %v2547 = vld [vmem:[%s2502 + $0x360] sm:$0xff]
        %v2548 = vld [vmem:[%s2502 + $0x370] sm:$0xff]
        %v2549 = vld [vmem:[%s2502 + $0x380] sm:$0xff]
        %v2550 = vld [vmem:[%s2502 + $0x390] sm:$0xff]
        %v2551 = vld [vmem:[%s2502 + $0x3c0] sm:$0xff]
        %v2552 = vld [vmem:[%s2502 + $0x3d0] sm:$0xff]
        %v2553 = vld [vmem:[%s2502 + $0x3e0] sm:$0xff]
        %v2554 = vld [vmem:[%s2502 + $0x3f0] sm:$0xff]
        %v2555 = vld [vmem:[%s2502 + $0x400] sm:$0xff]
        %v2556 = vld [vmem:[%s2502 + $0x410] sm:$0xff]
        %v2557 = vld [vmem:[%s2502 + $0x420] sm:$0xff]
        %v2558 = vld [vmem:[%s2502 + $0x430] sm:$0xff]
        %v2559 = vld [vmem:[%s2502 + $0x460] sm:$0xff]
        %v2560 = vld [vmem:[%s2502 + $0x470] sm:$0xff]
        %v2561 = vld [vmem:[%s2502 + $0x480] sm:$0xff]
        %v2562 = vld [vmem:[%s2502 + $0x490] sm:$0xff]
        %v2563 = vld [vmem:[%s2502 + $0x4a0] sm:$0xff]
        %v2564 = vld [vmem:[%s2502 + $0x4b0] sm:$0xff]
        %v2565 = vld [vmem:[%s2502 + $0x4c0] sm:$0xff]
        %v2566 = vld [vmem:[%s2502 + $0x4d0] sm:$0xff]
        %v2567 = vperm.slane %v176, 4
        %v2568 = vmul.f32 %v2503, %v2567
        %v2569 = vmul.f32 %v2504, %v2567
        %v2570 = vmul.f32 %v2505, %v2567
        %v2571 = vmul.f32 %v2506, %v2567
        %v2572 = vmul.f32 %v2507, %v2567
        %v2573 = vmul.f32 %v2508, %v2567
        %v2574 = vmul.f32 %v2509, %v2567
        %v2575 = vmul.f32 %v2510, %v2567
        %v2576 = vmul.f32 %v2511, %v2567
        %v2577 = vmul.f32 %v2512, %v2567
        %v2578 = vmul.f32 %v2513, %v2567
        %v2579 = vmul.f32 %v2514, %v2567
        %v2580 = vmul.f32 %v2515, %v2567
        %v2581 = vmul.f32 %v2516, %v2567
        %v2582 = vmul.f32 %v2517, %v2567
        %v2583 = vmul.f32 %v2518, %v2567
        %v2584 = vmul.f32 %v2519, %v2567
        %v2585 = vmul.f32 %v2520, %v2567
        %v2586 = vmul.f32 %v2521, %v2567
        %v2587 = vmul.f32 %v2522, %v2567
        %v2588 = vmul.f32 %v2523, %v2567
        %v2589 = vmul.f32 %v2524, %v2567
        %v2590 = vmul.f32 %v2525, %v2567
        %v2591 = vmul.f32 %v2526, %v2567
        %v2592 = vmul.f32 %v2527, %v2567
        %v2593 = vmul.f32 %v2528, %v2567
        %v2594 = vmul.f32 %v2529, %v2567
        %v2595 = vmul.f32 %v2530, %v2567
        %v2596 = vmul.f32 %v2531, %v2567
        %v2597 = vmul.f32 %v2532, %v2567
        %v2598 = vmul.f32 %v2533, %v2567
        %v2599 = vmul.f32 %v2534, %v2567
        %v2600 = vmul.f32 %v2535, %v2567
        %v2601 = vmul.f32 %v2536, %v2567
        %v2602 = vmul.f32 %v2537, %v2567
        %v2603 = vmul.f32 %v2538, %v2567
        %v2604 = vmul.f32 %v2539, %v2567
        %v2605 = vmul.f32 %v2540, %v2567
        %v2606 = vmul.f32 %v2541, %v2567
        %v2607 = vmul.f32 %v2542, %v2567
        %v2608 = vmul.f32 %v2543, %v2567
        %v2609 = vmul.f32 %v2544, %v2567
        %v2610 = vmul.f32 %v2545, %v2567
        %v2611 = vmul.f32 %v2546, %v2567
        %v2612 = vmul.f32 %v2547, %v2567
        %v2613 = vmul.f32 %v2548, %v2567
        %v2614 = vmul.f32 %v2549, %v2567
        %v2615 = vmul.f32 %v2550, %v2567
        %v2616 = vmul.f32 %v2551, %v2567
        %v2617 = vmul.f32 %v2552, %v2567
        %v2618 = vmul.f32 %v2553, %v2567
        %v2619 = vmul.f32 %v2554, %v2567
        %v2620 = vmul.f32 %v2555, %v2567
        %v2621 = vmul.f32 %v2556, %v2567
        %v2622 = vmul.f32 %v2557, %v2567
        %v2623 = vmul.f32 %v2558, %v2567
        %v2624 = vmul.f32 %v2559, %v2567
        %v2625 = vmul.f32 %v2560, %v2567
        %v2626 = vmul.f32 %v2561, %v2567
        %v2627 = vmul.f32 %v2562, %v2567
        %v2628 = vmul.f32 %v2563, %v2567
        %v2629 = vmul.f32 %v2564, %v2567
        %v2630 = vmul.f32 %v2565, %v2567
        %v2631 = vmul.f32 %v2566, %v2567
        %v2632 = vadd.f32 %v2438, %v2568
        %v2633 = vadd.f32 %v2439, %v2569
        %v2634 = vadd.f32 %v2440, %v2570
        %v2635 = vadd.f32 %v2441, %v2571
        %v2636 = vadd.f32 %v2442, %v2572
        %v2637 = vadd.f32 %v2443, %v2573
        %v2638 = vadd.f32 %v2444, %v2574
        %v2639 = vadd.f32 %v2445, %v2575
        %v2640 = vadd.f32 %v2446, %v2576
        %v2641 = vadd.f32 %v2447, %v2577
        %v2642 = vadd.f32 %v2448, %v2578
        %v2643 = vadd.f32 %v2449, %v2579
        %v2644 = vadd.f32 %v2450, %v2580
        %v2645 = vadd.f32 %v2451, %v2581
        %v2646 = vadd.f32 %v2452, %v2582
        %v2647 = vadd.f32 %v2453, %v2583
        %v2648 = vadd.f32 %v2454, %v2584
        %v2649 = vadd.f32 %v2455, %v2585
        %v2650 = vadd.f32 %v2456, %v2586
        %v2651 = vadd.f32 %v2457, %v2587
        %v2652 = vadd.f32 %v2458, %v2588
        %v2653 = vadd.f32 %v2459, %v2589
        %v2654 = vadd.f32 %v2460, %v2590
        %v2655 = vadd.f32 %v2461, %v2591
        %v2656 = vadd.f32 %v2462, %v2592
        %v2657 = vadd.f32 %v2463, %v2593
        %v2658 = vadd.f32 %v2464, %v2594
        %v2659 = vadd.f32 %v2465, %v2595
        %v2660 = vadd.f32 %v2466, %v2596
        %v2661 = vadd.f32 %v2467, %v2597
        %v2662 = vadd.f32 %v2468, %v2598
        %v2663 = vadd.f32 %v2469, %v2599
        %v2664 = vadd.f32 %v2470, %v2600
        %v2665 = vadd.f32 %v2471, %v2601
        %v2666 = vadd.f32 %v2472, %v2602
        %v2667 = vadd.f32 %v2473, %v2603
        %v2668 = vadd.f32 %v2474, %v2604
        %v2669 = vadd.f32 %v2475, %v2605
        %v2670 = vadd.f32 %v2476, %v2606
        %v2671 = vadd.f32 %v2477, %v2607
        %v2672 = vadd.f32 %v2478, %v2608
        %v2673 = vadd.f32 %v2479, %v2609
        %v2674 = vadd.f32 %v2480, %v2610
        %v2675 = vadd.f32 %v2481, %v2611
        %v2676 = vadd.f32 %v2482, %v2612
        %v2677 = vadd.f32 %v2483, %v2613
        %v2678 = vadd.f32 %v2484, %v2614
        %v2679 = vadd.f32 %v2485, %v2615
        %v2680 = vadd.f32 %v2486, %v2616
        %v2681 = vadd.f32 %v2487, %v2617
        %v2682 = vadd.f32 %v2488, %v2618
        %v2683 = vadd.f32 %v2489, %v2619
        %v2684 = vadd.f32 %v2490, %v2620
        %v2685 = vadd.f32 %v2491, %v2621
        %v2686 = vadd.f32 %v2492, %v2622
        %v2687 = vadd.f32 %v2493, %v2623
        %v2688 = vadd.f32 %v2494, %v2624
        %v2689 = vadd.f32 %v2495, %v2625
        %v2690 = vadd.f32 %v2496, %v2626
        %v2691 = vadd.f32 %v2497, %v2627
        %v2692 = vadd.f32 %v2498, %v2628
        %v2693 = vadd.f32 %v2499, %v2629
        %v2694 = vadd.f32 %v2500, %v2630
        %v2695 = vadd.f32 %v2501, %v2631
        %v2696 = vld [vmem:[%s2502 + $0x1] sm:$0xff]
        %v2697 = vld [vmem:[%s2502 + $0x11] sm:$0xff]
        %v2698 = vld [vmem:[%s2502 + $0x21] sm:$0xff]
        %v2699 = vld [vmem:[%s2502 + $0x31] sm:$0xff]
        %v2700 = vld [vmem:[%s2502 + $0x41] sm:$0xff]
        %v2701 = vld [vmem:[%s2502 + $0x51] sm:$0xff]
        %v2702 = vld [vmem:[%s2502 + $0x61] sm:$0xff]
        %v2703 = vld [vmem:[%s2502 + $0x71] sm:$0xff]
        %v2704 = vld [vmem:[%s2502 + $0xa1] sm:$0xff]
        %v2705 = vld [vmem:[%s2502 + $0xb1] sm:$0xff]
        %v2706 = vld [vmem:[%s2502 + $0xc1] sm:$0xff]
        %v2707 = vld [vmem:[%s2502 + $0xd1] sm:$0xff]
        %v2708 = vld [vmem:[%s2502 + $0xe1] sm:$0xff]
        %v2709 = vld [vmem:[%s2502 + $0xf1] sm:$0xff]
        %v2710 = vld [vmem:[%s2502 + $0x101] sm:$0xff]
        %v2711 = vld [vmem:[%s2502 + $0x111] sm:$0xff]
        %v2712 = vld [vmem:[%s2502 + $0x141] sm:$0xff]
        %v2713 = vld [vmem:[%s2502 + $0x151] sm:$0xff]
        %v2714 = vld [vmem:[%s2502 + $0x161] sm:$0xff]
        %v2715 = vld [vmem:[%s2502 + $0x171] sm:$0xff]
        %v2716 = vld [vmem:[%s2502 + $0x181] sm:$0xff]
        %v2717 = vld [vmem:[%s2502 + $0x191] sm:$0xff]
        %v2718 = vld [vmem:[%s2502 + $0x1a1] sm:$0xff]
        %v2719 = vld [vmem:[%s2502 + $0x1b1] sm:$0xff]
        %v2720 = vld [vmem:[%s2502 + $0x1e1] sm:$0xff]
        %v2721 = vld [vmem:[%s2502 + $0x1f1] sm:$0xff]
        %v2722 = vld [vmem:[%s2502 + $0x201] sm:$0xff]
        %v2723 = vld [vmem:[%s2502 + $0x211] sm:$0xff]
        %v2724 = vld [vmem:[%s2502 + $0x221] sm:$0xff]
        %v2725 = vld [vmem:[%s2502 + $0x231] sm:$0xff]
        %v2726 = vld [vmem:[%s2502 + $0x241] sm:$0xff]
        %v2727 = vld [vmem:[%s2502 + $0x251] sm:$0xff]
        %v2728 = vld [vmem:[%s2502 + $0x281] sm:$0xff]
        %v2729 = vld [vmem:[%s2502 + $0x291] sm:$0xff]
        %v2730 = vld [vmem:[%s2502 + $0x2a1] sm:$0xff]
        %v2731 = vld [vmem:[%s2502 + $0x2b1] sm:$0xff]
        %v2732 = vld [vmem:[%s2502 + $0x2c1] sm:$0xff]
        %v2733 = vld [vmem:[%s2502 + $0x2d1] sm:$0xff]
        %v2734 = vld [vmem:[%s2502 + $0x2e1] sm:$0xff]
        %v2735 = vld [vmem:[%s2502 + $0x2f1] sm:$0xff]
        %v2736 = vld [vmem:[%s2502 + $0x321] sm:$0xff]
        %v2737 = vld [vmem:[%s2502 + $0x331] sm:$0xff]
        %v2738 = vld [vmem:[%s2502 + $0x341] sm:$0xff]
        %v2739 = vld [vmem:[%s2502 + $0x351] sm:$0xff]
        %v2740 = vld [vmem:[%s2502 + $0x361] sm:$0xff]
        %v2741 = vld [vmem:[%s2502 + $0x371] sm:$0xff]
        %v2742 = vld [vmem:[%s2502 + $0x381] sm:$0xff]
        %v2743 = vld [vmem:[%s2502 + $0x391] sm:$0xff]
        %v2744 = vld [vmem:[%s2502 + $0x3c1] sm:$0xff]
        %v2745 = vld [vmem:[%s2502 + $0x3d1] sm:$0xff]
        %v2746 = vld [vmem:[%s2502 + $0x3e1] sm:$0xff]
        %v2747 = vld [vmem:[%s2502 + $0x3f1] sm:$0xff]
        %v2748 = vld [vmem:[%s2502 + $0x401] sm:$0xff]
        %v2749 = vld [vmem:[%s2502 + $0x411] sm:$0xff]
        %v2750 = vld [vmem:[%s2502 + $0x421] sm:$0xff]
        %v2751 = vld [vmem:[%s2502 + $0x431] sm:$0xff]
        %v2752 = vld [vmem:[%s2502 + $0x461] sm:$0xff]
        %v2753 = vld [vmem:[%s2502 + $0x471] sm:$0xff]
        %v2754 = vld [vmem:[%s2502 + $0x481] sm:$0xff]
        %v2755 = vld [vmem:[%s2502 + $0x491] sm:$0xff]
        %v2756 = vld [vmem:[%s2502 + $0x4a1] sm:$0xff]
        %v2757 = vld [vmem:[%s2502 + $0x4b1] sm:$0xff]
        %v2758 = vld [vmem:[%s2502 + $0x4c1] sm:$0xff]
        %v2759 = vld [vmem:[%s2502 + $0x4d1] sm:$0xff]
        %v2760 = vperm.slane %v176, 5
        %v2761 = vmul.f32 %v2696, %v2760
        %v2762 = vmul.f32 %v2697, %v2760
        %v2763 = vmul.f32 %v2698, %v2760
        %v2764 = vmul.f32 %v2699, %v2760
        %v2765 = vmul.f32 %v2700, %v2760
        %v2766 = vmul.f32 %v2701, %v2760
        %v2767 = vmul.f32 %v2702, %v2760
        %v2768 = vmul.f32 %v2703, %v2760
        %v2769 = vmul.f32 %v2704, %v2760
        %v2770 = vmul.f32 %v2705, %v2760
        %v2771 = vmul.f32 %v2706, %v2760
        %v2772 = vmul.f32 %v2707, %v2760
        %v2773 = vmul.f32 %v2708, %v2760
        %v2774 = vmul.f32 %v2709, %v2760
        %v2775 = vmul.f32 %v2710, %v2760
        %v2776 = vmul.f32 %v2711, %v2760
        %v2777 = vmul.f32 %v2712, %v2760
        %v2778 = vmul.f32 %v2713, %v2760
        %v2779 = vmul.f32 %v2714, %v2760
        %v2780 = vmul.f32 %v2715, %v2760
        %v2781 = vmul.f32 %v2716, %v2760
        %v2782 = vmul.f32 %v2717, %v2760
        %v2783 = vmul.f32 %v2718, %v2760
        %v2784 = vmul.f32 %v2719, %v2760
        %v2785 = vmul.f32 %v2720, %v2760
        %v2786 = vmul.f32 %v2721, %v2760
        %v2787 = vmul.f32 %v2722, %v2760
        %v2788 = vmul.f32 %v2723, %v2760
        %v2789 = vmul.f32 %v2724, %v2760
        %v2790 = vmul.f32 %v2725, %v2760
        %v2791 = vmul.f32 %v2726, %v2760
        %v2792 = vmul.f32 %v2727, %v2760
        %v2793 = vmul.f32 %v2728, %v2760
        %v2794 = vmul.f32 %v2729, %v2760
        %v2795 = vmul.f32 %v2730, %v2760
        %v2796 = vmul.f32 %v2731, %v2760
        %v2797 = vmul.f32 %v2732, %v2760
        %v2798 = vmul.f32 %v2733, %v2760
        %v2799 = vmul.f32 %v2734, %v2760
        %v2800 = vmul.f32 %v2735, %v2760
        %v2801 = vmul.f32 %v2736, %v2760
        %v2802 = vmul.f32 %v2737, %v2760
        %v2803 = vmul.f32 %v2738, %v2760
        %v2804 = vmul.f32 %v2739, %v2760
        %v2805 = vmul.f32 %v2740, %v2760
        %v2806 = vmul.f32 %v2741, %v2760
        %v2807 = vmul.f32 %v2742, %v2760
        %v2808 = vmul.f32 %v2743, %v2760
        %v2809 = vmul.f32 %v2744, %v2760
        %v2810 = vmul.f32 %v2745, %v2760
        %v2811 = vmul.f32 %v2746, %v2760
        %v2812 = vmul.f32 %v2747, %v2760
        %v2813 = vmul.f32 %v2748, %v2760
        %v2814 = vmul.f32 %v2749, %v2760
        %v2815 = vmul.f32 %v2750, %v2760
        %v2816 = vmul.f32 %v2751, %v2760
        %v2817 = vmul.f32 %v2752, %v2760
        %v2818 = vmul.f32 %v2753, %v2760
        %v2819 = vmul.f32 %v2754, %v2760
        %v2820 = vmul.f32 %v2755, %v2760
        %v2821 = vmul.f32 %v2756, %v2760
        %v2822 = vmul.f32 %v2757, %v2760
        %v2823 = vmul.f32 %v2758, %v2760
        %v2824 = vmul.f32 %v2759, %v2760
        %v2825 = vadd.f32 %v2632, %v2761
        %v2826 = vadd.f32 %v2633, %v2762
        %v2827 = vadd.f32 %v2634, %v2763
        %v2828 = vadd.f32 %v2635, %v2764
        %v2829 = vadd.f32 %v2636, %v2765
        %v2830 = vadd.f32 %v2637, %v2766
        %v2831 = vadd.f32 %v2638, %v2767
        %v2832 = vadd.f32 %v2639, %v2768
        %v2833 = vadd.f32 %v2640, %v2769
        %v2834 = vadd.f32 %v2641, %v2770
        %v2835 = vadd.f32 %v2642, %v2771
        %v2836 = vadd.f32 %v2643, %v2772
        %v2837 = vadd.f32 %v2644, %v2773
        %v2838 = vadd.f32 %v2645, %v2774
        %v2839 = vadd.f32 %v2646, %v2775
        %v2840 = vadd.f32 %v2647, %v2776
        %v2841 = vadd.f32 %v2648, %v2777
        %v2842 = vadd.f32 %v2649, %v2778
        %v2843 = vadd.f32 %v2650, %v2779
        %v2844 = vadd.f32 %v2651, %v2780
        %v2845 = vadd.f32 %v2652, %v2781
        %v2846 = vadd.f32 %v2653, %v2782
        %v2847 = vadd.f32 %v2654, %v2783
        %v2848 = vadd.f32 %v2655, %v2784
        %v2849 = vadd.f32 %v2656, %v2785
        %v2850 = vadd.f32 %v2657, %v2786
        %v2851 = vadd.f32 %v2658, %v2787
        %v2852 = vadd.f32 %v2659, %v2788
        %v2853 = vadd.f32 %v2660, %v2789
        %v2854 = vadd.f32 %v2661, %v2790
        %v2855 = vadd.f32 %v2662, %v2791
        %v2856 = vadd.f32 %v2663, %v2792
        %v2857 = vadd.f32 %v2664, %v2793
        %v2858 = vadd.f32 %v2665, %v2794
        %v2859 = vadd.f32 %v2666, %v2795
        %v2860 = vadd.f32 %v2667, %v2796
        %v2861 = vadd.f32 %v2668, %v2797
        %v2862 = vadd.f32 %v2669, %v2798
        %v2863 = vadd.f32 %v2670, %v2799
        %v2864 = vadd.f32 %v2671, %v2800
        %v2865 = vadd.f32 %v2672, %v2801
        %v2866 = vadd.f32 %v2673, %v2802
        %v2867 = vadd.f32 %v2674, %v2803
        %v2868 = vadd.f32 %v2675, %v2804
        %v2869 = vadd.f32 %v2676, %v2805
        %v2870 = vadd.f32 %v2677, %v2806
        %v2871 = vadd.f32 %v2678, %v2807
        %v2872 = vadd.f32 %v2679, %v2808
        %v2873 = vadd.f32 %v2680, %v2809
        %v2874 = vadd.f32 %v2681, %v2810
        %v2875 = vadd.f32 %v2682, %v2811
        %v2876 = vadd.f32 %v2683, %v2812
        %v2877 = vadd.f32 %v2684, %v2813
        %v2878 = vadd.f32 %v2685, %v2814
        %v2879 = vadd.f32 %v2686, %v2815
        %v2880 = vadd.f32 %v2687, %v2816
        %v2881 = vadd.f32 %v2688, %v2817
        %v2882 = vadd.f32 %v2689, %v2818
        %v2883 = vadd.f32 %v2690, %v2819
        %v2884 = vadd.f32 %v2691, %v2820
        %v2885 = vadd.f32 %v2692, %v2821
        %v2886 = vadd.f32 %v2693, %v2822
        %v2887 = vadd.f32 %v2694, %v2823
        %v2888 = vadd.f32 %v2695, %v2824
        %v2889 = vld [vmem:[%s2502 + $0x2] sm:$0xff]
        %v2890 = vld [vmem:[%s2502 + $0x12] sm:$0xff]
        %v2891 = vld [vmem:[%s2502 + $0x22] sm:$0xff]
        %v2892 = vld [vmem:[%s2502 + $0x32] sm:$0xff]
        %v2893 = vld [vmem:[%s2502 + $0x42] sm:$0xff]
        %v2894 = vld [vmem:[%s2502 + $0x52] sm:$0xff]
        %v2895 = vld [vmem:[%s2502 + $0x62] sm:$0xff]
        %v2896 = vld [vmem:[%s2502 + $0x72] sm:$0xff]
        %v2897 = vld [vmem:[%s2502 + $0xa2] sm:$0xff]
        %v2898 = vld [vmem:[%s2502 + $0xb2] sm:$0xff]
        %v2899 = vld [vmem:[%s2502 + $0xc2] sm:$0xff]
        %v2900 = vld [vmem:[%s2502 + $0xd2] sm:$0xff]
        %v2901 = vld [vmem:[%s2502 + $0xe2] sm:$0xff]
        %v2902 = vld [vmem:[%s2502 + $0xf2] sm:$0xff]
        %v2903 = vld [vmem:[%s2502 + $0x102] sm:$0xff]
        %v2904 = vld [vmem:[%s2502 + $0x112] sm:$0xff]
        %v2905 = vld [vmem:[%s2502 + $0x142] sm:$0xff]
        %v2906 = vld [vmem:[%s2502 + $0x152] sm:$0xff]
        %v2907 = vld [vmem:[%s2502 + $0x162] sm:$0xff]
        %v2908 = vld [vmem:[%s2502 + $0x172] sm:$0xff]
        %v2909 = vld [vmem:[%s2502 + $0x182] sm:$0xff]
        %v2910 = vld [vmem:[%s2502 + $0x192] sm:$0xff]
        %v2911 = vld [vmem:[%s2502 + $0x1a2] sm:$0xff]
        %v2912 = vld [vmem:[%s2502 + $0x1b2] sm:$0xff]
        %v2913 = vld [vmem:[%s2502 + $0x1e2] sm:$0xff]
        %v2914 = vld [vmem:[%s2502 + $0x1f2] sm:$0xff]
        %v2915 = vld [vmem:[%s2502 + $0x202] sm:$0xff]
        %v2916 = vld [vmem:[%s2502 + $0x212] sm:$0xff]
        %v2917 = vld [vmem:[%s2502 + $0x222] sm:$0xff]
        %v2918 = vld [vmem:[%s2502 + $0x232] sm:$0xff]
        %v2919 = vld [vmem:[%s2502 + $0x242] sm:$0xff]
        %v2920 = vld [vmem:[%s2502 + $0x252] sm:$0xff]
        %v2921 = vld [vmem:[%s2502 + $0x282] sm:$0xff]
        %v2922 = vld [vmem:[%s2502 + $0x292] sm:$0xff]
        %v2923 = vld [vmem:[%s2502 + $0x2a2] sm:$0xff]
        %v2924 = vld [vmem:[%s2502 + $0x2b2] sm:$0xff]
        %v2925 = vld [vmem:[%s2502 + $0x2c2] sm:$0xff]
        %v2926 = vld [vmem:[%s2502 + $0x2d2] sm:$0xff]
        %v2927 = vld [vmem:[%s2502 + $0x2e2] sm:$0xff]
        %v2928 = vld [vmem:[%s2502 + $0x2f2] sm:$0xff]
        %v2929 = vld [vmem:[%s2502 + $0x322] sm:$0xff]
        %v2930 = vld [vmem:[%s2502 + $0x332] sm:$0xff]
        %v2931 = vld [vmem:[%s2502 + $0x342] sm:$0xff]
        %v2932 = vld [vmem:[%s2502 + $0x352] sm:$0xff]
        %v2933 = vld [vmem:[%s2502 + $0x362] sm:$0xff]
        %v2934 = vld [vmem:[%s2502 + $0x372] sm:$0xff]
        %v2935 = vld [vmem:[%s2502 + $0x382] sm:$0xff]
        %v2936 = vld [vmem:[%s2502 + $0x392] sm:$0xff]
        %v2937 = vld [vmem:[%s2502 + $0x3c2] sm:$0xff]
        %v2938 = vld [vmem:[%s2502 + $0x3d2] sm:$0xff]
        %v2939 = vld [vmem:[%s2502 + $0x3e2] sm:$0xff]
        %v2940 = vld [vmem:[%s2502 + $0x3f2] sm:$0xff]
        %v2941 = vld [vmem:[%s2502 + $0x402] sm:$0xff]
        %v2942 = vld [vmem:[%s2502 + $0x412] sm:$0xff]
        %v2943 = vld [vmem:[%s2502 + $0x422] sm:$0xff]
        %v2944 = vld [vmem:[%s2502 + $0x432] sm:$0xff]
        %v2945 = vld [vmem:[%s2502 + $0x462] sm:$0xff]
        %v2946 = vld [vmem:[%s2502 + $0x472] sm:$0xff]
        %v2947 = vld [vmem:[%s2502 + $0x482] sm:$0xff]
        %v2948 = vld [vmem:[%s2502 + $0x492] sm:$0xff]
        %v2949 = vld [vmem:[%s2502 + $0x4a2] sm:$0xff]
        %v2950 = vld [vmem:[%s2502 + $0x4b2] sm:$0xff]
        %v2951 = vld [vmem:[%s2502 + $0x4c2] sm:$0xff]
        %v2952 = vld [vmem:[%s2502 + $0x4d2] sm:$0xff]
        %v2953 = vperm.slane %v176, 6
        %v2954 = vmul.f32 %v2889, %v2953
        %v2955 = vmul.f32 %v2890, %v2953
        %v2956 = vmul.f32 %v2891, %v2953
        %v2957 = vmul.f32 %v2892, %v2953
        %v2958 = vmul.f32 %v2893, %v2953
        %v2959 = vmul.f32 %v2894, %v2953
        %v2960 = vmul.f32 %v2895, %v2953
        %v2961 = vmul.f32 %v2896, %v2953
        %v2962 = vmul.f32 %v2897, %v2953
        %v2963 = vmul.f32 %v2898, %v2953
        %v2964 = vmul.f32 %v2899, %v2953
        %v2965 = vmul.f32 %v2900, %v2953
        %v2966 = vmul.f32 %v2901, %v2953
        %v2967 = vmul.f32 %v2902, %v2953
        %v2968 = vmul.f32 %v2903, %v2953
        %v2969 = vmul.f32 %v2904, %v2953
        %v2970 = vmul.f32 %v2905, %v2953
        %v2971 = vmul.f32 %v2906, %v2953
        %v2972 = vmul.f32 %v2907, %v2953
        %v2973 = vmul.f32 %v2908, %v2953
        %v2974 = vmul.f32 %v2909, %v2953
        %v2975 = vmul.f32 %v2910, %v2953
        %v2976 = vmul.f32 %v2911, %v2953
        %v2977 = vmul.f32 %v2912, %v2953
        %v2978 = vmul.f32 %v2913, %v2953
        %v2979 = vmul.f32 %v2914, %v2953
        %v2980 = vmul.f32 %v2915, %v2953
        %v2981 = vmul.f32 %v2916, %v2953
        %v2982 = vmul.f32 %v2917, %v2953
        %v2983 = vmul.f32 %v2918, %v2953
        %v2984 = vmul.f32 %v2919, %v2953
        %v2985 = vmul.f32 %v2920, %v2953
        %v2986 = vmul.f32 %v2921, %v2953
        %v2987 = vmul.f32 %v2922, %v2953
        %v2988 = vmul.f32 %v2923, %v2953
        %v2989 = vmul.f32 %v2924, %v2953
        %v2990 = vmul.f32 %v2925, %v2953
        %v2991 = vmul.f32 %v2926, %v2953
        %v2992 = vmul.f32 %v2927, %v2953
        %v2993 = vmul.f32 %v2928, %v2953
        %v2994 = vmul.f32 %v2929, %v2953
        %v2995 = vmul.f32 %v2930, %v2953
        %v2996 = vmul.f32 %v2931, %v2953
        %v2997 = vmul.f32 %v2932, %v2953
        %v2998 = vmul.f32 %v2933, %v2953
        %v2999 = vmul.f32 %v2934, %v2953
        %v3000 = vmul.f32 %v2935, %v2953
        %v3001 = vmul.f32 %v2936, %v2953
        %v3002 = vmul.f32 %v2937, %v2953
        %v3003 = vmul.f32 %v2938, %v2953
        %v3004 = vmul.f32 %v2939, %v2953
        %v3005 = vmul.f32 %v2940, %v2953
        %v3006 = vmul.f32 %v2941, %v2953
        %v3007 = vmul.f32 %v2942, %v2953
        %v3008 = vmul.f32 %v2943, %v2953
        %v3009 = vmul.f32 %v2944, %v2953
        %v3010 = vmul.f32 %v2945, %v2953
        %v3011 = vmul.f32 %v2946, %v2953
        %v3012 = vmul.f32 %v2947, %v2953
        %v3013 = vmul.f32 %v2948, %v2953
        %v3014 = vmul.f32 %v2949, %v2953
        %v3015 = vmul.f32 %v2950, %v2953
        %v3016 = vmul.f32 %v2951, %v2953
        %v3017 = vmul.f32 %v2952, %v2953
        %v3018 = vadd.f32 %v2825, %v2954
        %v3019 = vadd.f32 %v2826, %v2955
        %v3020 = vadd.f32 %v2827, %v2956
        %v3021 = vadd.f32 %v2828, %v2957
        %v3022 = vadd.f32 %v2829, %v2958
        %v3023 = vadd.f32 %v2830, %v2959
        %v3024 = vadd.f32 %v2831, %v2960
        %v3025 = vadd.f32 %v2832, %v2961
        %v3026 = vadd.f32 %v2833, %v2962
        %v3027 = vadd.f32 %v2834, %v2963
        %v3028 = vadd.f32 %v2835, %v2964
        %v3029 = vadd.f32 %v2836, %v2965
        %v3030 = vadd.f32 %v2837, %v2966
        %v3031 = vadd.f32 %v2838, %v2967
        %v3032 = vadd.f32 %v2839, %v2968
        %v3033 = vadd.f32 %v2840, %v2969
        %v3034 = vadd.f32 %v2841, %v2970
        %v3035 = vadd.f32 %v2842, %v2971
        %v3036 = vadd.f32 %v2843, %v2972
        %v3037 = vadd.f32 %v2844, %v2973
        %v3038 = vadd.f32 %v2845, %v2974
        %v3039 = vadd.f32 %v2846, %v2975
        %v3040 = vadd.f32 %v2847, %v2976
        %v3041 = vadd.f32 %v2848, %v2977
        %v3042 = vadd.f32 %v2849, %v2978
        %v3043 = vadd.f32 %v2850, %v2979
        %v3044 = vadd.f32 %v2851, %v2980
        %v3045 = vadd.f32 %v2852, %v2981
        %v3046 = vadd.f32 %v2853, %v2982
        %v3047 = vadd.f32 %v2854, %v2983
        %v3048 = vadd.f32 %v2855, %v2984
        %v3049 = vadd.f32 %v2856, %v2985
        %v3050 = vadd.f32 %v2857, %v2986
        %v3051 = vadd.f32 %v2858, %v2987
        %v3052 = vadd.f32 %v2859, %v2988
        %v3053 = vadd.f32 %v2860, %v2989
        %v3054 = vadd.f32 %v2861, %v2990
        %v3055 = vadd.f32 %v2862, %v2991
        %v3056 = vadd.f32 %v2863, %v2992
        %v3057 = vadd.f32 %v2864, %v2993
        %v3058 = vadd.f32 %v2865, %v2994
        %v3059 = vadd.f32 %v2866, %v2995
        %v3060 = vadd.f32 %v2867, %v2996
        %v3061 = vadd.f32 %v2868, %v2997
        %v3062 = vadd.f32 %v2869, %v2998
        %v3063 = vadd.f32 %v2870, %v2999
        %v3064 = vadd.f32 %v2871, %v3000
        %v3065 = vadd.f32 %v2872, %v3001
        %v3066 = vadd.f32 %v2873, %v3002
        %v3067 = vadd.f32 %v2874, %v3003
        %v3068 = vadd.f32 %v2875, %v3004
        %v3069 = vadd.f32 %v2876, %v3005
        %v3070 = vadd.f32 %v2877, %v3006
        %v3071 = vadd.f32 %v2878, %v3007
        %v3072 = vadd.f32 %v2879, %v3008
        %v3073 = vadd.f32 %v2880, %v3009
        %v3074 = vadd.f32 %v2881, %v3010
        %v3075 = vadd.f32 %v2882, %v3011
        %v3076 = vadd.f32 %v2883, %v3012
        %v3077 = vadd.f32 %v2884, %v3013
        %v3078 = vadd.f32 %v2885, %v3014
        %v3079 = vadd.f32 %v2886, %v3015
        %v3080 = vadd.f32 %v2887, %v3016
        %v3081 = vadd.f32 %v2888, %v3017
        %s3082 = scalar_lea.vmem %s172, 192
        %v3083 = vld [vmem:[%s3082] sm:$0xff]
        %v3084 = vld [vmem:[%s3082 + $0x10] sm:$0xff]
        %v3085 = vld [vmem:[%s3082 + $0x20] sm:$0xff]
        %v3086 = vld [vmem:[%s3082 + $0x30] sm:$0xff]
        %v3087 = vld [vmem:[%s3082 + $0x40] sm:$0xff]
        %v3088 = vld [vmem:[%s3082 + $0x50] sm:$0xff]
        %v3089 = vld [vmem:[%s3082 + $0x60] sm:$0xff]
        %v3090 = vld [vmem:[%s3082 + $0x70] sm:$0xff]
        %v3091 = vld [vmem:[%s3082 + $0xa0] sm:$0xff]
        %v3092 = vld [vmem:[%s3082 + $0xb0] sm:$0xff]
        %v3093 = vld [vmem:[%s3082 + $0xc0] sm:$0xff]
        %v3094 = vld [vmem:[%s3082 + $0xd0] sm:$0xff]
        %v3095 = vld [vmem:[%s3082 + $0xe0] sm:$0xff]
        %v3096 = vld [vmem:[%s3082 + $0xf0] sm:$0xff]
        %v3097 = vld [vmem:[%s3082 + $0x100] sm:$0xff]
        %v3098 = vld [vmem:[%s3082 + $0x110] sm:$0xff]
        %v3099 = vld [vmem:[%s3082 + $0x140] sm:$0xff]
        %v3100 = vld [vmem:[%s3082 + $0x150] sm:$0xff]
        %v3101 = vld [vmem:[%s3082 + $0x160] sm:$0xff]
        %v3102 = vld [vmem:[%s3082 + $0x170] sm:$0xff]
        %v3103 = vld [vmem:[%s3082 + $0x180] sm:$0xff]
        %v3104 = vld [vmem:[%s3082 + $0x190] sm:$0xff]
        %v3105 = vld [vmem:[%s3082 + $0x1a0] sm:$0xff]
        %v3106 = vld [vmem:[%s3082 + $0x1b0] sm:$0xff]
        %v3107 = vld [vmem:[%s3082 + $0x1e0] sm:$0xff]
        %v3108 = vld [vmem:[%s3082 + $0x1f0] sm:$0xff]
        %v3109 = vld [vmem:[%s3082 + $0x200] sm:$0xff]
        %v3110 = vld [vmem:[%s3082 + $0x210] sm:$0xff]
        %v3111 = vld [vmem:[%s3082 + $0x220] sm:$0xff]
        %v3112 = vld [vmem:[%s3082 + $0x230] sm:$0xff]
        %v3113 = vld [vmem:[%s3082 + $0x240] sm:$0xff]
        %v3114 = vld [vmem:[%s3082 + $0x250] sm:$0xff]
        %v3115 = vld [vmem:[%s3082 + $0x280] sm:$0xff]
        %v3116 = vld [vmem:[%s3082 + $0x290] sm:$0xff]
        %v3117 = vld [vmem:[%s3082 + $0x2a0] sm:$0xff]
        %v3118 = vld [vmem:[%s3082 + $0x2b0] sm:$0xff]
        %v3119 = vld [vmem:[%s3082 + $0x2c0] sm:$0xff]
        %v3120 = vld [vmem:[%s3082 + $0x2d0] sm:$0xff]
        %v3121 = vld [vmem:[%s3082 + $0x2e0] sm:$0xff]
        %v3122 = vld [vmem:[%s3082 + $0x2f0] sm:$0xff]
        %v3123 = vld [vmem:[%s3082 + $0x320] sm:$0xff]
        %v3124 = vld [vmem:[%s3082 + $0x330] sm:$0xff]
        %v3125 = vld [vmem:[%s3082 + $0x340] sm:$0xff]
        %v3126 = vld [vmem:[%s3082 + $0x350] sm:$0xff]
        %v3127 = vld [vmem:[%s3082 + $0x360] sm:$0xff]
        %v3128 = vld [vmem:[%s3082 + $0x370] sm:$0xff]
        %v3129 = vld [vmem:[%s3082 + $0x380] sm:$0xff]
        %v3130 = vld [vmem:[%s3082 + $0x390] sm:$0xff]
        %v3131 = vld [vmem:[%s3082 + $0x3c0] sm:$0xff]
        %v3132 = vld [vmem:[%s3082 + $0x3d0] sm:$0xff]
        %v3133 = vld [vmem:[%s3082 + $0x3e0] sm:$0xff]
        %v3134 = vld [vmem:[%s3082 + $0x3f0] sm:$0xff]
        %v3135 = vld [vmem:[%s3082 + $0x400] sm:$0xff]
        %v3136 = vld [vmem:[%s3082 + $0x410] sm:$0xff]
        %v3137 = vld [vmem:[%s3082 + $0x420] sm:$0xff]
        %v3138 = vld [vmem:[%s3082 + $0x430] sm:$0xff]
        %v3139 = vld [vmem:[%s3082 + $0x460] sm:$0xff]
        %v3140 = vld [vmem:[%s3082 + $0x470] sm:$0xff]
        %v3141 = vld [vmem:[%s3082 + $0x480] sm:$0xff]
        %v3142 = vld [vmem:[%s3082 + $0x490] sm:$0xff]
        %v3143 = vld [vmem:[%s3082 + $0x4a0] sm:$0xff]
        %v3144 = vld [vmem:[%s3082 + $0x4b0] sm:$0xff]
        %v3145 = vld [vmem:[%s3082 + $0x4c0] sm:$0xff]
        %v3146 = vld [vmem:[%s3082 + $0x4d0] sm:$0xff]
        %v3147 = vperm.slane %v176, 7
        %v3148 = vmul.f32 %v3083, %v3147
        %v3149 = vmul.f32 %v3084, %v3147
        %v3150 = vmul.f32 %v3085, %v3147
        %v3151 = vmul.f32 %v3086, %v3147
        %v3152 = vmul.f32 %v3087, %v3147
        %v3153 = vmul.f32 %v3088, %v3147
        %v3154 = vmul.f32 %v3089, %v3147
        %v3155 = vmul.f32 %v3090, %v3147
        %v3156 = vmul.f32 %v3091, %v3147
        %v3157 = vmul.f32 %v3092, %v3147
        %v3158 = vmul.f32 %v3093, %v3147
        %v3159 = vmul.f32 %v3094, %v3147
        %v3160 = vmul.f32 %v3095, %v3147
        %v3161 = vmul.f32 %v3096, %v3147
        %v3162 = vmul.f32 %v3097, %v3147
        %v3163 = vmul.f32 %v3098, %v3147
        %v3164 = vmul.f32 %v3099, %v3147
        %v3165 = vmul.f32 %v3100, %v3147
        %v3166 = vmul.f32 %v3101, %v3147
        %v3167 = vmul.f32 %v3102, %v3147
        %v3168 = vmul.f32 %v3103, %v3147
        %v3169 = vmul.f32 %v3104, %v3147
        %v3170 = vmul.f32 %v3105, %v3147
        %v3171 = vmul.f32 %v3106, %v3147
        %v3172 = vmul.f32 %v3107, %v3147
        %v3173 = vmul.f32 %v3108, %v3147
        %v3174 = vmul.f32 %v3109, %v3147
        %v3175 = vmul.f32 %v3110, %v3147
        %v3176 = vmul.f32 %v3111, %v3147
        %v3177 = vmul.f32 %v3112, %v3147
        %v3178 = vmul.f32 %v3113, %v3147
        %v3179 = vmul.f32 %v3114, %v3147
        %v3180 = vmul.f32 %v3115, %v3147
        %v3181 = vmul.f32 %v3116, %v3147
        %v3182 = vmul.f32 %v3117, %v3147
        %v3183 = vmul.f32 %v3118, %v3147
        %v3184 = vmul.f32 %v3119, %v3147
        %v3185 = vmul.f32 %v3120, %v3147
        %v3186 = vmul.f32 %v3121, %v3147
        %v3187 = vmul.f32 %v3122, %v3147
        %v3188 = vmul.f32 %v3123, %v3147
        %v3189 = vmul.f32 %v3124, %v3147
        %v3190 = vmul.f32 %v3125, %v3147
        %v3191 = vmul.f32 %v3126, %v3147
        %v3192 = vmul.f32 %v3127, %v3147
        %v3193 = vmul.f32 %v3128, %v3147
        %v3194 = vmul.f32 %v3129, %v3147
        %v3195 = vmul.f32 %v3130, %v3147
        %v3196 = vmul.f32 %v3131, %v3147
        %v3197 = vmul.f32 %v3132, %v3147
        %v3198 = vmul.f32 %v3133, %v3147
        %v3199 = vmul.f32 %v3134, %v3147
        %v3200 = vmul.f32 %v3135, %v3147
        %v3201 = vmul.f32 %v3136, %v3147
        %v3202 = vmul.f32 %v3137, %v3147
        %v3203 = vmul.f32 %v3138, %v3147
        %v3204 = vmul.f32 %v3139, %v3147
        %v3205 = vmul.f32 %v3140, %v3147
        %v3206 = vmul.f32 %v3141, %v3147
        %v3207 = vmul.f32 %v3142, %v3147
        %v3208 = vmul.f32 %v3143, %v3147
        %v3209 = vmul.f32 %v3144, %v3147
        %v3210 = vmul.f32 %v3145, %v3147
        %v3211 = vmul.f32 %v3146, %v3147
        %v3212 = vadd.f32 %v3018, %v3148
        %v3213 = vadd.f32 %v3019, %v3149
        %v3214 = vadd.f32 %v3020, %v3150
        %v3215 = vadd.f32 %v3021, %v3151
        %v3216 = vadd.f32 %v3022, %v3152
        %v3217 = vadd.f32 %v3023, %v3153
        %v3218 = vadd.f32 %v3024, %v3154
        %v3219 = vadd.f32 %v3025, %v3155
        %v3220 = vadd.f32 %v3026, %v3156
        %v3221 = vadd.f32 %v3027, %v3157
        %v3222 = vadd.f32 %v3028, %v3158
        %v3223 = vadd.f32 %v3029, %v3159
        %v3224 = vadd.f32 %v3030, %v3160
        %v3225 = vadd.f32 %v3031, %v3161
        %v3226 = vadd.f32 %v3032, %v3162
        %v3227 = vadd.f32 %v3033, %v3163
        %v3228 = vadd.f32 %v3034, %v3164
        %v3229 = vadd.f32 %v3035, %v3165
        %v3230 = vadd.f32 %v3036, %v3166
        %v3231 = vadd.f32 %v3037, %v3167
        %v3232 = vadd.f32 %v3038, %v3168
        %v3233 = vadd.f32 %v3039, %v3169
        %v3234 = vadd.f32 %v3040, %v3170
        %v3235 = vadd.f32 %v3041, %v3171
        %v3236 = vadd.f32 %v3042, %v3172
        %v3237 = vadd.f32 %v3043, %v3173
        %v3238 = vadd.f32 %v3044, %v3174
        %v3239 = vadd.f32 %v3045, %v3175
        %v3240 = vadd.f32 %v3046, %v3176
        %v3241 = vadd.f32 %v3047, %v3177
        %v3242 = vadd.f32 %v3048, %v3178
        %v3243 = vadd.f32 %v3049, %v3179
        %v3244 = vadd.f32 %v3050, %v3180
        %v3245 = vadd.f32 %v3051, %v3181
        %v3246 = vadd.f32 %v3052, %v3182
        %v3247 = vadd.f32 %v3053, %v3183
        %v3248 = vadd.f32 %v3054, %v3184
        %v3249 = vadd.f32 %v3055, %v3185
        %v3250 = vadd.f32 %v3056, %v3186
        %v3251 = vadd.f32 %v3057, %v3187
        %v3252 = vadd.f32 %v3058, %v3188
        %v3253 = vadd.f32 %v3059, %v3189
        %v3254 = vadd.f32 %v3060, %v3190
        %v3255 = vadd.f32 %v3061, %v3191
        %v3256 = vadd.f32 %v3062, %v3192
        %v3257 = vadd.f32 %v3063, %v3193
        %v3258 = vadd.f32 %v3064, %v3194
        %v3259 = vadd.f32 %v3065, %v3195
        %v3260 = vadd.f32 %v3066, %v3196
        %v3261 = vadd.f32 %v3067, %v3197
        %v3262 = vadd.f32 %v3068, %v3198
        %v3263 = vadd.f32 %v3069, %v3199
        %v3264 = vadd.f32 %v3070, %v3200
        %v3265 = vadd.f32 %v3071, %v3201
        %v3266 = vadd.f32 %v3072, %v3202
        %v3267 = vadd.f32 %v3073, %v3203
        %v3268 = vadd.f32 %v3074, %v3204
        %v3269 = vadd.f32 %v3075, %v3205
        %v3270 = vadd.f32 %v3076, %v3206
        %v3271 = vadd.f32 %v3077, %v3207
        %v3272 = vadd.f32 %v3078, %v3208
        %v3273 = vadd.f32 %v3079, %v3209
        %v3274 = vadd.f32 %v3080, %v3210
        %v3275 = vadd.f32 %v3081, %v3211
        %v3276 = vld [vmem:[%s3082 + $0x1] sm:$0xff]
        %v3277 = vld [vmem:[%s3082 + $0x11] sm:$0xff]
        %v3278 = vld [vmem:[%s3082 + $0x21] sm:$0xff]
        %v3279 = vld [vmem:[%s3082 + $0x31] sm:$0xff]
        %v3280 = vld [vmem:[%s3082 + $0x41] sm:$0xff]
        %v3281 = vld [vmem:[%s3082 + $0x51] sm:$0xff]
        %v3282 = vld [vmem:[%s3082 + $0x61] sm:$0xff]
        %v3283 = vld [vmem:[%s3082 + $0x71] sm:$0xff]
        %v3284 = vld [vmem:[%s3082 + $0xa1] sm:$0xff]
        %v3285 = vld [vmem:[%s3082 + $0xb1] sm:$0xff]
        %v3286 = vld [vmem:[%s3082 + $0xc1] sm:$0xff]
        %v3287 = vld [vmem:[%s3082 + $0xd1] sm:$0xff]
        %v3288 = vld [vmem:[%s3082 + $0xe1] sm:$0xff]
        %v3289 = vld [vmem:[%s3082 + $0xf1] sm:$0xff]
        %v3290 = vld [vmem:[%s3082 + $0x101] sm:$0xff]
        %v3291 = vld [vmem:[%s3082 + $0x111] sm:$0xff]
        %v3292 = vld [vmem:[%s3082 + $0x141] sm:$0xff]
        %v3293 = vld [vmem:[%s3082 + $0x151] sm:$0xff]
        %v3294 = vld [vmem:[%s3082 + $0x161] sm:$0xff]
        %v3295 = vld [vmem:[%s3082 + $0x171] sm:$0xff]
        %v3296 = vld [vmem:[%s3082 + $0x181] sm:$0xff]
        %v3297 = vld [vmem:[%s3082 + $0x191] sm:$0xff]
        %v3298 = vld [vmem:[%s3082 + $0x1a1] sm:$0xff]
        %v3299 = vld [vmem:[%s3082 + $0x1b1] sm:$0xff]
        %v3300 = vld [vmem:[%s3082 + $0x1e1] sm:$0xff]
        %v3301 = vld [vmem:[%s3082 + $0x1f1] sm:$0xff]
        %v3302 = vld [vmem:[%s3082 + $0x201] sm:$0xff]
        %v3303 = vld [vmem:[%s3082 + $0x211] sm:$0xff]
        %v3304 = vld [vmem:[%s3082 + $0x221] sm:$0xff]
        %v3305 = vld [vmem:[%s3082 + $0x231] sm:$0xff]
        %v3306 = vld [vmem:[%s3082 + $0x241] sm:$0xff]
        %v3307 = vld [vmem:[%s3082 + $0x251] sm:$0xff]
        %v3308 = vld [vmem:[%s3082 + $0x281] sm:$0xff]
        %v3309 = vld [vmem:[%s3082 + $0x291] sm:$0xff]
        %v3310 = vld [vmem:[%s3082 + $0x2a1] sm:$0xff]
        %v3311 = vld [vmem:[%s3082 + $0x2b1] sm:$0xff]
        %v3312 = vld [vmem:[%s3082 + $0x2c1] sm:$0xff]
        %v3313 = vld [vmem:[%s3082 + $0x2d1] sm:$0xff]
        %v3314 = vld [vmem:[%s3082 + $0x2e1] sm:$0xff]
        %v3315 = vld [vmem:[%s3082 + $0x2f1] sm:$0xff]
        %v3316 = vld [vmem:[%s3082 + $0x321] sm:$0xff]
        %v3317 = vld [vmem:[%s3082 + $0x331] sm:$0xff]
        %v3318 = vld [vmem:[%s3082 + $0x341] sm:$0xff]
        %v3319 = vld [vmem:[%s3082 + $0x351] sm:$0xff]
        %v3320 = vld [vmem:[%s3082 + $0x361] sm:$0xff]
        %v3321 = vld [vmem:[%s3082 + $0x371] sm:$0xff]
        %v3322 = vld [vmem:[%s3082 + $0x381] sm:$0xff]
        %v3323 = vld [vmem:[%s3082 + $0x391] sm:$0xff]
        %v3324 = vld [vmem:[%s3082 + $0x3c1] sm:$0xff]
        %v3325 = vld [vmem:[%s3082 + $0x3d1] sm:$0xff]
        %v3326 = vld [vmem:[%s3082 + $0x3e1] sm:$0xff]
        %v3327 = vld [vmem:[%s3082 + $0x3f1] sm:$0xff]
        %v3328 = vld [vmem:[%s3082 + $0x401] sm:$0xff]
        %v3329 = vld [vmem:[%s3082 + $0x411] sm:$0xff]
        %v3330 = vld [vmem:[%s3082 + $0x421] sm:$0xff]
        %v3331 = vld [vmem:[%s3082 + $0x431] sm:$0xff]
        %v3332 = vld [vmem:[%s3082 + $0x461] sm:$0xff]
        %v3333 = vld [vmem:[%s3082 + $0x471] sm:$0xff]
        %v3334 = vld [vmem:[%s3082 + $0x481] sm:$0xff]
        %v3335 = vld [vmem:[%s3082 + $0x491] sm:$0xff]
        %v3336 = vld [vmem:[%s3082 + $0x4a1] sm:$0xff]
        %v3337 = vld [vmem:[%s3082 + $0x4b1] sm:$0xff]
        %v3338 = vld [vmem:[%s3082 + $0x4c1] sm:$0xff]
        %v3339 = vld [vmem:[%s3082 + $0x4d1] sm:$0xff]
        %v3340 = vperm.slane %v177, 0
        %v3341 = vmul.f32 %v3276, %v3340
        %v3342 = vmul.f32 %v3277, %v3340
        %v3343 = vmul.f32 %v3278, %v3340
        %v3344 = vmul.f32 %v3279, %v3340
        %v3345 = vmul.f32 %v3280, %v3340
        %v3346 = vmul.f32 %v3281, %v3340
        %v3347 = vmul.f32 %v3282, %v3340
        %v3348 = vmul.f32 %v3283, %v3340
        %v3349 = vmul.f32 %v3284, %v3340
        %v3350 = vmul.f32 %v3285, %v3340
        %v3351 = vmul.f32 %v3286, %v3340
        %v3352 = vmul.f32 %v3287, %v3340
        %v3353 = vmul.f32 %v3288, %v3340
        %v3354 = vmul.f32 %v3289, %v3340
        %v3355 = vmul.f32 %v3290, %v3340
        %v3356 = vmul.f32 %v3291, %v3340
        %v3357 = vmul.f32 %v3292, %v3340
        %v3358 = vmul.f32 %v3293, %v3340
        %v3359 = vmul.f32 %v3294, %v3340
        %v3360 = vmul.f32 %v3295, %v3340
        %v3361 = vmul.f32 %v3296, %v3340
        %v3362 = vmul.f32 %v3297, %v3340
        %v3363 = vmul.f32 %v3298, %v3340
        %v3364 = vmul.f32 %v3299, %v3340
        %v3365 = vmul.f32 %v3300, %v3340
        %v3366 = vmul.f32 %v3301, %v3340
        %v3367 = vmul.f32 %v3302, %v3340
        %v3368 = vmul.f32 %v3303, %v3340
        %v3369 = vmul.f32 %v3304, %v3340
        %v3370 = vmul.f32 %v3305, %v3340
        %v3371 = vmul.f32 %v3306, %v3340
        %v3372 = vmul.f32 %v3307, %v3340
        %v3373 = vmul.f32 %v3308, %v3340
        %v3374 = vmul.f32 %v3309, %v3340
        %v3375 = vmul.f32 %v3310, %v3340
        %v3376 = vmul.f32 %v3311, %v3340
        %v3377 = vmul.f32 %v3312, %v3340
        %v3378 = vmul.f32 %v3313, %v3340
        %v3379 = vmul.f32 %v3314, %v3340
        %v3380 = vmul.f32 %v3315, %v3340
        %v3381 = vmul.f32 %v3316, %v3340
        %v3382 = vmul.f32 %v3317, %v3340
        %v3383 = vmul.f32 %v3318, %v3340
        %v3384 = vmul.f32 %v3319, %v3340
        %v3385 = vmul.f32 %v3320, %v3340
        %v3386 = vmul.f32 %v3321, %v3340
        %v3387 = vmul.f32 %v3322, %v3340
        %v3388 = vmul.f32 %v3323, %v3340
        %v3389 = vmul.f32 %v3324, %v3340
        %v3390 = vmul.f32 %v3325, %v3340
        %v3391 = vmul.f32 %v3326, %v3340
        %v3392 = vmul.f32 %v3327, %v3340
        %v3393 = vmul.f32 %v3328, %v3340
        %v3394 = vmul.f32 %v3329, %v3340
        %v3395 = vmul.f32 %v3330, %v3340
        %v3396 = vmul.f32 %v3331, %v3340
        %v3397 = vmul.f32 %v3332, %v3340
        %v3398 = vmul.f32 %v3333, %v3340
        %v3399 = vmul.f32 %v3334, %v3340
        %v3400 = vmul.f32 %v3335, %v3340
        %v3401 = vmul.f32 %v3336, %v3340
        %v3402 = vmul.f32 %v3337, %v3340
        %v3403 = vmul.f32 %v3338, %v3340
        %v3404 = vmul.f32 %v3339, %v3340
        %v3405 = vadd.f32 %v3212, %v3341
        %v3406 = vadd.f32 %v3213, %v3342
        %v3407 = vadd.f32 %v3214, %v3343
        %v3408 = vadd.f32 %v3215, %v3344
        %v3409 = vadd.f32 %v3216, %v3345
        %v3410 = vadd.f32 %v3217, %v3346
        %v3411 = vadd.f32 %v3218, %v3347
        %v3412 = vadd.f32 %v3219, %v3348
        %v3413 = vadd.f32 %v3220, %v3349
        %v3414 = vadd.f32 %v3221, %v3350
        %v3415 = vadd.f32 %v3222, %v3351
        %v3416 = vadd.f32 %v3223, %v3352
        %v3417 = vadd.f32 %v3224, %v3353
        %v3418 = vadd.f32 %v3225, %v3354
        %v3419 = vadd.f32 %v3226, %v3355
        %v3420 = vadd.f32 %v3227, %v3356
        %v3421 = vadd.f32 %v3228, %v3357
        %v3422 = vadd.f32 %v3229, %v3358
        %v3423 = vadd.f32 %v3230, %v3359
        %v3424 = vadd.f32 %v3231, %v3360
        %v3425 = vadd.f32 %v3232, %v3361
        %v3426 = vadd.f32 %v3233, %v3362
        %v3427 = vadd.f32 %v3234, %v3363
        %v3428 = vadd.f32 %v3235, %v3364
        %v3429 = vadd.f32 %v3236, %v3365
        %v3430 = vadd.f32 %v3237, %v3366
        %v3431 = vadd.f32 %v3238, %v3367
        %v3432 = vadd.f32 %v3239, %v3368
        %v3433 = vadd.f32 %v3240, %v3369
        %v3434 = vadd.f32 %v3241, %v3370
        %v3435 = vadd.f32 %v3242, %v3371
        %v3436 = vadd.f32 %v3243, %v3372
        %v3437 = vadd.f32 %v3244, %v3373
        %v3438 = vadd.f32 %v3245, %v3374
        %v3439 = vadd.f32 %v3246, %v3375
        %v3440 = vadd.f32 %v3247, %v3376
        %v3441 = vadd.f32 %v3248, %v3377
        %v3442 = vadd.f32 %v3249, %v3378
        %v3443 = vadd.f32 %v3250, %v3379
        %v3444 = vadd.f32 %v3251, %v3380
        %v3445 = vadd.f32 %v3252, %v3381
        %v3446 = vadd.f32 %v3253, %v3382
        %v3447 = vadd.f32 %v3254, %v3383
        %v3448 = vadd.f32 %v3255, %v3384
        %v3449 = vadd.f32 %v3256, %v3385
        %v3450 = vadd.f32 %v3257, %v3386
        %v3451 = vadd.f32 %v3258, %v3387
        %v3452 = vadd.f32 %v3259, %v3388
        %v3453 = vadd.f32 %v3260, %v3389
        %v3454 = vadd.f32 %v3261, %v3390
        %v3455 = vadd.f32 %v3262, %v3391
        %v3456 = vadd.f32 %v3263, %v3392
        %v3457 = vadd.f32 %v3264, %v3393
        %v3458 = vadd.f32 %v3265, %v3394
        %v3459 = vadd.f32 %v3266, %v3395
        %v3460 = vadd.f32 %v3267, %v3396
        %v3461 = vadd.f32 %v3268, %v3397
        %v3462 = vadd.f32 %v3269, %v3398
        %v3463 = vadd.f32 %v3270, %v3399
        %v3464 = vadd.f32 %v3271, %v3400
        %v3465 = vadd.f32 %v3272, %v3401
        %v3466 = vadd.f32 %v3273, %v3402
        %v3467 = vadd.f32 %v3274, %v3403
        %v3468 = vadd.f32 %v3275, %v3404
        %v3469 = vld [vmem:[%s3082 + $0x2] sm:$0xff]
        %v3470 = vld [vmem:[%s3082 + $0x12] sm:$0xff]
        %v3471 = vld [vmem:[%s3082 + $0x22] sm:$0xff]
        %v3472 = vld [vmem:[%s3082 + $0x32] sm:$0xff]
        %v3473 = vld [vmem:[%s3082 + $0x42] sm:$0xff]
        %v3474 = vld [vmem:[%s3082 + $0x52] sm:$0xff]
        %v3475 = vld [vmem:[%s3082 + $0x62] sm:$0xff]
        %v3476 = vld [vmem:[%s3082 + $0x72] sm:$0xff]
        %v3477 = vld [vmem:[%s3082 + $0xa2] sm:$0xff]
        %v3478 = vld [vmem:[%s3082 + $0xb2] sm:$0xff]
        %v3479 = vld [vmem:[%s3082 + $0xc2] sm:$0xff]
        %v3480 = vld [vmem:[%s3082 + $0xd2] sm:$0xff]
        %v3481 = vld [vmem:[%s3082 + $0xe2] sm:$0xff]
        %v3482 = vld [vmem:[%s3082 + $0xf2] sm:$0xff]
        %v3483 = vld [vmem:[%s3082 + $0x102] sm:$0xff]
        %v3484 = vld [vmem:[%s3082 + $0x112] sm:$0xff]
        %v3485 = vld [vmem:[%s3082 + $0x142] sm:$0xff]
        %v3486 = vld [vmem:[%s3082 + $0x152] sm:$0xff]
        %v3487 = vld [vmem:[%s3082 + $0x162] sm:$0xff]
        %v3488 = vld [vmem:[%s3082 + $0x172] sm:$0xff]
        %v3489 = vld [vmem:[%s3082 + $0x182] sm:$0xff]
        %v3490 = vld [vmem:[%s3082 + $0x192] sm:$0xff]
        %v3491 = vld [vmem:[%s3082 + $0x1a2] sm:$0xff]
        %v3492 = vld [vmem:[%s3082 + $0x1b2] sm:$0xff]
        %v3493 = vld [vmem:[%s3082 + $0x1e2] sm:$0xff]
        %v3494 = vld [vmem:[%s3082 + $0x1f2] sm:$0xff]
        %v3495 = vld [vmem:[%s3082 + $0x202] sm:$0xff]
        %v3496 = vld [vmem:[%s3082 + $0x212] sm:$0xff]
        %v3497 = vld [vmem:[%s3082 + $0x222] sm:$0xff]
        %v3498 = vld [vmem:[%s3082 + $0x232] sm:$0xff]
        %v3499 = vld [vmem:[%s3082 + $0x242] sm:$0xff]
        %v3500 = vld [vmem:[%s3082 + $0x252] sm:$0xff]
        %v3501 = vld [vmem:[%s3082 + $0x282] sm:$0xff]
        %v3502 = vld [vmem:[%s3082 + $0x292] sm:$0xff]
        %v3503 = vld [vmem:[%s3082 + $0x2a2] sm:$0xff]
        %v3504 = vld [vmem:[%s3082 + $0x2b2] sm:$0xff]
        %v3505 = vld [vmem:[%s3082 + $0x2c2] sm:$0xff]
        %v3506 = vld [vmem:[%s3082 + $0x2d2] sm:$0xff]
        %v3507 = vld [vmem:[%s3082 + $0x2e2] sm:$0xff]
        %v3508 = vld [vmem:[%s3082 + $0x2f2] sm:$0xff]
        %v3509 = vld [vmem:[%s3082 + $0x322] sm:$0xff]
        %v3510 = vld [vmem:[%s3082 + $0x332] sm:$0xff]
        %v3511 = vld [vmem:[%s3082 + $0x342] sm:$0xff]
        %v3512 = vld [vmem:[%s3082 + $0x352] sm:$0xff]
        %v3513 = vld [vmem:[%s3082 + $0x362] sm:$0xff]
        %v3514 = vld [vmem:[%s3082 + $0x372] sm:$0xff]
        %v3515 = vld [vmem:[%s3082 + $0x382] sm:$0xff]
        %v3516 = vld [vmem:[%s3082 + $0x392] sm:$0xff]
        %v3517 = vld [vmem:[%s3082 + $0x3c2] sm:$0xff]
        %v3518 = vld [vmem:[%s3082 + $0x3d2] sm:$0xff]
        %v3519 = vld [vmem:[%s3082 + $0x3e2] sm:$0xff]
        %v3520 = vld [vmem:[%s3082 + $0x3f2] sm:$0xff]
        %v3521 = vld [vmem:[%s3082 + $0x402] sm:$0xff]
        %v3522 = vld [vmem:[%s3082 + $0x412] sm:$0xff]
        %v3523 = vld [vmem:[%s3082 + $0x422] sm:$0xff]
        %v3524 = vld [vmem:[%s3082 + $0x432] sm:$0xff]
        %v3525 = vld [vmem:[%s3082 + $0x462] sm:$0xff]
        %v3526 = vld [vmem:[%s3082 + $0x472] sm:$0xff]
        %v3527 = vld [vmem:[%s3082 + $0x482] sm:$0xff]
        %v3528 = vld [vmem:[%s3082 + $0x492] sm:$0xff]
        %v3529 = vld [vmem:[%s3082 + $0x4a2] sm:$0xff]
        %v3530 = vld [vmem:[%s3082 + $0x4b2] sm:$0xff]
        %v3531 = vld [vmem:[%s3082 + $0x4c2] sm:$0xff]
        %v3532 = vld [vmem:[%s3082 + $0x4d2] sm:$0xff]
        %v3533 = vperm.slane %v177, 1
        %v3534 = vmul.f32 %v3469, %v3533
        %v3535 = vmul.f32 %v3470, %v3533
        %v3536 = vmul.f32 %v3471, %v3533
        %v3537 = vmul.f32 %v3472, %v3533
        %v3538 = vmul.f32 %v3473, %v3533
        %v3539 = vmul.f32 %v3474, %v3533
        %v3540 = vmul.f32 %v3475, %v3533
        %v3541 = vmul.f32 %v3476, %v3533
        %v3542 = vmul.f32 %v3477, %v3533
        %v3543 = vmul.f32 %v3478, %v3533
        %v3544 = vmul.f32 %v3479, %v3533
        %v3545 = vmul.f32 %v3480, %v3533
        %v3546 = vmul.f32 %v3481, %v3533
        %v3547 = vmul.f32 %v3482, %v3533
        %v3548 = vmul.f32 %v3483, %v3533
        %v3549 = vmul.f32 %v3484, %v3533
        %v3550 = vmul.f32 %v3485, %v3533
        %v3551 = vmul.f32 %v3486, %v3533
        %v3552 = vmul.f32 %v3487, %v3533
        %v3553 = vmul.f32 %v3488, %v3533
        %v3554 = vmul.f32 %v3489, %v3533
        %v3555 = vmul.f32 %v3490, %v3533
        %v3556 = vmul.f32 %v3491, %v3533
        %v3557 = vmul.f32 %v3492, %v3533
        %v3558 = vmul.f32 %v3493, %v3533
        %v3559 = vmul.f32 %v3494, %v3533
        %v3560 = vmul.f32 %v3495, %v3533
        %v3561 = vmul.f32 %v3496, %v3533
        %v3562 = vmul.f32 %v3497, %v3533
        %v3563 = vmul.f32 %v3498, %v3533
        %v3564 = vmul.f32 %v3499, %v3533
        %v3565 = vmul.f32 %v3500, %v3533
        %v3566 = vmul.f32 %v3501, %v3533
        %v3567 = vmul.f32 %v3502, %v3533
        %v3568 = vmul.f32 %v3503, %v3533
        %v3569 = vmul.f32 %v3504, %v3533
        %v3570 = vmul.f32 %v3505, %v3533
        %v3571 = vmul.f32 %v3506, %v3533
        %v3572 = vmul.f32 %v3507, %v3533
        %v3573 = vmul.f32 %v3508, %v3533
        %v3574 = vmul.f32 %v3509, %v3533
        %v3575 = vmul.f32 %v3510, %v3533
        %v3576 = vmul.f32 %v3511, %v3533
        %v3577 = vmul.f32 %v3512, %v3533
        %v3578 = vmul.f32 %v3513, %v3533
        %v3579 = vmul.f32 %v3514, %v3533
        %v3580 = vmul.f32 %v3515, %v3533
        %v3581 = vmul.f32 %v3516, %v3533
        %v3582 = vmul.f32 %v3517, %v3533
        %v3583 = vmul.f32 %v3518, %v3533
        %v3584 = vmul.f32 %v3519, %v3533
        %v3585 = vmul.f32 %v3520, %v3533
        %v3586 = vmul.f32 %v3521, %v3533
        %v3587 = vmul.f32 %v3522, %v3533
        %v3588 = vmul.f32 %v3523, %v3533
        %v3589 = vmul.f32 %v3524, %v3533
        %v3590 = vmul.f32 %v3525, %v3533
        %v3591 = vmul.f32 %v3526, %v3533
        %v3592 = vmul.f32 %v3527, %v3533
        %v3593 = vmul.f32 %v3528, %v3533
        %v3594 = vmul.f32 %v3529, %v3533
        %v3595 = vmul.f32 %v3530, %v3533
        %v3596 = vmul.f32 %v3531, %v3533
        %v3597 = vmul.f32 %v3532, %v3533
        %v3598 = vadd.f32 %v3405, %v3534
        %v3599 = vadd.f32 %v3406, %v3535
        %v3600 = vadd.f32 %v3407, %v3536
        %v3601 = vadd.f32 %v3408, %v3537
        %v3602 = vadd.f32 %v3409, %v3538
        %v3603 = vadd.f32 %v3410, %v3539
        %v3604 = vadd.f32 %v3411, %v3540
        %v3605 = vadd.f32 %v3412, %v3541
        %v3606 = vadd.f32 %v3413, %v3542
        %v3607 = vadd.f32 %v3414, %v3543
        %v3608 = vadd.f32 %v3415, %v3544
        %v3609 = vadd.f32 %v3416, %v3545
        %v3610 = vadd.f32 %v3417, %v3546
        %v3611 = vadd.f32 %v3418, %v3547
        %v3612 = vadd.f32 %v3419, %v3548
        %v3613 = vadd.f32 %v3420, %v3549
        %v3614 = vadd.f32 %v3421, %v3550
        %v3615 = vadd.f32 %v3422, %v3551
        %v3616 = vadd.f32 %v3423, %v3552
        %v3617 = vadd.f32 %v3424, %v3553
        %v3618 = vadd.f32 %v3425, %v3554
        %v3619 = vadd.f32 %v3426, %v3555
        %v3620 = vadd.f32 %v3427, %v3556
        %v3621 = vadd.f32 %v3428, %v3557
        %v3622 = vadd.f32 %v3429, %v3558
        %v3623 = vadd.f32 %v3430, %v3559
        %v3624 = vadd.f32 %v3431, %v3560
        %v3625 = vadd.f32 %v3432, %v3561
        %v3626 = vadd.f32 %v3433, %v3562
        %v3627 = vadd.f32 %v3434, %v3563
        %v3628 = vadd.f32 %v3435, %v3564
        %v3629 = vadd.f32 %v3436, %v3565
        %v3630 = vadd.f32 %v3437, %v3566
        %v3631 = vadd.f32 %v3438, %v3567
        %v3632 = vadd.f32 %v3439, %v3568
        %v3633 = vadd.f32 %v3440, %v3569
        %v3634 = vadd.f32 %v3441, %v3570
        %v3635 = vadd.f32 %v3442, %v3571
        %v3636 = vadd.f32 %v3443, %v3572
        %v3637 = vadd.f32 %v3444, %v3573
        %v3638 = vadd.f32 %v3445, %v3574
        %v3639 = vadd.f32 %v3446, %v3575
        %v3640 = vadd.f32 %v3447, %v3576
        %v3641 = vadd.f32 %v3448, %v3577
        %v3642 = vadd.f32 %v3449, %v3578
        %v3643 = vadd.f32 %v3450, %v3579
        %v3644 = vadd.f32 %v3451, %v3580
        %v3645 = vadd.f32 %v3452, %v3581
        %v3646 = vadd.f32 %v3453, %v3582
        %v3647 = vadd.f32 %v3454, %v3583
        %v3648 = vadd.f32 %v3455, %v3584
        %v3649 = vadd.f32 %v3456, %v3585
        %v3650 = vadd.f32 %v3457, %v3586
        %v3651 = vadd.f32 %v3458, %v3587
        %v3652 = vadd.f32 %v3459, %v3588
        %v3653 = vadd.f32 %v3460, %v3589
        %v3654 = vadd.f32 %v3461, %v3590
        %v3655 = vadd.f32 %v3462, %v3591
        %v3656 = vadd.f32 %v3463, %v3592
        %v3657 = vadd.f32 %v3464, %v3593
        %v3658 = vadd.f32 %v3465, %v3594
        %v3659 = vadd.f32 %v3466, %v3595
        %v3660 = vadd.f32 %v3467, %v3596
        %v3661 = vadd.f32 %v3468, %v3597
        %s3662 = scalar_lea.vmem %s172, 320
        %v3663 = vld [vmem:[%s3662] sm:$0xff]
        %v3664 = vld [vmem:[%s3662 + $0x10] sm:$0xff]
        %v3665 = vld [vmem:[%s3662 + $0x20] sm:$0xff]
        %v3666 = vld [vmem:[%s3662 + $0x30] sm:$0xff]
        %v3667 = vld [vmem:[%s3662 + $0x40] sm:$0xff]
        %v3668 = vld [vmem:[%s3662 + $0x50] sm:$0xff]
        %v3669 = vld [vmem:[%s3662 + $0x60] sm:$0xff]
        %v3670 = vld [vmem:[%s3662 + $0x70] sm:$0xff]
        %v3671 = vld [vmem:[%s3662 + $0xa0] sm:$0xff]
        %v3672 = vld [vmem:[%s3662 + $0xb0] sm:$0xff]
        %v3673 = vld [vmem:[%s3662 + $0xc0] sm:$0xff]
        %v3674 = vld [vmem:[%s3662 + $0xd0] sm:$0xff]
        %v3675 = vld [vmem:[%s3662 + $0xe0] sm:$0xff]
        %v3676 = vld [vmem:[%s3662 + $0xf0] sm:$0xff]
        %v3677 = vld [vmem:[%s3662 + $0x100] sm:$0xff]
        %v3678 = vld [vmem:[%s3662 + $0x110] sm:$0xff]
        %v3679 = vld [vmem:[%s3662 + $0x140] sm:$0xff]
        %v3680 = vld [vmem:[%s3662 + $0x150] sm:$0xff]
        %v3681 = vld [vmem:[%s3662 + $0x160] sm:$0xff]
        %v3682 = vld [vmem:[%s3662 + $0x170] sm:$0xff]
        %v3683 = vld [vmem:[%s3662 + $0x180] sm:$0xff]
        %v3684 = vld [vmem:[%s3662 + $0x190] sm:$0xff]
        %v3685 = vld [vmem:[%s3662 + $0x1a0] sm:$0xff]
        %v3686 = vld [vmem:[%s3662 + $0x1b0] sm:$0xff]
        %v3687 = vld [vmem:[%s3662 + $0x1e0] sm:$0xff]
        %v3688 = vld [vmem:[%s3662 + $0x1f0] sm:$0xff]
        %v3689 = vld [vmem:[%s3662 + $0x200] sm:$0xff]
        %v3690 = vld [vmem:[%s3662 + $0x210] sm:$0xff]
        %v3691 = vld [vmem:[%s3662 + $0x220] sm:$0xff]
        %v3692 = vld [vmem:[%s3662 + $0x230] sm:$0xff]
        %v3693 = vld [vmem:[%s3662 + $0x240] sm:$0xff]
        %v3694 = vld [vmem:[%s3662 + $0x250] sm:$0xff]
        %v3695 = vld [vmem:[%s3662 + $0x280] sm:$0xff]
        %v3696 = vld [vmem:[%s3662 + $0x290] sm:$0xff]
        %v3697 = vld [vmem:[%s3662 + $0x2a0] sm:$0xff]
        %v3698 = vld [vmem:[%s3662 + $0x2b0] sm:$0xff]
        %v3699 = vld [vmem:[%s3662 + $0x2c0] sm:$0xff]
        %v3700 = vld [vmem:[%s3662 + $0x2d0] sm:$0xff]
        %v3701 = vld [vmem:[%s3662 + $0x2e0] sm:$0xff]
        %v3702 = vld [vmem:[%s3662 + $0x2f0] sm:$0xff]
        %v3703 = vld [vmem:[%s3662 + $0x320] sm:$0xff]
        %v3704 = vld [vmem:[%s3662 + $0x330] sm:$0xff]
        %v3705 = vld [vmem:[%s3662 + $0x340] sm:$0xff]
        %v3706 = vld [vmem:[%s3662 + $0x350] sm:$0xff]
        %v3707 = vld [vmem:[%s3662 + $0x360] sm:$0xff]
        %v3708 = vld [vmem:[%s3662 + $0x370] sm:$0xff]
        %v3709 = vld [vmem:[%s3662 + $0x380] sm:$0xff]
        %v3710 = vld [vmem:[%s3662 + $0x390] sm:$0xff]
        %v3711 = vld [vmem:[%s3662 + $0x3c0] sm:$0xff]
        %v3712 = vld [vmem:[%s3662 + $0x3d0] sm:$0xff]
        %v3713 = vld [vmem:[%s3662 + $0x3e0] sm:$0xff]
        %v3714 = vld [vmem:[%s3662 + $0x3f0] sm:$0xff]
        %v3715 = vld [vmem:[%s3662 + $0x400] sm:$0xff]
        %v3716 = vld [vmem:[%s3662 + $0x410] sm:$0xff]
        %v3717 = vld [vmem:[%s3662 + $0x420] sm:$0xff]
        %v3718 = vld [vmem:[%s3662 + $0x430] sm:$0xff]
        %v3719 = vld [vmem:[%s3662 + $0x460] sm:$0xff]
        %v3720 = vld [vmem:[%s3662 + $0x470] sm:$0xff]
        %v3721 = vld [vmem:[%s3662 + $0x480] sm:$0xff]
        %v3722 = vld [vmem:[%s3662 + $0x490] sm:$0xff]
        %v3723 = vld [vmem:[%s3662 + $0x4a0] sm:$0xff]
        %v3724 = vld [vmem:[%s3662 + $0x4b0] sm:$0xff]
        %v3725 = vld [vmem:[%s3662 + $0x4c0] sm:$0xff]
        %v3726 = vld [vmem:[%s3662 + $0x4d0] sm:$0xff]
        %v3727 = vperm.slane %v177, 2
        %v3728 = vmul.f32 %v3663, %v3727
        %v3729 = vmul.f32 %v3664, %v3727
        %v3730 = vmul.f32 %v3665, %v3727
        %v3731 = vmul.f32 %v3666, %v3727
        %v3732 = vmul.f32 %v3667, %v3727
        %v3733 = vmul.f32 %v3668, %v3727
        %v3734 = vmul.f32 %v3669, %v3727
        %v3735 = vmul.f32 %v3670, %v3727
        %v3736 = vmul.f32 %v3671, %v3727
        %v3737 = vmul.f32 %v3672, %v3727
        %v3738 = vmul.f32 %v3673, %v3727
        %v3739 = vmul.f32 %v3674, %v3727
        %v3740 = vmul.f32 %v3675, %v3727
        %v3741 = vmul.f32 %v3676, %v3727
        %v3742 = vmul.f32 %v3677, %v3727
        %v3743 = vmul.f32 %v3678, %v3727
        %v3744 = vmul.f32 %v3679, %v3727
        %v3745 = vmul.f32 %v3680, %v3727
        %v3746 = vmul.f32 %v3681, %v3727
        %v3747 = vmul.f32 %v3682, %v3727
        %v3748 = vmul.f32 %v3683, %v3727
        %v3749 = vmul.f32 %v3684, %v3727
        %v3750 = vmul.f32 %v3685, %v3727
        %v3751 = vmul.f32 %v3686, %v3727
        %v3752 = vmul.f32 %v3687, %v3727
        %v3753 = vmul.f32 %v3688, %v3727
        %v3754 = vmul.f32 %v3689, %v3727
        %v3755 = vmul.f32 %v3690, %v3727
        %v3756 = vmul.f32 %v3691, %v3727
        %v3757 = vmul.f32 %v3692, %v3727
        %v3758 = vmul.f32 %v3693, %v3727
        %v3759 = vmul.f32 %v3694, %v3727
        %v3760 = vmul.f32 %v3695, %v3727
        %v3761 = vmul.f32 %v3696, %v3727
        %v3762 = vmul.f32 %v3697, %v3727
        %v3763 = vmul.f32 %v3698, %v3727
        %v3764 = vmul.f32 %v3699, %v3727
        %v3765 = vmul.f32 %v3700, %v3727
        %v3766 = vmul.f32 %v3701, %v3727
        %v3767 = vmul.f32 %v3702, %v3727
        %v3768 = vmul.f32 %v3703, %v3727
        %v3769 = vmul.f32 %v3704, %v3727
        %v3770 = vmul.f32 %v3705, %v3727
        %v3771 = vmul.f32 %v3706, %v3727
        %v3772 = vmul.f32 %v3707, %v3727
        %v3773 = vmul.f32 %v3708, %v3727
        %v3774 = vmul.f32 %v3709, %v3727
        %v3775 = vmul.f32 %v3710, %v3727
        %v3776 = vmul.f32 %v3711, %v3727
        %v3777 = vmul.f32 %v3712, %v3727
        %v3778 = vmul.f32 %v3713, %v3727
        %v3779 = vmul.f32 %v3714, %v3727
        %v3780 = vmul.f32 %v3715, %v3727
        %v3781 = vmul.f32 %v3716, %v3727
        %v3782 = vmul.f32 %v3717, %v3727
        %v3783 = vmul.f32 %v3718, %v3727
        %v3784 = vmul.f32 %v3719, %v3727
        %v3785 = vmul.f32 %v3720, %v3727
        %v3786 = vmul.f32 %v3721, %v3727
        %v3787 = vmul.f32 %v3722, %v3727
        %v3788 = vmul.f32 %v3723, %v3727
        %v3789 = vmul.f32 %v3724, %v3727
        %v3790 = vmul.f32 %v3725, %v3727
        %v3791 = vmul.f32 %v3726, %v3727
        %v3792 = vadd.f32 %v3598, %v3728
        %v3793 = vadd.f32 %v3599, %v3729
        %v3794 = vadd.f32 %v3600, %v3730
        %v3795 = vadd.f32 %v3601, %v3731
        %v3796 = vadd.f32 %v3602, %v3732
        %v3797 = vadd.f32 %v3603, %v3733
        %v3798 = vadd.f32 %v3604, %v3734
        %v3799 = vadd.f32 %v3605, %v3735
        %v3800 = vadd.f32 %v3606, %v3736
        %v3801 = vadd.f32 %v3607, %v3737
        %v3802 = vadd.f32 %v3608, %v3738
        %v3803 = vadd.f32 %v3609, %v3739
        %v3804 = vadd.f32 %v3610, %v3740
        %v3805 = vadd.f32 %v3611, %v3741
        %v3806 = vadd.f32 %v3612, %v3742
        %v3807 = vadd.f32 %v3613, %v3743
        %v3808 = vadd.f32 %v3614, %v3744
        %v3809 = vadd.f32 %v3615, %v3745
        %v3810 = vadd.f32 %v3616, %v3746
        %v3811 = vadd.f32 %v3617, %v3747
        %v3812 = vadd.f32 %v3618, %v3748
        %v3813 = vadd.f32 %v3619, %v3749
        %v3814 = vadd.f32 %v3620, %v3750
        %v3815 = vadd.f32 %v3621, %v3751
        %v3816 = vadd.f32 %v3622, %v3752
        %v3817 = vadd.f32 %v3623, %v3753
        %v3818 = vadd.f32 %v3624, %v3754
        %v3819 = vadd.f32 %v3625, %v3755
        %v3820 = vadd.f32 %v3626, %v3756
        %v3821 = vadd.f32 %v3627, %v3757
        %v3822 = vadd.f32 %v3628, %v3758
        %v3823 = vadd.f32 %v3629, %v3759
        %v3824 = vadd.f32 %v3630, %v3760
        %v3825 = vadd.f32 %v3631, %v3761
        %v3826 = vadd.f32 %v3632, %v3762
        %v3827 = vadd.f32 %v3633, %v3763
        %v3828 = vadd.f32 %v3634, %v3764
        %v3829 = vadd.f32 %v3635, %v3765
        %v3830 = vadd.f32 %v3636, %v3766
        %v3831 = vadd.f32 %v3637, %v3767
        %v3832 = vadd.f32 %v3638, %v3768
        %v3833 = vadd.f32 %v3639, %v3769
        %v3834 = vadd.f32 %v3640, %v3770
        %v3835 = vadd.f32 %v3641, %v3771
        %v3836 = vadd.f32 %v3642, %v3772
        %v3837 = vadd.f32 %v3643, %v3773
        %v3838 = vadd.f32 %v3644, %v3774
        %v3839 = vadd.f32 %v3645, %v3775
        %v3840 = vadd.f32 %v3646, %v3776
        %v3841 = vadd.f32 %v3647, %v3777
        %v3842 = vadd.f32 %v3648, %v3778
        %v3843 = vadd.f32 %v3649, %v3779
        %v3844 = vadd.f32 %v3650, %v3780
        %v3845 = vadd.f32 %v3651, %v3781
        %v3846 = vadd.f32 %v3652, %v3782
        %v3847 = vadd.f32 %v3653, %v3783
        %v3848 = vadd.f32 %v3654, %v3784
        %v3849 = vadd.f32 %v3655, %v3785
        %v3850 = vadd.f32 %v3656, %v3786
        %v3851 = vadd.f32 %v3657, %v3787
        %v3852 = vadd.f32 %v3658, %v3788
        %v3853 = vadd.f32 %v3659, %v3789
        %v3854 = vadd.f32 %v3660, %v3790
        %v3855 = vadd.f32 %v3661, %v3791
        %v3856 = vld [vmem:[%s3662 + $0x1] sm:$0xff]
        %v3857 = vld [vmem:[%s3662 + $0x11] sm:$0xff]
        %v3858 = vld [vmem:[%s3662 + $0x21] sm:$0xff]
        %v3859 = vld [vmem:[%s3662 + $0x31] sm:$0xff]
        %v3860 = vld [vmem:[%s3662 + $0x41] sm:$0xff]
        %v3861 = vld [vmem:[%s3662 + $0x51] sm:$0xff]
        %v3862 = vld [vmem:[%s3662 + $0x61] sm:$0xff]
        %v3863 = vld [vmem:[%s3662 + $0x71] sm:$0xff]
        %v3864 = vld [vmem:[%s3662 + $0xa1] sm:$0xff]
        %v3865 = vld [vmem:[%s3662 + $0xb1] sm:$0xff]
        %v3866 = vld [vmem:[%s3662 + $0xc1] sm:$0xff]
        %v3867 = vld [vmem:[%s3662 + $0xd1] sm:$0xff]
        %v3868 = vld [vmem:[%s3662 + $0xe1] sm:$0xff]
        %v3869 = vld [vmem:[%s3662 + $0xf1] sm:$0xff]
        %v3870 = vld [vmem:[%s3662 + $0x101] sm:$0xff]
        %v3871 = vld [vmem:[%s3662 + $0x111] sm:$0xff]
        %v3872 = vld [vmem:[%s3662 + $0x141] sm:$0xff]
        %v3873 = vld [vmem:[%s3662 + $0x151] sm:$0xff]
        %v3874 = vld [vmem:[%s3662 + $0x161] sm:$0xff]
        %v3875 = vld [vmem:[%s3662 + $0x171] sm:$0xff]
        %v3876 = vld [vmem:[%s3662 + $0x181] sm:$0xff]
        %v3877 = vld [vmem:[%s3662 + $0x191] sm:$0xff]
        %v3878 = vld [vmem:[%s3662 + $0x1a1] sm:$0xff]
        %v3879 = vld [vmem:[%s3662 + $0x1b1] sm:$0xff]
        %v3880 = vld [vmem:[%s3662 + $0x1e1] sm:$0xff]
        %v3881 = vld [vmem:[%s3662 + $0x1f1] sm:$0xff]
        %v3882 = vld [vmem:[%s3662 + $0x201] sm:$0xff]
        %v3883 = vld [vmem:[%s3662 + $0x211] sm:$0xff]
        %v3884 = vld [vmem:[%s3662 + $0x221] sm:$0xff]
        %v3885 = vld [vmem:[%s3662 + $0x231] sm:$0xff]
        %v3886 = vld [vmem:[%s3662 + $0x241] sm:$0xff]
        %v3887 = vld [vmem:[%s3662 + $0x251] sm:$0xff]
        %v3888 = vld [vmem:[%s3662 + $0x281] sm:$0xff]
        %v3889 = vld [vmem:[%s3662 + $0x291] sm:$0xff]
        %v3890 = vld [vmem:[%s3662 + $0x2a1] sm:$0xff]
        %v3891 = vld [vmem:[%s3662 + $0x2b1] sm:$0xff]
        %v3892 = vld [vmem:[%s3662 + $0x2c1] sm:$0xff]
        %v3893 = vld [vmem:[%s3662 + $0x2d1] sm:$0xff]
        %v3894 = vld [vmem:[%s3662 + $0x2e1] sm:$0xff]
        %v3895 = vld [vmem:[%s3662 + $0x2f1] sm:$0xff]
        %v3896 = vld [vmem:[%s3662 + $0x321] sm:$0xff]
        %v3897 = vld [vmem:[%s3662 + $0x331] sm:$0xff]
        %v3898 = vld [vmem:[%s3662 + $0x341] sm:$0xff]
        %v3899 = vld [vmem:[%s3662 + $0x351] sm:$0xff]
        %v3900 = vld [vmem:[%s3662 + $0x361] sm:$0xff]
        %v3901 = vld [vmem:[%s3662 + $0x371] sm:$0xff]
        %v3902 = vld [vmem:[%s3662 + $0x381] sm:$0xff]
        %v3903 = vld [vmem:[%s3662 + $0x391] sm:$0xff]
        %v3904 = vld [vmem:[%s3662 + $0x3c1] sm:$0xff]
        %v3905 = vld [vmem:[%s3662 + $0x3d1] sm:$0xff]
        %v3906 = vld [vmem:[%s3662 + $0x3e1] sm:$0xff]
        %v3907 = vld [vmem:[%s3662 + $0x3f1] sm:$0xff]
        %v3908 = vld [vmem:[%s3662 + $0x401] sm:$0xff]
        %v3909 = vld [vmem:[%s3662 + $0x411] sm:$0xff]
        %v3910 = vld [vmem:[%s3662 + $0x421] sm:$0xff]
        %v3911 = vld [vmem:[%s3662 + $0x431] sm:$0xff]
        %v3912 = vld [vmem:[%s3662 + $0x461] sm:$0xff]
        %v3913 = vld [vmem:[%s3662 + $0x471] sm:$0xff]
        %v3914 = vld [vmem:[%s3662 + $0x481] sm:$0xff]
        %v3915 = vld [vmem:[%s3662 + $0x491] sm:$0xff]
        %v3916 = vld [vmem:[%s3662 + $0x4a1] sm:$0xff]
        %v3917 = vld [vmem:[%s3662 + $0x4b1] sm:$0xff]
        %v3918 = vld [vmem:[%s3662 + $0x4c1] sm:$0xff]
        %v3919 = vld [vmem:[%s3662 + $0x4d1] sm:$0xff]
        %v3920 = vperm.slane %v177, 3
        %v3921 = vmul.f32 %v3856, %v3920
        %v3922 = vmul.f32 %v3857, %v3920
        %v3923 = vmul.f32 %v3858, %v3920
        %v3924 = vmul.f32 %v3859, %v3920
        %v3925 = vmul.f32 %v3860, %v3920
        %v3926 = vmul.f32 %v3861, %v3920
        %v3927 = vmul.f32 %v3862, %v3920
        %v3928 = vmul.f32 %v3863, %v3920
        %v3929 = vmul.f32 %v3864, %v3920
        %v3930 = vmul.f32 %v3865, %v3920
        %v3931 = vmul.f32 %v3866, %v3920
        %v3932 = vmul.f32 %v3867, %v3920
        %v3933 = vmul.f32 %v3868, %v3920
        %v3934 = vmul.f32 %v3869, %v3920
        %v3935 = vmul.f32 %v3870, %v3920
        %v3936 = vmul.f32 %v3871, %v3920
        %v3937 = vmul.f32 %v3872, %v3920
        %v3938 = vmul.f32 %v3873, %v3920
        %v3939 = vmul.f32 %v3874, %v3920
        %v3940 = vmul.f32 %v3875, %v3920
        %v3941 = vmul.f32 %v3876, %v3920
        %v3942 = vmul.f32 %v3877, %v3920
        %v3943 = vmul.f32 %v3878, %v3920
        %v3944 = vmul.f32 %v3879, %v3920
        %v3945 = vmul.f32 %v3880, %v3920
        %v3946 = vmul.f32 %v3881, %v3920
        %v3947 = vmul.f32 %v3882, %v3920
        %v3948 = vmul.f32 %v3883, %v3920
        %v3949 = vmul.f32 %v3884, %v3920
        %v3950 = vmul.f32 %v3885, %v3920
        %v3951 = vmul.f32 %v3886, %v3920
        %v3952 = vmul.f32 %v3887, %v3920
        %v3953 = vmul.f32 %v3888, %v3920
        %v3954 = vmul.f32 %v3889, %v3920
        %v3955 = vmul.f32 %v3890, %v3920
        %v3956 = vmul.f32 %v3891, %v3920
        %v3957 = vmul.f32 %v3892, %v3920
        %v3958 = vmul.f32 %v3893, %v3920
        %v3959 = vmul.f32 %v3894, %v3920
        %v3960 = vmul.f32 %v3895, %v3920
        %v3961 = vmul.f32 %v3896, %v3920
        %v3962 = vmul.f32 %v3897, %v3920
        %v3963 = vmul.f32 %v3898, %v3920
        %v3964 = vmul.f32 %v3899, %v3920
        %v3965 = vmul.f32 %v3900, %v3920
        %v3966 = vmul.f32 %v3901, %v3920
        %v3967 = vmul.f32 %v3902, %v3920
        %v3968 = vmul.f32 %v3903, %v3920
        %v3969 = vmul.f32 %v3904, %v3920
        %v3970 = vmul.f32 %v3905, %v3920
        %v3971 = vmul.f32 %v3906, %v3920
        %v3972 = vmul.f32 %v3907, %v3920
        %v3973 = vmul.f32 %v3908, %v3920
        %v3974 = vmul.f32 %v3909, %v3920
        %v3975 = vmul.f32 %v3910, %v3920
        %v3976 = vmul.f32 %v3911, %v3920
        %v3977 = vmul.f32 %v3912, %v3920
        %v3978 = vmul.f32 %v3913, %v3920
        %v3979 = vmul.f32 %v3914, %v3920
        %v3980 = vmul.f32 %v3915, %v3920
        %v3981 = vmul.f32 %v3916, %v3920
        %v3982 = vmul.f32 %v3917, %v3920
        %v3983 = vmul.f32 %v3918, %v3920
        %v3984 = vmul.f32 %v3919, %v3920
        %v3985 = vadd.f32 %v3792, %v3921
        %v3986 = vadd.f32 %v3793, %v3922
        %v3987 = vadd.f32 %v3794, %v3923
        %v3988 = vadd.f32 %v3795, %v3924
        %v3989 = vadd.f32 %v3796, %v3925
        %v3990 = vadd.f32 %v3797, %v3926
        %v3991 = vadd.f32 %v3798, %v3927
        %v3992 = vadd.f32 %v3799, %v3928
        %v3993 = vadd.f32 %v3800, %v3929
        %v3994 = vadd.f32 %v3801, %v3930
        %v3995 = vadd.f32 %v3802, %v3931
        %v3996 = vadd.f32 %v3803, %v3932
        %v3997 = vadd.f32 %v3804, %v3933
        %v3998 = vadd.f32 %v3805, %v3934
        %v3999 = vadd.f32 %v3806, %v3935
        %v4000 = vadd.f32 %v3807, %v3936
        %v4001 = vadd.f32 %v3808, %v3937
        %v4002 = vadd.f32 %v3809, %v3938
        %v4003 = vadd.f32 %v3810, %v3939
        %v4004 = vadd.f32 %v3811, %v3940
        %v4005 = vadd.f32 %v3812, %v3941
        %v4006 = vadd.f32 %v3813, %v3942
        %v4007 = vadd.f32 %v3814, %v3943
        %v4008 = vadd.f32 %v3815, %v3944
        %v4009 = vadd.f32 %v3816, %v3945
        %v4010 = vadd.f32 %v3817, %v3946
        %v4011 = vadd.f32 %v3818, %v3947
        %v4012 = vadd.f32 %v3819, %v3948
        %v4013 = vadd.f32 %v3820, %v3949
        %v4014 = vadd.f32 %v3821, %v3950
        %v4015 = vadd.f32 %v3822, %v3951
        %v4016 = vadd.f32 %v3823, %v3952
        %v4017 = vadd.f32 %v3824, %v3953
        %v4018 = vadd.f32 %v3825, %v3954
        %v4019 = vadd.f32 %v3826, %v3955
        %v4020 = vadd.f32 %v3827, %v3956
        %v4021 = vadd.f32 %v3828, %v3957
        %v4022 = vadd.f32 %v3829, %v3958
        %v4023 = vadd.f32 %v3830, %v3959
        %v4024 = vadd.f32 %v3831, %v3960
        %v4025 = vadd.f32 %v3832, %v3961
        %v4026 = vadd.f32 %v3833, %v3962
        %v4027 = vadd.f32 %v3834, %v3963
        %v4028 = vadd.f32 %v3835, %v3964
        %v4029 = vadd.f32 %v3836, %v3965
        %v4030 = vadd.f32 %v3837, %v3966
        %v4031 = vadd.f32 %v3838, %v3967
        %v4032 = vadd.f32 %v3839, %v3968
        %v4033 = vadd.f32 %v3840, %v3969
        %v4034 = vadd.f32 %v3841, %v3970
        %v4035 = vadd.f32 %v3842, %v3971
        %v4036 = vadd.f32 %v3843, %v3972
        %v4037 = vadd.f32 %v3844, %v3973
        %v4038 = vadd.f32 %v3845, %v3974
        %v4039 = vadd.f32 %v3846, %v3975
        %v4040 = vadd.f32 %v3847, %v3976
        %v4041 = vadd.f32 %v3848, %v3977
        %v4042 = vadd.f32 %v3849, %v3978
        %v4043 = vadd.f32 %v3850, %v3979
        %v4044 = vadd.f32 %v3851, %v3980
        %v4045 = vadd.f32 %v3852, %v3981
        %v4046 = vadd.f32 %v3853, %v3982
        %v4047 = vadd.f32 %v3854, %v3983
        %v4048 = vadd.f32 %v3855, %v3984
        %v4049 = vld [vmem:[%s3662 + $0x2] sm:$0xff]
        %v4050 = vld [vmem:[%s3662 + $0x12] sm:$0xff]
        %v4051 = vld [vmem:[%s3662 + $0x22] sm:$0xff]
        %v4052 = vld [vmem:[%s3662 + $0x32] sm:$0xff]
        %v4053 = vld [vmem:[%s3662 + $0x42] sm:$0xff]
        %v4054 = vld [vmem:[%s3662 + $0x52] sm:$0xff]
        %v4055 = vld [vmem:[%s3662 + $0x62] sm:$0xff]
        %v4056 = vld [vmem:[%s3662 + $0x72] sm:$0xff]
        %v4057 = vld [vmem:[%s3662 + $0xa2] sm:$0xff]
        %v4058 = vld [vmem:[%s3662 + $0xb2] sm:$0xff]
        %v4059 = vld [vmem:[%s3662 + $0xc2] sm:$0xff]
        %v4060 = vld [vmem:[%s3662 + $0xd2] sm:$0xff]
        %v4061 = vld [vmem:[%s3662 + $0xe2] sm:$0xff]
        %v4062 = vld [vmem:[%s3662 + $0xf2] sm:$0xff]
        %v4063 = vld [vmem:[%s3662 + $0x102] sm:$0xff]
        %v4064 = vld [vmem:[%s3662 + $0x112] sm:$0xff]
        %v4065 = vld [vmem:[%s3662 + $0x142] sm:$0xff]
        %v4066 = vld [vmem:[%s3662 + $0x152] sm:$0xff]
        %v4067 = vld [vmem:[%s3662 + $0x162] sm:$0xff]
        %v4068 = vld [vmem:[%s3662 + $0x172] sm:$0xff]
        %v4069 = vld [vmem:[%s3662 + $0x182] sm:$0xff]
        %v4070 = vld [vmem:[%s3662 + $0x192] sm:$0xff]
        %v4071 = vld [vmem:[%s3662 + $0x1a2] sm:$0xff]
        %v4072 = vld [vmem:[%s3662 + $0x1b2] sm:$0xff]
        %v4073 = vld [vmem:[%s3662 + $0x1e2] sm:$0xff]
        %v4074 = vld [vmem:[%s3662 + $0x1f2] sm:$0xff]
        %v4075 = vld [vmem:[%s3662 + $0x202] sm:$0xff]
        %v4076 = vld [vmem:[%s3662 + $0x212] sm:$0xff]
        %v4077 = vld [vmem:[%s3662 + $0x222] sm:$0xff]
        %v4078 = vld [vmem:[%s3662 + $0x232] sm:$0xff]
        %v4079 = vld [vmem:[%s3662 + $0x242] sm:$0xff]
        %v4080 = vld [vmem:[%s3662 + $0x252] sm:$0xff]
        %v4081 = vld [vmem:[%s3662 + $0x282] sm:$0xff]
        %v4082 = vld [vmem:[%s3662 + $0x292] sm:$0xff]
        %v4083 = vld [vmem:[%s3662 + $0x2a2] sm:$0xff]
        %v4084 = vld [vmem:[%s3662 + $0x2b2] sm:$0xff]
        %v4085 = vld [vmem:[%s3662 + $0x2c2] sm:$0xff]
        %v4086 = vld [vmem:[%s3662 + $0x2d2] sm:$0xff]
        %v4087 = vld [vmem:[%s3662 + $0x2e2] sm:$0xff]
        %v4088 = vld [vmem:[%s3662 + $0x2f2] sm:$0xff]
        %v4089 = vld [vmem:[%s3662 + $0x322] sm:$0xff]
        %v4090 = vld [vmem:[%s3662 + $0x332] sm:$0xff]
        %v4091 = vld [vmem:[%s3662 + $0x342] sm:$0xff]
        %v4092 = vld [vmem:[%s3662 + $0x352] sm:$0xff]
        %v4093 = vld [vmem:[%s3662 + $0x362] sm:$0xff]
        %v4094 = vld [vmem:[%s3662 + $0x372] sm:$0xff]
        %v4095 = vld [vmem:[%s3662 + $0x382] sm:$0xff]
        %v4096 = vld [vmem:[%s3662 + $0x392] sm:$0xff]
        %v4097 = vld [vmem:[%s3662 + $0x3c2] sm:$0xff]
        %v4098 = vld [vmem:[%s3662 + $0x3d2] sm:$0xff]
        %v4099 = vld [vmem:[%s3662 + $0x3e2] sm:$0xff]
        %v4100 = vld [vmem:[%s3662 + $0x3f2] sm:$0xff]
        %v4101 = vld [vmem:[%s3662 + $0x402] sm:$0xff]
        %v4102 = vld [vmem:[%s3662 + $0x412] sm:$0xff]
        %v4103 = vld [vmem:[%s3662 + $0x422] sm:$0xff]
        %v4104 = vld [vmem:[%s3662 + $0x432] sm:$0xff]
        %v4105 = vld [vmem:[%s3662 + $0x462] sm:$0xff]
        %v4106 = vld [vmem:[%s3662 + $0x472] sm:$0xff]
        %v4107 = vld [vmem:[%s3662 + $0x482] sm:$0xff]
        %v4108 = vld [vmem:[%s3662 + $0x492] sm:$0xff]
        %v4109 = vld [vmem:[%s3662 + $0x4a2] sm:$0xff]
        %v4110 = vld [vmem:[%s3662 + $0x4b2] sm:$0xff]
        %v4111 = vld [vmem:[%s3662 + $0x4c2] sm:$0xff]
        %v4112 = vld [vmem:[%s3662 + $0x4d2] sm:$0xff]
        %v4113 = vperm.slane %v177, 4
        %v4114 = vmul.f32 %v4049, %v4113
        %v4115 = vmul.f32 %v4050, %v4113
        %v4116 = vmul.f32 %v4051, %v4113
        %v4117 = vmul.f32 %v4052, %v4113
        %v4118 = vmul.f32 %v4053, %v4113
        %v4119 = vmul.f32 %v4054, %v4113
        %v4120 = vmul.f32 %v4055, %v4113
        %v4121 = vmul.f32 %v4056, %v4113
        %v4122 = vmul.f32 %v4057, %v4113
        %v4123 = vmul.f32 %v4058, %v4113
        %v4124 = vmul.f32 %v4059, %v4113
        %v4125 = vmul.f32 %v4060, %v4113
        %v4126 = vmul.f32 %v4061, %v4113
        %v4127 = vmul.f32 %v4062, %v4113
        %v4128 = vmul.f32 %v4063, %v4113
        %v4129 = vmul.f32 %v4064, %v4113
        %v4130 = vmul.f32 %v4065, %v4113
        %v4131 = vmul.f32 %v4066, %v4113
        %v4132 = vmul.f32 %v4067, %v4113
        %v4133 = vmul.f32 %v4068, %v4113
        %v4134 = vmul.f32 %v4069, %v4113
        %v4135 = vmul.f32 %v4070, %v4113
        %v4136 = vmul.f32 %v4071, %v4113
        %v4137 = vmul.f32 %v4072, %v4113
        %v4138 = vmul.f32 %v4073, %v4113
        %v4139 = vmul.f32 %v4074, %v4113
        %v4140 = vmul.f32 %v4075, %v4113
        %v4141 = vmul.f32 %v4076, %v4113
        %v4142 = vmul.f32 %v4077, %v4113
        %v4143 = vmul.f32 %v4078, %v4113
        %v4144 = vmul.f32 %v4079, %v4113
        %v4145 = vmul.f32 %v4080, %v4113
        %v4146 = vmul.f32 %v4081, %v4113
        %v4147 = vmul.f32 %v4082, %v4113
        %v4148 = vmul.f32 %v4083, %v4113
        %v4149 = vmul.f32 %v4084, %v4113
        %v4150 = vmul.f32 %v4085, %v4113
        %v4151 = vmul.f32 %v4086, %v4113
        %v4152 = vmul.f32 %v4087, %v4113
        %v4153 = vmul.f32 %v4088, %v4113
        %v4154 = vmul.f32 %v4089, %v4113
        %v4155 = vmul.f32 %v4090, %v4113
        %v4156 = vmul.f32 %v4091, %v4113
        %v4157 = vmul.f32 %v4092, %v4113
        %v4158 = vmul.f32 %v4093, %v4113
        %v4159 = vmul.f32 %v4094, %v4113
        %v4160 = vmul.f32 %v4095, %v4113
        %v4161 = vmul.f32 %v4096, %v4113
        %v4162 = vmul.f32 %v4097, %v4113
        %v4163 = vmul.f32 %v4098, %v4113
        %v4164 = vmul.f32 %v4099, %v4113
        %v4165 = vmul.f32 %v4100, %v4113
        %v4166 = vmul.f32 %v4101, %v4113
        %v4167 = vmul.f32 %v4102, %v4113
        %v4168 = vmul.f32 %v4103, %v4113
        %v4169 = vmul.f32 %v4104, %v4113
        %v4170 = vmul.f32 %v4105, %v4113
        %v4171 = vmul.f32 %v4106, %v4113
        %v4172 = vmul.f32 %v4107, %v4113
        %v4173 = vmul.f32 %v4108, %v4113
        %v4174 = vmul.f32 %v4109, %v4113
        %v4175 = vmul.f32 %v4110, %v4113
        %v4176 = vmul.f32 %v4111, %v4113
        %v4177 = vmul.f32 %v4112, %v4113
        %v4178 = vadd.f32 %v3985, %v4114
        %v4179 = vadd.f32 %v3986, %v4115
        %v4180 = vadd.f32 %v3987, %v4116
        %v4181 = vadd.f32 %v3988, %v4117
        %v4182 = vadd.f32 %v3989, %v4118
        %v4183 = vadd.f32 %v3990, %v4119
        %v4184 = vadd.f32 %v3991, %v4120
        %v4185 = vadd.f32 %v3992, %v4121
        %v4186 = vadd.f32 %v3993, %v4122
        %v4187 = vadd.f32 %v3994, %v4123
        %v4188 = vadd.f32 %v3995, %v4124
        %v4189 = vadd.f32 %v3996, %v4125
        %v4190 = vadd.f32 %v3997, %v4126
        %v4191 = vadd.f32 %v3998, %v4127
        %v4192 = vadd.f32 %v3999, %v4128
        %v4193 = vadd.f32 %v4000, %v4129
        %v4194 = vadd.f32 %v4001, %v4130
        %v4195 = vadd.f32 %v4002, %v4131
        %v4196 = vadd.f32 %v4003, %v4132
        %v4197 = vadd.f32 %v4004, %v4133
        %v4198 = vadd.f32 %v4005, %v4134
        %v4199 = vadd.f32 %v4006, %v4135
        %v4200 = vadd.f32 %v4007, %v4136
        %v4201 = vadd.f32 %v4008, %v4137
        %v4202 = vadd.f32 %v4009, %v4138
        %v4203 = vadd.f32 %v4010, %v4139
        %v4204 = vadd.f32 %v4011, %v4140
        %v4205 = vadd.f32 %v4012, %v4141
        %v4206 = vadd.f32 %v4013, %v4142
        %v4207 = vadd.f32 %v4014, %v4143
        %v4208 = vadd.f32 %v4015, %v4144
        %v4209 = vadd.f32 %v4016, %v4145
        %v4210 = vadd.f32 %v4017, %v4146
        %v4211 = vadd.f32 %v4018, %v4147
        %v4212 = vadd.f32 %v4019, %v4148
        %v4213 = vadd.f32 %v4020, %v4149
        %v4214 = vadd.f32 %v4021, %v4150
        %v4215 = vadd.f32 %v4022, %v4151
        %v4216 = vadd.f32 %v4023, %v4152
        %v4217 = vadd.f32 %v4024, %v4153
        %v4218 = vadd.f32 %v4025, %v4154
        %v4219 = vadd.f32 %v4026, %v4155
        %v4220 = vadd.f32 %v4027, %v4156
        %v4221 = vadd.f32 %v4028, %v4157
        %v4222 = vadd.f32 %v4029, %v4158
        %v4223 = vadd.f32 %v4030, %v4159
        %v4224 = vadd.f32 %v4031, %v4160
        %v4225 = vadd.f32 %v4032, %v4161
        %v4226 = vadd.f32 %v4033, %v4162
        %v4227 = vadd.f32 %v4034, %v4163
        %v4228 = vadd.f32 %v4035, %v4164
        %v4229 = vadd.f32 %v4036, %v4165
        %v4230 = vadd.f32 %v4037, %v4166
        %v4231 = vadd.f32 %v4038, %v4167
        %v4232 = vadd.f32 %v4039, %v4168
        %v4233 = vadd.f32 %v4040, %v4169
        %v4234 = vadd.f32 %v4041, %v4170
        %v4235 = vadd.f32 %v4042, %v4171
        %v4236 = vadd.f32 %v4043, %v4172
        %v4237 = vadd.f32 %v4044, %v4173
        %v4238 = vadd.f32 %v4045, %v4174
        %v4239 = vadd.f32 %v4046, %v4175
        %v4240 = vadd.f32 %v4047, %v4176
        %v4241 = vadd.f32 %v4048, %v4177
        %s4242 = scalar_lea.vmem %s172, 336
        %v4243 = vld [vmem:[%s4242] sm:$0xff]
        %v4244 = vld [vmem:[%s4242 + $0x10] sm:$0xff]
        %v4245 = vld [vmem:[%s4242 + $0x20] sm:$0xff]
        %v4246 = vld [vmem:[%s4242 + $0x30] sm:$0xff]
        %v4247 = vld [vmem:[%s4242 + $0x40] sm:$0xff]
        %v4248 = vld [vmem:[%s4242 + $0x50] sm:$0xff]
        %v4249 = vld [vmem:[%s4242 + $0x60] sm:$0xff]
        %v4250 = vld [vmem:[%s4242 + $0x70] sm:$0xff]
        %v4251 = vld [vmem:[%s4242 + $0xa0] sm:$0xff]
        %v4252 = vld [vmem:[%s4242 + $0xb0] sm:$0xff]
        %v4253 = vld [vmem:[%s4242 + $0xc0] sm:$0xff]
        %v4254 = vld [vmem:[%s4242 + $0xd0] sm:$0xff]
        %v4255 = vld [vmem:[%s4242 + $0xe0] sm:$0xff]
        %v4256 = vld [vmem:[%s4242 + $0xf0] sm:$0xff]
        %v4257 = vld [vmem:[%s4242 + $0x100] sm:$0xff]
        %v4258 = vld [vmem:[%s4242 + $0x110] sm:$0xff]
        %v4259 = vld [vmem:[%s4242 + $0x140] sm:$0xff]
        %v4260 = vld [vmem:[%s4242 + $0x150] sm:$0xff]
        %v4261 = vld [vmem:[%s4242 + $0x160] sm:$0xff]
        %v4262 = vld [vmem:[%s4242 + $0x170] sm:$0xff]
        %v4263 = vld [vmem:[%s4242 + $0x180] sm:$0xff]
        %v4264 = vld [vmem:[%s4242 + $0x190] sm:$0xff]
        %v4265 = vld [vmem:[%s4242 + $0x1a0] sm:$0xff]
        %v4266 = vld [vmem:[%s4242 + $0x1b0] sm:$0xff]
        %v4267 = vld [vmem:[%s4242 + $0x1e0] sm:$0xff]
        %v4268 = vld [vmem:[%s4242 + $0x1f0] sm:$0xff]
        %v4269 = vld [vmem:[%s4242 + $0x200] sm:$0xff]
        %v4270 = vld [vmem:[%s4242 + $0x210] sm:$0xff]
        %v4271 = vld [vmem:[%s4242 + $0x220] sm:$0xff]
        %v4272 = vld [vmem:[%s4242 + $0x230] sm:$0xff]
        %v4273 = vld [vmem:[%s4242 + $0x240] sm:$0xff]
        %v4274 = vld [vmem:[%s4242 + $0x250] sm:$0xff]
        %v4275 = vld [vmem:[%s4242 + $0x280] sm:$0xff]
        %v4276 = vld [vmem:[%s4242 + $0x290] sm:$0xff]
        %v4277 = vld [vmem:[%s4242 + $0x2a0] sm:$0xff]
        %v4278 = vld [vmem:[%s4242 + $0x2b0] sm:$0xff]
        %v4279 = vld [vmem:[%s4242 + $0x2c0] sm:$0xff]
        %v4280 = vld [vmem:[%s4242 + $0x2d0] sm:$0xff]
        %v4281 = vld [vmem:[%s4242 + $0x2e0] sm:$0xff]
        %v4282 = vld [vmem:[%s4242 + $0x2f0] sm:$0xff]
        %v4283 = vld [vmem:[%s4242 + $0x320] sm:$0xff]
        %v4284 = vld [vmem:[%s4242 + $0x330] sm:$0xff]
        %v4285 = vld [vmem:[%s4242 + $0x340] sm:$0xff]
        %v4286 = vld [vmem:[%s4242 + $0x350] sm:$0xff]
        %v4287 = vld [vmem:[%s4242 + $0x360] sm:$0xff]
        %v4288 = vld [vmem:[%s4242 + $0x370] sm:$0xff]
        %v4289 = vld [vmem:[%s4242 + $0x380] sm:$0xff]
        %v4290 = vld [vmem:[%s4242 + $0x390] sm:$0xff]
        %v4291 = vld [vmem:[%s4242 + $0x3c0] sm:$0xff]
        %v4292 = vld [vmem:[%s4242 + $0x3d0] sm:$0xff]
        %v4293 = vld [vmem:[%s4242 + $0x3e0] sm:$0xff]
        %v4294 = vld [vmem:[%s4242 + $0x3f0] sm:$0xff]
        %v4295 = vld [vmem:[%s4242 + $0x400] sm:$0xff]
        %v4296 = vld [vmem:[%s4242 + $0x410] sm:$0xff]
        %v4297 = vld [vmem:[%s4242 + $0x420] sm:$0xff]
        %v4298 = vld [vmem:[%s4242 + $0x430] sm:$0xff]
        %v4299 = vld [vmem:[%s4242 + $0x460] sm:$0xff]
        %v4300 = vld [vmem:[%s4242 + $0x470] sm:$0xff]
        %v4301 = vld [vmem:[%s4242 + $0x480] sm:$0xff]
        %v4302 = vld [vmem:[%s4242 + $0x490] sm:$0xff]
        %v4303 = vld [vmem:[%s4242 + $0x4a0] sm:$0xff]
        %v4304 = vld [vmem:[%s4242 + $0x4b0] sm:$0xff]
        %v4305 = vld [vmem:[%s4242 + $0x4c0] sm:$0xff]
        %v4306 = vld [vmem:[%s4242 + $0x4d0] sm:$0xff]
        %v4307 = vperm.slane %v177, 5
        %v4308 = vmul.f32 %v4243, %v4307
        %v4309 = vmul.f32 %v4244, %v4307
        %v4310 = vmul.f32 %v4245, %v4307
        %v4311 = vmul.f32 %v4246, %v4307
        %v4312 = vmul.f32 %v4247, %v4307
        %v4313 = vmul.f32 %v4248, %v4307
        %v4314 = vmul.f32 %v4249, %v4307
        %v4315 = vmul.f32 %v4250, %v4307
        %v4316 = vmul.f32 %v4251, %v4307
        %v4317 = vmul.f32 %v4252, %v4307
        %v4318 = vmul.f32 %v4253, %v4307
        %v4319 = vmul.f32 %v4254, %v4307
        %v4320 = vmul.f32 %v4255, %v4307
        %v4321 = vmul.f32 %v4256, %v4307
        %v4322 = vmul.f32 %v4257, %v4307
        %v4323 = vmul.f32 %v4258, %v4307
        %v4324 = vmul.f32 %v4259, %v4307
        %v4325 = vmul.f32 %v4260, %v4307
        %v4326 = vmul.f32 %v4261, %v4307
        %v4327 = vmul.f32 %v4262, %v4307
        %v4328 = vmul.f32 %v4263, %v4307
        %v4329 = vmul.f32 %v4264, %v4307
        %v4330 = vmul.f32 %v4265, %v4307
        %v4331 = vmul.f32 %v4266, %v4307
        %v4332 = vmul.f32 %v4267, %v4307
        %v4333 = vmul.f32 %v4268, %v4307
        %v4334 = vmul.f32 %v4269, %v4307
        %v4335 = vmul.f32 %v4270, %v4307
        %v4336 = vmul.f32 %v4271, %v4307
        %v4337 = vmul.f32 %v4272, %v4307
        %v4338 = vmul.f32 %v4273, %v4307
        %v4339 = vmul.f32 %v4274, %v4307
        %v4340 = vmul.f32 %v4275, %v4307
        %v4341 = vmul.f32 %v4276, %v4307
        %v4342 = vmul.f32 %v4277, %v4307
        %v4343 = vmul.f32 %v4278, %v4307
        %v4344 = vmul.f32 %v4279, %v4307
        %v4345 = vmul.f32 %v4280, %v4307
        %v4346 = vmul.f32 %v4281, %v4307
        %v4347 = vmul.f32 %v4282, %v4307
        %v4348 = vmul.f32 %v4283, %v4307
        %v4349 = vmul.f32 %v4284, %v4307
        %v4350 = vmul.f32 %v4285, %v4307
        %v4351 = vmul.f32 %v4286, %v4307
        %v4352 = vmul.f32 %v4287, %v4307
        %v4353 = vmul.f32 %v4288, %v4307
        %v4354 = vmul.f32 %v4289, %v4307
        %v4355 = vmul.f32 %v4290, %v4307
        %v4356 = vmul.f32 %v4291, %v4307
        %v4357 = vmul.f32 %v4292, %v4307
        %v4358 = vmul.f32 %v4293, %v4307
        %v4359 = vmul.f32 %v4294, %v4307
        %v4360 = vmul.f32 %v4295, %v4307
        %v4361 = vmul.f32 %v4296, %v4307
        %v4362 = vmul.f32 %v4297, %v4307
        %v4363 = vmul.f32 %v4298, %v4307
        %v4364 = vmul.f32 %v4299, %v4307
        %v4365 = vmul.f32 %v4300, %v4307
        %v4366 = vmul.f32 %v4301, %v4307
        %v4367 = vmul.f32 %v4302, %v4307
        %v4368 = vmul.f32 %v4303, %v4307
        %v4369 = vmul.f32 %v4304, %v4307
        %v4370 = vmul.f32 %v4305, %v4307
        %v4371 = vmul.f32 %v4306, %v4307
        %v4372 = vadd.f32 %v4178, %v4308
        %v4373 = vadd.f32 %v4179, %v4309
        %v4374 = vadd.f32 %v4180, %v4310
        %v4375 = vadd.f32 %v4181, %v4311
        %v4376 = vadd.f32 %v4182, %v4312
        %v4377 = vadd.f32 %v4183, %v4313
        %v4378 = vadd.f32 %v4184, %v4314
        %v4379 = vadd.f32 %v4185, %v4315
        %v4380 = vadd.f32 %v4186, %v4316
        %v4381 = vadd.f32 %v4187, %v4317
        %v4382 = vadd.f32 %v4188, %v4318
        %v4383 = vadd.f32 %v4189, %v4319
        %v4384 = vadd.f32 %v4190, %v4320
        %v4385 = vadd.f32 %v4191, %v4321
        %v4386 = vadd.f32 %v4192, %v4322
        %v4387 = vadd.f32 %v4193, %v4323
        %v4388 = vadd.f32 %v4194, %v4324
        %v4389 = vadd.f32 %v4195, %v4325
        %v4390 = vadd.f32 %v4196, %v4326
        %v4391 = vadd.f32 %v4197, %v4327
        %v4392 = vadd.f32 %v4198, %v4328
        %v4393 = vadd.f32 %v4199, %v4329
        %v4394 = vadd.f32 %v4200, %v4330
        %v4395 = vadd.f32 %v4201, %v4331
        %v4396 = vadd.f32 %v4202, %v4332
        %v4397 = vadd.f32 %v4203, %v4333
        %v4398 = vadd.f32 %v4204, %v4334
        %v4399 = vadd.f32 %v4205, %v4335
        %v4400 = vadd.f32 %v4206, %v4336
        %v4401 = vadd.f32 %v4207, %v4337
        %v4402 = vadd.f32 %v4208, %v4338
        %v4403 = vadd.f32 %v4209, %v4339
        %v4404 = vadd.f32 %v4210, %v4340
        %v4405 = vadd.f32 %v4211, %v4341
        %v4406 = vadd.f32 %v4212, %v4342
        %v4407 = vadd.f32 %v4213, %v4343
        %v4408 = vadd.f32 %v4214, %v4344
        %v4409 = vadd.f32 %v4215, %v4345
        %v4410 = vadd.f32 %v4216, %v4346
        %v4411 = vadd.f32 %v4217, %v4347
        %v4412 = vadd.f32 %v4218, %v4348
        %v4413 = vadd.f32 %v4219, %v4349
        %v4414 = vadd.f32 %v4220, %v4350
        %v4415 = vadd.f32 %v4221, %v4351
        %v4416 = vadd.f32 %v4222, %v4352
        %v4417 = vadd.f32 %v4223, %v4353
        %v4418 = vadd.f32 %v4224, %v4354
        %v4419 = vadd.f32 %v4225, %v4355
        %v4420 = vadd.f32 %v4226, %v4356
        %v4421 = vadd.f32 %v4227, %v4357
        %v4422 = vadd.f32 %v4228, %v4358
        %v4423 = vadd.f32 %v4229, %v4359
        %v4424 = vadd.f32 %v4230, %v4360
        %v4425 = vadd.f32 %v4231, %v4361
        %v4426 = vadd.f32 %v4232, %v4362
        %v4427 = vadd.f32 %v4233, %v4363
        %v4428 = vadd.f32 %v4234, %v4364
        %v4429 = vadd.f32 %v4235, %v4365
        %v4430 = vadd.f32 %v4236, %v4366
        %v4431 = vadd.f32 %v4237, %v4367
        %v4432 = vadd.f32 %v4238, %v4368
        %v4433 = vadd.f32 %v4239, %v4369
        %v4434 = vadd.f32 %v4240, %v4370
        %v4435 = vadd.f32 %v4241, %v4371
        %v4436 = vld [vmem:[%s4242 + $0x1] sm:$0xff]
        %v4437 = vld [vmem:[%s4242 + $0x11] sm:$0xff]
        %v4438 = vld [vmem:[%s4242 + $0x21] sm:$0xff]
        %v4439 = vld [vmem:[%s4242 + $0x31] sm:$0xff]
        %v4440 = vld [vmem:[%s4242 + $0x41] sm:$0xff]
        %v4441 = vld [vmem:[%s4242 + $0x51] sm:$0xff]
        %v4442 = vld [vmem:[%s4242 + $0x61] sm:$0xff]
        %v4443 = vld [vmem:[%s4242 + $0x71] sm:$0xff]
        %v4444 = vld [vmem:[%s4242 + $0xa1] sm:$0xff]
        %v4445 = vld [vmem:[%s4242 + $0xb1] sm:$0xff]
        %v4446 = vld [vmem:[%s4242 + $0xc1] sm:$0xff]
        %v4447 = vld [vmem:[%s4242 + $0xd1] sm:$0xff]
        %v4448 = vld [vmem:[%s4242 + $0xe1] sm:$0xff]
        %v4449 = vld [vmem:[%s4242 + $0xf1] sm:$0xff]
        %v4450 = vld [vmem:[%s4242 + $0x101] sm:$0xff]
        %v4451 = vld [vmem:[%s4242 + $0x111] sm:$0xff]
        %v4452 = vld [vmem:[%s4242 + $0x141] sm:$0xff]
        %v4453 = vld [vmem:[%s4242 + $0x151] sm:$0xff]
        %v4454 = vld [vmem:[%s4242 + $0x161] sm:$0xff]
        %v4455 = vld [vmem:[%s4242 + $0x171] sm:$0xff]
        %v4456 = vld [vmem:[%s4242 + $0x181] sm:$0xff]
        %v4457 = vld [vmem:[%s4242 + $0x191] sm:$0xff]
        %v4458 = vld [vmem:[%s4242 + $0x1a1] sm:$0xff]
        %v4459 = vld [vmem:[%s4242 + $0x1b1] sm:$0xff]
        %v4460 = vld [vmem:[%s4242 + $0x1e1] sm:$0xff]
        %v4461 = vld [vmem:[%s4242 + $0x1f1] sm:$0xff]
        %v4462 = vld [vmem:[%s4242 + $0x201] sm:$0xff]
        %v4463 = vld [vmem:[%s4242 + $0x211] sm:$0xff]
        %v4464 = vld [vmem:[%s4242 + $0x221] sm:$0xff]
        %v4465 = vld [vmem:[%s4242 + $0x231] sm:$0xff]
        %v4466 = vld [vmem:[%s4242 + $0x241] sm:$0xff]
        %v4467 = vld [vmem:[%s4242 + $0x251] sm:$0xff]
        %v4468 = vld [vmem:[%s4242 + $0x281] sm:$0xff]
        %v4469 = vld [vmem:[%s4242 + $0x291] sm:$0xff]
        %v4470 = vld [vmem:[%s4242 + $0x2a1] sm:$0xff]
        %v4471 = vld [vmem:[%s4242 + $0x2b1] sm:$0xff]
        %v4472 = vld [vmem:[%s4242 + $0x2c1] sm:$0xff]
        %v4473 = vld [vmem:[%s4242 + $0x2d1] sm:$0xff]
        %v4474 = vld [vmem:[%s4242 + $0x2e1] sm:$0xff]
        %v4475 = vld [vmem:[%s4242 + $0x2f1] sm:$0xff]
        %v4476 = vld [vmem:[%s4242 + $0x321] sm:$0xff]
        %v4477 = vld [vmem:[%s4242 + $0x331] sm:$0xff]
        %v4478 = vld [vmem:[%s4242 + $0x341] sm:$0xff]
        %v4479 = vld [vmem:[%s4242 + $0x351] sm:$0xff]
        %v4480 = vld [vmem:[%s4242 + $0x361] sm:$0xff]
        %v4481 = vld [vmem:[%s4242 + $0x371] sm:$0xff]
        %v4482 = vld [vmem:[%s4242 + $0x381] sm:$0xff]
        %v4483 = vld [vmem:[%s4242 + $0x391] sm:$0xff]
        %v4484 = vld [vmem:[%s4242 + $0x3c1] sm:$0xff]
        %v4485 = vld [vmem:[%s4242 + $0x3d1] sm:$0xff]
        %v4486 = vld [vmem:[%s4242 + $0x3e1] sm:$0xff]
        %v4487 = vld [vmem:[%s4242 + $0x3f1] sm:$0xff]
        %v4488 = vld [vmem:[%s4242 + $0x401] sm:$0xff]
        %v4489 = vld [vmem:[%s4242 + $0x411] sm:$0xff]
        %v4490 = vld [vmem:[%s4242 + $0x421] sm:$0xff]
        %v4491 = vld [vmem:[%s4242 + $0x431] sm:$0xff]
        %v4492 = vld [vmem:[%s4242 + $0x461] sm:$0xff]
        %v4493 = vld [vmem:[%s4242 + $0x471] sm:$0xff]
        %v4494 = vld [vmem:[%s4242 + $0x481] sm:$0xff]
        %v4495 = vld [vmem:[%s4242 + $0x491] sm:$0xff]
        %v4496 = vld [vmem:[%s4242 + $0x4a1] sm:$0xff]
        %v4497 = vld [vmem:[%s4242 + $0x4b1] sm:$0xff]
        %v4498 = vld [vmem:[%s4242 + $0x4c1] sm:$0xff]
        %v4499 = vld [vmem:[%s4242 + $0x4d1] sm:$0xff]
        %v4500 = vperm.slane %v177, 6
        %v4501 = vmul.f32 %v4436, %v4500
        %v4502 = vmul.f32 %v4437, %v4500
        %v4503 = vmul.f32 %v4438, %v4500
        %v4504 = vmul.f32 %v4439, %v4500
        %v4505 = vmul.f32 %v4440, %v4500
        %v4506 = vmul.f32 %v4441, %v4500
        %v4507 = vmul.f32 %v4442, %v4500
        %v4508 = vmul.f32 %v4443, %v4500
        %v4509 = vmul.f32 %v4444, %v4500
        %v4510 = vmul.f32 %v4445, %v4500
        %v4511 = vmul.f32 %v4446, %v4500
        %v4512 = vmul.f32 %v4447, %v4500
        %v4513 = vmul.f32 %v4448, %v4500
        %v4514 = vmul.f32 %v4449, %v4500
        %v4515 = vmul.f32 %v4450, %v4500
        %v4516 = vmul.f32 %v4451, %v4500
        %v4517 = vmul.f32 %v4452, %v4500
        %v4518 = vmul.f32 %v4453, %v4500
        %v4519 = vmul.f32 %v4454, %v4500
        %v4520 = vmul.f32 %v4455, %v4500
        %v4521 = vmul.f32 %v4456, %v4500
        %v4522 = vmul.f32 %v4457, %v4500
        %v4523 = vmul.f32 %v4458, %v4500
        %v4524 = vmul.f32 %v4459, %v4500
        %v4525 = vmul.f32 %v4460, %v4500
        %v4526 = vmul.f32 %v4461, %v4500
        %v4527 = vmul.f32 %v4462, %v4500
        %v4528 = vmul.f32 %v4463, %v4500
        %v4529 = vmul.f32 %v4464, %v4500
        %v4530 = vmul.f32 %v4465, %v4500
        %v4531 = vmul.f32 %v4466, %v4500
        %v4532 = vmul.f32 %v4467, %v4500
        %v4533 = vmul.f32 %v4468, %v4500
        %v4534 = vmul.f32 %v4469, %v4500
        %v4535 = vmul.f32 %v4470, %v4500
        %v4536 = vmul.f32 %v4471, %v4500
        %v4537 = vmul.f32 %v4472, %v4500
        %v4538 = vmul.f32 %v4473, %v4500
        %v4539 = vmul.f32 %v4474, %v4500
        %v4540 = vmul.f32 %v4475, %v4500
        %v4541 = vmul.f32 %v4476, %v4500
        %v4542 = vmul.f32 %v4477, %v4500
        %v4543 = vmul.f32 %v4478, %v4500
        %v4544 = vmul.f32 %v4479, %v4500
        %v4545 = vmul.f32 %v4480, %v4500
        %v4546 = vmul.f32 %v4481, %v4500
        %v4547 = vmul.f32 %v4482, %v4500
        %v4548 = vmul.f32 %v4483, %v4500
        %v4549 = vmul.f32 %v4484, %v4500
        %v4550 = vmul.f32 %v4485, %v4500
        %v4551 = vmul.f32 %v4486, %v4500
        %v4552 = vmul.f32 %v4487, %v4500
        %v4553 = vmul.f32 %v4488, %v4500
        %v4554 = vmul.f32 %v4489, %v4500
        %v4555 = vmul.f32 %v4490, %v4500
        %v4556 = vmul.f32 %v4491, %v4500
        %v4557 = vmul.f32 %v4492, %v4500
        %v4558 = vmul.f32 %v4493, %v4500
        %v4559 = vmul.f32 %v4494, %v4500
        %v4560 = vmul.f32 %v4495, %v4500
        %v4561 = vmul.f32 %v4496, %v4500
        %v4562 = vmul.f32 %v4497, %v4500
        %v4563 = vmul.f32 %v4498, %v4500
        %v4564 = vmul.f32 %v4499, %v4500
        %v4565 = vadd.f32 %v4372, %v4501
        %v4566 = vadd.f32 %v4373, %v4502
        %v4567 = vadd.f32 %v4374, %v4503
        %v4568 = vadd.f32 %v4375, %v4504
        %v4569 = vadd.f32 %v4376, %v4505
        %v4570 = vadd.f32 %v4377, %v4506
        %v4571 = vadd.f32 %v4378, %v4507
        %v4572 = vadd.f32 %v4379, %v4508
        %v4573 = vadd.f32 %v4380, %v4509
        %v4574 = vadd.f32 %v4381, %v4510
        %v4575 = vadd.f32 %v4382, %v4511
        %v4576 = vadd.f32 %v4383, %v4512
        %v4577 = vadd.f32 %v4384, %v4513
        %v4578 = vadd.f32 %v4385, %v4514
        %v4579 = vadd.f32 %v4386, %v4515
        %v4580 = vadd.f32 %v4387, %v4516
        %v4581 = vadd.f32 %v4388, %v4517
        %v4582 = vadd.f32 %v4389, %v4518
        %v4583 = vadd.f32 %v4390, %v4519
        %v4584 = vadd.f32 %v4391, %v4520
        %v4585 = vadd.f32 %v4392, %v4521
        %v4586 = vadd.f32 %v4393, %v4522
        %v4587 = vadd.f32 %v4394, %v4523
        %v4588 = vadd.f32 %v4395, %v4524
        %v4589 = vadd.f32 %v4396, %v4525
        %v4590 = vadd.f32 %v4397, %v4526
        %v4591 = vadd.f32 %v4398, %v4527
        %v4592 = vadd.f32 %v4399, %v4528
        %v4593 = vadd.f32 %v4400, %v4529
        %v4594 = vadd.f32 %v4401, %v4530
        %v4595 = vadd.f32 %v4402, %v4531
        %v4596 = vadd.f32 %v4403, %v4532
        %v4597 = vadd.f32 %v4404, %v4533
        %v4598 = vadd.f32 %v4405, %v4534
        %v4599 = vadd.f32 %v4406, %v4535
        %v4600 = vadd.f32 %v4407, %v4536
        %v4601 = vadd.f32 %v4408, %v4537
        %v4602 = vadd.f32 %v4409, %v4538
        %v4603 = vadd.f32 %v4410, %v4539
        %v4604 = vadd.f32 %v4411, %v4540
        %v4605 = vadd.f32 %v4412, %v4541
        %v4606 = vadd.f32 %v4413, %v4542
        %v4607 = vadd.f32 %v4414, %v4543
        %v4608 = vadd.f32 %v4415, %v4544
        %v4609 = vadd.f32 %v4416, %v4545
        %v4610 = vadd.f32 %v4417, %v4546
        %v4611 = vadd.f32 %v4418, %v4547
        %v4612 = vadd.f32 %v4419, %v4548
        %v4613 = vadd.f32 %v4420, %v4549
        %v4614 = vadd.f32 %v4421, %v4550
        %v4615 = vadd.f32 %v4422, %v4551
        %v4616 = vadd.f32 %v4423, %v4552
        %v4617 = vadd.f32 %v4424, %v4553
        %v4618 = vadd.f32 %v4425, %v4554
        %v4619 = vadd.f32 %v4426, %v4555
        %v4620 = vadd.f32 %v4427, %v4556
        %v4621 = vadd.f32 %v4428, %v4557
        %v4622 = vadd.f32 %v4429, %v4558
        %v4623 = vadd.f32 %v4430, %v4559
        %v4624 = vadd.f32 %v4431, %v4560
        %v4625 = vadd.f32 %v4432, %v4561
        %v4626 = vadd.f32 %v4433, %v4562
        %v4627 = vadd.f32 %v4434, %v4563
        %v4628 = vadd.f32 %v4435, %v4564
        %v4629 = vld [vmem:[%s4242 + $0x2] sm:$0xff]
        %v4630 = vld [vmem:[%s4242 + $0x12] sm:$0xff]
        %v4631 = vld [vmem:[%s4242 + $0x22] sm:$0xff]
        %v4632 = vld [vmem:[%s4242 + $0x32] sm:$0xff]
        %v4633 = vld [vmem:[%s4242 + $0x42] sm:$0xff]
        %v4634 = vld [vmem:[%s4242 + $0x52] sm:$0xff]
        %v4635 = vld [vmem:[%s4242 + $0x62] sm:$0xff]
        %v4636 = vld [vmem:[%s4242 + $0x72] sm:$0xff]
        %v4637 = vld [vmem:[%s4242 + $0xa2] sm:$0xff]
        %v4638 = vld [vmem:[%s4242 + $0xb2] sm:$0xff]
        %v4639 = vld [vmem:[%s4242 + $0xc2] sm:$0xff]
        %v4640 = vld [vmem:[%s4242 + $0xd2] sm:$0xff]
        %v4641 = vld [vmem:[%s4242 + $0xe2] sm:$0xff]
        %v4642 = vld [vmem:[%s4242 + $0xf2] sm:$0xff]
        %v4643 = vld [vmem:[%s4242 + $0x102] sm:$0xff]
        %v4644 = vld [vmem:[%s4242 + $0x112] sm:$0xff]
        %v4645 = vld [vmem:[%s4242 + $0x142] sm:$0xff]
        %v4646 = vld [vmem:[%s4242 + $0x152] sm:$0xff]
        %v4647 = vld [vmem:[%s4242 + $0x162] sm:$0xff]
        %v4648 = vld [vmem:[%s4242 + $0x172] sm:$0xff]
        %v4649 = vld [vmem:[%s4242 + $0x182] sm:$0xff]
        %v4650 = vld [vmem:[%s4242 + $0x192] sm:$0xff]
        %v4651 = vld [vmem:[%s4242 + $0x1a2] sm:$0xff]
        %v4652 = vld [vmem:[%s4242 + $0x1b2] sm:$0xff]
        %v4653 = vld [vmem:[%s4242 + $0x1e2] sm:$0xff]
        %v4654 = vld [vmem:[%s4242 + $0x1f2] sm:$0xff]
        %v4655 = vld [vmem:[%s4242 + $0x202] sm:$0xff]
        %v4656 = vld [vmem:[%s4242 + $0x212] sm:$0xff]
        %v4657 = vld [vmem:[%s4242 + $0x222] sm:$0xff]
        %v4658 = vld [vmem:[%s4242 + $0x232] sm:$0xff]
        %v4659 = vld [vmem:[%s4242 + $0x242] sm:$0xff]
        %v4660 = vld [vmem:[%s4242 + $0x252] sm:$0xff]
        %v4661 = vld [vmem:[%s4242 + $0x282] sm:$0xff]
        %v4662 = vld [vmem:[%s4242 + $0x292] sm:$0xff]
        %v4663 = vld [vmem:[%s4242 + $0x2a2] sm:$0xff]
        %v4664 = vld [vmem:[%s4242 + $0x2b2] sm:$0xff]
        %v4665 = vld [vmem:[%s4242 + $0x2c2] sm:$0xff]
        %v4666 = vld [vmem:[%s4242 + $0x2d2] sm:$0xff]
        %v4667 = vld [vmem:[%s4242 + $0x2e2] sm:$0xff]
        %v4668 = vld [vmem:[%s4242 + $0x2f2] sm:$0xff]
        %v4669 = vld [vmem:[%s4242 + $0x322] sm:$0xff]
        %v4670 = vld [vmem:[%s4242 + $0x332] sm:$0xff]
        %v4671 = vld [vmem:[%s4242 + $0x342] sm:$0xff]
        %v4672 = vld [vmem:[%s4242 + $0x352] sm:$0xff]
        %v4673 = vld [vmem:[%s4242 + $0x362] sm:$0xff]
        %v4674 = vld [vmem:[%s4242 + $0x372] sm:$0xff]
        %v4675 = vld [vmem:[%s4242 + $0x382] sm:$0xff]
        %v4676 = vld [vmem:[%s4242 + $0x392] sm:$0xff]
        %v4677 = vld [vmem:[%s4242 + $0x3c2] sm:$0xff]
        %v4678 = vld [vmem:[%s4242 + $0x3d2] sm:$0xff]
        %v4679 = vld [vmem:[%s4242 + $0x3e2] sm:$0xff]
        %v4680 = vld [vmem:[%s4242 + $0x3f2] sm:$0xff]
        %v4681 = vld [vmem:[%s4242 + $0x402] sm:$0xff]
        %v4682 = vld [vmem:[%s4242 + $0x412] sm:$0xff]
        %v4683 = vld [vmem:[%s4242 + $0x422] sm:$0xff]
        %v4684 = vld [vmem:[%s4242 + $0x432] sm:$0xff]
        %v4685 = vld [vmem:[%s4242 + $0x462] sm:$0xff]
        %v4686 = vld [vmem:[%s4242 + $0x472] sm:$0xff]
        %v4687 = vld [vmem:[%s4242 + $0x482] sm:$0xff]
        %v4688 = vld [vmem:[%s4242 + $0x492] sm:$0xff]
        %v4689 = vld [vmem:[%s4242 + $0x4a2] sm:$0xff]
        %v4690 = vld [vmem:[%s4242 + $0x4b2] sm:$0xff]
        %v4691 = vld [vmem:[%s4242 + $0x4c2] sm:$0xff]
        %v4692 = vld [vmem:[%s4242 + $0x4d2] sm:$0xff]
        %v4693 = vperm.slane %v177, 7
        %v4694 = vmul.f32 %v4629, %v4693
        %v4695 = vmul.f32 %v4630, %v4693
        %v4696 = vmul.f32 %v4631, %v4693
        %v4697 = vmul.f32 %v4632, %v4693
        %v4698 = vmul.f32 %v4633, %v4693
        %v4699 = vmul.f32 %v4634, %v4693
        %v4700 = vmul.f32 %v4635, %v4693
        %v4701 = vmul.f32 %v4636, %v4693
        %v4702 = vmul.f32 %v4637, %v4693
        %v4703 = vmul.f32 %v4638, %v4693
        %v4704 = vmul.f32 %v4639, %v4693
        %v4705 = vmul.f32 %v4640, %v4693
        %v4706 = vmul.f32 %v4641, %v4693
        %v4707 = vmul.f32 %v4642, %v4693
        %v4708 = vmul.f32 %v4643, %v4693
        %v4709 = vmul.f32 %v4644, %v4693
        %v4710 = vmul.f32 %v4645, %v4693
        %v4711 = vmul.f32 %v4646, %v4693
        %v4712 = vmul.f32 %v4647, %v4693
        %v4713 = vmul.f32 %v4648, %v4693
        %v4714 = vmul.f32 %v4649, %v4693
        %v4715 = vmul.f32 %v4650, %v4693
        %v4716 = vmul.f32 %v4651, %v4693
        %v4717 = vmul.f32 %v4652, %v4693
        %v4718 = vmul.f32 %v4653, %v4693
        %v4719 = vmul.f32 %v4654, %v4693
        %v4720 = vmul.f32 %v4655, %v4693
        %v4721 = vmul.f32 %v4656, %v4693
        %v4722 = vmul.f32 %v4657, %v4693
        %v4723 = vmul.f32 %v4658, %v4693
        %v4724 = vmul.f32 %v4659, %v4693
        %v4725 = vmul.f32 %v4660, %v4693
        %v4726 = vmul.f32 %v4661, %v4693
        %v4727 = vmul.f32 %v4662, %v4693
        %v4728 = vmul.f32 %v4663, %v4693
        %v4729 = vmul.f32 %v4664, %v4693
        %v4730 = vmul.f32 %v4665, %v4693
        %v4731 = vmul.f32 %v4666, %v4693
        %v4732 = vmul.f32 %v4667, %v4693
        %v4733 = vmul.f32 %v4668, %v4693
        %v4734 = vmul.f32 %v4669, %v4693
        %v4735 = vmul.f32 %v4670, %v4693
        %v4736 = vmul.f32 %v4671, %v4693
        %v4737 = vmul.f32 %v4672, %v4693
        %v4738 = vmul.f32 %v4673, %v4693
        %v4739 = vmul.f32 %v4674, %v4693
        %v4740 = vmul.f32 %v4675, %v4693
        %v4741 = vmul.f32 %v4676, %v4693
        %v4742 = vmul.f32 %v4677, %v4693
        %v4743 = vmul.f32 %v4678, %v4693
        %v4744 = vmul.f32 %v4679, %v4693
        %v4745 = vmul.f32 %v4680, %v4693
        %v4746 = vmul.f32 %v4681, %v4693
        %v4747 = vmul.f32 %v4682, %v4693
        %v4748 = vmul.f32 %v4683, %v4693
        %v4749 = vmul.f32 %v4684, %v4693
        %v4750 = vmul.f32 %v4685, %v4693
        %v4751 = vmul.f32 %v4686, %v4693
        %v4752 = vmul.f32 %v4687, %v4693
        %v4753 = vmul.f32 %v4688, %v4693
        %v4754 = vmul.f32 %v4689, %v4693
        %v4755 = vmul.f32 %v4690, %v4693
        %v4756 = vmul.f32 %v4691, %v4693
        %v4757 = vmul.f32 %v4692, %v4693
        %v4758 = vadd.f32 %v4565, %v4694
        %v4759 = vadd.f32 %v4566, %v4695
        %v4760 = vadd.f32 %v4567, %v4696
        %v4761 = vadd.f32 %v4568, %v4697
        %v4762 = vadd.f32 %v4569, %v4698
        %v4763 = vadd.f32 %v4570, %v4699
        %v4764 = vadd.f32 %v4571, %v4700
        %v4765 = vadd.f32 %v4572, %v4701
        %v4766 = vadd.f32 %v4573, %v4702
        %v4767 = vadd.f32 %v4574, %v4703
        %v4768 = vadd.f32 %v4575, %v4704
        %v4769 = vadd.f32 %v4576, %v4705
        %v4770 = vadd.f32 %v4577, %v4706
        %v4771 = vadd.f32 %v4578, %v4707
        %v4772 = vadd.f32 %v4579, %v4708
        %v4773 = vadd.f32 %v4580, %v4709
        %v4774 = vadd.f32 %v4581, %v4710
        %v4775 = vadd.f32 %v4582, %v4711
        %v4776 = vadd.f32 %v4583, %v4712
        %v4777 = vadd.f32 %v4584, %v4713
        %v4778 = vadd.f32 %v4585, %v4714
        %v4779 = vadd.f32 %v4586, %v4715
        %v4780 = vadd.f32 %v4587, %v4716
        %v4781 = vadd.f32 %v4588, %v4717
        %v4782 = vadd.f32 %v4589, %v4718
        %v4783 = vadd.f32 %v4590, %v4719
        %v4784 = vadd.f32 %v4591, %v4720
        %v4785 = vadd.f32 %v4592, %v4721
        %v4786 = vadd.f32 %v4593, %v4722
        %v4787 = vadd.f32 %v4594, %v4723
        %v4788 = vadd.f32 %v4595, %v4724
        %v4789 = vadd.f32 %v4596, %v4725
        %v4790 = vadd.f32 %v4597, %v4726
        %v4791 = vadd.f32 %v4598, %v4727
        %v4792 = vadd.f32 %v4599, %v4728
        %v4793 = vadd.f32 %v4600, %v4729
        %v4794 = vadd.f32 %v4601, %v4730
        %v4795 = vadd.f32 %v4602, %v4731
        %v4796 = vadd.f32 %v4603, %v4732
        %v4797 = vadd.f32 %v4604, %v4733
        %v4798 = vadd.f32 %v4605, %v4734
        %v4799 = vadd.f32 %v4606, %v4735
        %v4800 = vadd.f32 %v4607, %v4736
        %v4801 = vadd.f32 %v4608, %v4737
        %v4802 = vadd.f32 %v4609, %v4738
        %v4803 = vadd.f32 %v4610, %v4739
        %v4804 = vadd.f32 %v4611, %v4740
        %v4805 = vadd.f32 %v4612, %v4741
        %v4806 = vadd.f32 %v4613, %v4742
        %v4807 = vadd.f32 %v4614, %v4743
        %v4808 = vadd.f32 %v4615, %v4744
        %v4809 = vadd.f32 %v4616, %v4745
        %v4810 = vadd.f32 %v4617, %v4746
        %v4811 = vadd.f32 %v4618, %v4747
        %v4812 = vadd.f32 %v4619, %v4748
        %v4813 = vadd.f32 %v4620, %v4749
        %v4814 = vadd.f32 %v4621, %v4750
        %v4815 = vadd.f32 %v4622, %v4751
        %v4816 = vadd.f32 %v4623, %v4752
        %v4817 = vadd.f32 %v4624, %v4753
        %v4818 = vadd.f32 %v4625, %v4754
        %v4819 = vadd.f32 %v4626, %v4755
        %v4820 = vadd.f32 %v4627, %v4756
        %v4821 = vadd.f32 %v4628, %v4757
        %s4822 = scalar_lea.vmem %s172, 352
        %v4823 = vld [vmem:[%s4822] sm:$0xff]
        %v4824 = vld [vmem:[%s4822 + $0x10] sm:$0xff]
        %v4825 = vld [vmem:[%s4822 + $0x20] sm:$0xff]
        %v4826 = vld [vmem:[%s4822 + $0x30] sm:$0xff]
        %v4827 = vld [vmem:[%s4822 + $0x40] sm:$0xff]
        %v4828 = vld [vmem:[%s4822 + $0x50] sm:$0xff]
        %v4829 = vld [vmem:[%s4822 + $0x60] sm:$0xff]
        %v4830 = vld [vmem:[%s4822 + $0x70] sm:$0xff]
        %v4831 = vld [vmem:[%s4822 + $0xa0] sm:$0xff]
        %v4832 = vld [vmem:[%s4822 + $0xb0] sm:$0xff]
        %v4833 = vld [vmem:[%s4822 + $0xc0] sm:$0xff]
        %v4834 = vld [vmem:[%s4822 + $0xd0] sm:$0xff]
        %v4835 = vld [vmem:[%s4822 + $0xe0] sm:$0xff]
        %v4836 = vld [vmem:[%s4822 + $0xf0] sm:$0xff]
        %v4837 = vld [vmem:[%s4822 + $0x100] sm:$0xff]
        %v4838 = vld [vmem:[%s4822 + $0x110] sm:$0xff]
        %v4839 = vld [vmem:[%s4822 + $0x140] sm:$0xff]
        %v4840 = vld [vmem:[%s4822 + $0x150] sm:$0xff]
        %v4841 = vld [vmem:[%s4822 + $0x160] sm:$0xff]
        %v4842 = vld [vmem:[%s4822 + $0x170] sm:$0xff]
        %v4843 = vld [vmem:[%s4822 + $0x180] sm:$0xff]
        %v4844 = vld [vmem:[%s4822 + $0x190] sm:$0xff]
        %v4845 = vld [vmem:[%s4822 + $0x1a0] sm:$0xff]
        %v4846 = vld [vmem:[%s4822 + $0x1b0] sm:$0xff]
        %v4847 = vld [vmem:[%s4822 + $0x1e0] sm:$0xff]
        %v4848 = vld [vmem:[%s4822 + $0x1f0] sm:$0xff]
        %v4849 = vld [vmem:[%s4822 + $0x200] sm:$0xff]
        %v4850 = vld [vmem:[%s4822 + $0x210] sm:$0xff]
        %v4851 = vld [vmem:[%s4822 + $0x220] sm:$0xff]
        %v4852 = vld [vmem:[%s4822 + $0x230] sm:$0xff]
        %v4853 = vld [vmem:[%s4822 + $0x240] sm:$0xff]
        %v4854 = vld [vmem:[%s4822 + $0x250] sm:$0xff]
        %v4855 = vld [vmem:[%s4822 + $0x280] sm:$0xff]
        %v4856 = vld [vmem:[%s4822 + $0x290] sm:$0xff]
        %v4857 = vld [vmem:[%s4822 + $0x2a0] sm:$0xff]
        %v4858 = vld [vmem:[%s4822 + $0x2b0] sm:$0xff]
        %v4859 = vld [vmem:[%s4822 + $0x2c0] sm:$0xff]
        %v4860 = vld [vmem:[%s4822 + $0x2d0] sm:$0xff]
        %v4861 = vld [vmem:[%s4822 + $0x2e0] sm:$0xff]
        %v4862 = vld [vmem:[%s4822 + $0x2f0] sm:$0xff]
        %v4863 = vld [vmem:[%s4822 + $0x320] sm:$0xff]
        %v4864 = vld [vmem:[%s4822 + $0x330] sm:$0xff]
        %v4865 = vld [vmem:[%s4822 + $0x340] sm:$0xff]
        %v4866 = vld [vmem:[%s4822 + $0x350] sm:$0xff]
        %v4867 = vld [vmem:[%s4822 + $0x360] sm:$0xff]
        %v4868 = vld [vmem:[%s4822 + $0x370] sm:$0xff]
        %v4869 = vld [vmem:[%s4822 + $0x380] sm:$0xff]
        %v4870 = vld [vmem:[%s4822 + $0x390] sm:$0xff]
        %v4871 = vld [vmem:[%s4822 + $0x3c0] sm:$0xff]
        %v4872 = vld [vmem:[%s4822 + $0x3d0] sm:$0xff]
        %v4873 = vld [vmem:[%s4822 + $0x3e0] sm:$0xff]
        %v4874 = vld [vmem:[%s4822 + $0x3f0] sm:$0xff]
        %v4875 = vld [vmem:[%s4822 + $0x400] sm:$0xff]
        %v4876 = vld [vmem:[%s4822 + $0x410] sm:$0xff]
        %v4877 = vld [vmem:[%s4822 + $0x420] sm:$0xff]
        %v4878 = vld [vmem:[%s4822 + $0x430] sm:$0xff]
        %v4879 = vld [vmem:[%s4822 + $0x460] sm:$0xff]
        %v4880 = vld [vmem:[%s4822 + $0x470] sm:$0xff]
        %v4881 = vld [vmem:[%s4822 + $0x480] sm:$0xff]
        %v4882 = vld [vmem:[%s4822 + $0x490] sm:$0xff]
        %v4883 = vld [vmem:[%s4822 + $0x4a0] sm:$0xff]
        %v4884 = vld [vmem:[%s4822 + $0x4b0] sm:$0xff]
        %v4885 = vld [vmem:[%s4822 + $0x4c0] sm:$0xff]
        %v4886 = vld [vmem:[%s4822 + $0x4d0] sm:$0xff]
        %v4887 = vperm.slane %v178, 0
        %v4888 = vmul.f32 %v4823, %v4887
        %v4889 = vmul.f32 %v4824, %v4887
        %v4890 = vmul.f32 %v4825, %v4887
        %v4891 = vmul.f32 %v4826, %v4887
        %v4892 = vmul.f32 %v4827, %v4887
        %v4893 = vmul.f32 %v4828, %v4887
        %v4894 = vmul.f32 %v4829, %v4887
        %v4895 = vmul.f32 %v4830, %v4887
        %v4896 = vmul.f32 %v4831, %v4887
        %v4897 = vmul.f32 %v4832, %v4887
        %v4898 = vmul.f32 %v4833, %v4887
        %v4899 = vmul.f32 %v4834, %v4887
        %v4900 = vmul.f32 %v4835, %v4887
        %v4901 = vmul.f32 %v4836, %v4887
        %v4902 = vmul.f32 %v4837, %v4887
        %v4903 = vmul.f32 %v4838, %v4887
        %v4904 = vmul.f32 %v4839, %v4887
        %v4905 = vmul.f32 %v4840, %v4887
        %v4906 = vmul.f32 %v4841, %v4887
        %v4907 = vmul.f32 %v4842, %v4887
        %v4908 = vmul.f32 %v4843, %v4887
        %v4909 = vmul.f32 %v4844, %v4887
        %v4910 = vmul.f32 %v4845, %v4887
        %v4911 = vmul.f32 %v4846, %v4887
        %v4912 = vmul.f32 %v4847, %v4887
        %v4913 = vmul.f32 %v4848, %v4887
        %v4914 = vmul.f32 %v4849, %v4887
        %v4915 = vmul.f32 %v4850, %v4887
        %v4916 = vmul.f32 %v4851, %v4887
        %v4917 = vmul.f32 %v4852, %v4887
        %v4918 = vmul.f32 %v4853, %v4887
        %v4919 = vmul.f32 %v4854, %v4887
        %v4920 = vmul.f32 %v4855, %v4887
        %v4921 = vmul.f32 %v4856, %v4887
        %v4922 = vmul.f32 %v4857, %v4887
        %v4923 = vmul.f32 %v4858, %v4887
        %v4924 = vmul.f32 %v4859, %v4887
        %v4925 = vmul.f32 %v4860, %v4887
        %v4926 = vmul.f32 %v4861, %v4887
        %v4927 = vmul.f32 %v4862, %v4887
        %v4928 = vmul.f32 %v4863, %v4887
        %v4929 = vmul.f32 %v4864, %v4887
        %v4930 = vmul.f32 %v4865, %v4887
        %v4931 = vmul.f32 %v4866, %v4887
        %v4932 = vmul.f32 %v4867, %v4887
        %v4933 = vmul.f32 %v4868, %v4887
        %v4934 = vmul.f32 %v4869, %v4887
        %v4935 = vmul.f32 %v4870, %v4887
        %v4936 = vmul.f32 %v4871, %v4887
        %v4937 = vmul.f32 %v4872, %v4887
        %v4938 = vmul.f32 %v4873, %v4887
        %v4939 = vmul.f32 %v4874, %v4887
        %v4940 = vmul.f32 %v4875, %v4887
        %v4941 = vmul.f32 %v4876, %v4887
        %v4942 = vmul.f32 %v4877, %v4887
        %v4943 = vmul.f32 %v4878, %v4887
        %v4944 = vmul.f32 %v4879, %v4887
        %v4945 = vmul.f32 %v4880, %v4887
        %v4946 = vmul.f32 %v4881, %v4887
        %v4947 = vmul.f32 %v4882, %v4887
        %v4948 = vmul.f32 %v4883, %v4887
        %v4949 = vmul.f32 %v4884, %v4887
        %v4950 = vmul.f32 %v4885, %v4887
        %v4951 = vmul.f32 %v4886, %v4887
        %v4952 = vadd.f32 %v4758, %v4888
        %v4953 = vadd.f32 %v4759, %v4889
        %v4954 = vadd.f32 %v4760, %v4890
        %v4955 = vadd.f32 %v4761, %v4891
        %v4956 = vadd.f32 %v4762, %v4892
        %v4957 = vadd.f32 %v4763, %v4893
        %v4958 = vadd.f32 %v4764, %v4894
        %v4959 = vadd.f32 %v4765, %v4895
        %v4960 = vadd.f32 %v4766, %v4896
        %v4961 = vadd.f32 %v4767, %v4897
        %v4962 = vadd.f32 %v4768, %v4898
        %v4963 = vadd.f32 %v4769, %v4899
        %v4964 = vadd.f32 %v4770, %v4900
        %v4965 = vadd.f32 %v4771, %v4901
        %v4966 = vadd.f32 %v4772, %v4902
        %v4967 = vadd.f32 %v4773, %v4903
        %v4968 = vadd.f32 %v4774, %v4904
        %v4969 = vadd.f32 %v4775, %v4905
        %v4970 = vadd.f32 %v4776, %v4906
        %v4971 = vadd.f32 %v4777, %v4907
        %v4972 = vadd.f32 %v4778, %v4908
        %v4973 = vadd.f32 %v4779, %v4909
        %v4974 = vadd.f32 %v4780, %v4910
        %v4975 = vadd.f32 %v4781, %v4911
        %v4976 = vadd.f32 %v4782, %v4912
        %v4977 = vadd.f32 %v4783, %v4913
        %v4978 = vadd.f32 %v4784, %v4914
        %v4979 = vadd.f32 %v4785, %v4915
        %v4980 = vadd.f32 %v4786, %v4916
        %v4981 = vadd.f32 %v4787, %v4917
        %v4982 = vadd.f32 %v4788, %v4918
        %v4983 = vadd.f32 %v4789, %v4919
        %v4984 = vadd.f32 %v4790, %v4920
        %v4985 = vadd.f32 %v4791, %v4921
        %v4986 = vadd.f32 %v4792, %v4922
        %v4987 = vadd.f32 %v4793, %v4923
        %v4988 = vadd.f32 %v4794, %v4924
        %v4989 = vadd.f32 %v4795, %v4925
        %v4990 = vadd.f32 %v4796, %v4926
        %v4991 = vadd.f32 %v4797, %v4927
        %v4992 = vadd.f32 %v4798, %v4928
        %v4993 = vadd.f32 %v4799, %v4929
        %v4994 = vadd.f32 %v4800, %v4930
        %v4995 = vadd.f32 %v4801, %v4931
        %v4996 = vadd.f32 %v4802, %v4932
        %v4997 = vadd.f32 %v4803, %v4933
        %v4998 = vadd.f32 %v4804, %v4934
        %v4999 = vadd.f32 %v4805, %v4935
        %v5000 = vadd.f32 %v4806, %v4936
        %v5001 = vadd.f32 %v4807, %v4937
        %v5002 = vadd.f32 %v4808, %v4938
        %v5003 = vadd.f32 %v4809, %v4939
        %v5004 = vadd.f32 %v4810, %v4940
        %v5005 = vadd.f32 %v4811, %v4941
        %v5006 = vadd.f32 %v4812, %v4942
        %v5007 = vadd.f32 %v4813, %v4943
        %v5008 = vadd.f32 %v4814, %v4944
        %v5009 = vadd.f32 %v4815, %v4945
        %v5010 = vadd.f32 %v4816, %v4946
        %v5011 = vadd.f32 %v4817, %v4947
        %v5012 = vadd.f32 %v4818, %v4948
        %v5013 = vadd.f32 %v4819, %v4949
        %v5014 = vadd.f32 %v4820, %v4950
        %v5015 = vadd.f32 %v4821, %v4951
        %v5016 = vld [vmem:[%s4822 + $0x1] sm:$0xff]
        %v5017 = vld [vmem:[%s4822 + $0x11] sm:$0xff]
        %v5018 = vld [vmem:[%s4822 + $0x21] sm:$0xff]
        %v5019 = vld [vmem:[%s4822 + $0x31] sm:$0xff]
        %v5020 = vld [vmem:[%s4822 + $0x41] sm:$0xff]
        %v5021 = vld [vmem:[%s4822 + $0x51] sm:$0xff]
        %v5022 = vld [vmem:[%s4822 + $0x61] sm:$0xff]
        %v5023 = vld [vmem:[%s4822 + $0x71] sm:$0xff]
        %v5024 = vld [vmem:[%s4822 + $0xa1] sm:$0xff]
        %v5025 = vld [vmem:[%s4822 + $0xb1] sm:$0xff]
        %v5026 = vld [vmem:[%s4822 + $0xc1] sm:$0xff]
        %v5027 = vld [vmem:[%s4822 + $0xd1] sm:$0xff]
        %v5028 = vld [vmem:[%s4822 + $0xe1] sm:$0xff]
        %v5029 = vld [vmem:[%s4822 + $0xf1] sm:$0xff]
        %v5030 = vld [vmem:[%s4822 + $0x101] sm:$0xff]
        %v5031 = vld [vmem:[%s4822 + $0x111] sm:$0xff]
        %v5032 = vld [vmem:[%s4822 + $0x141] sm:$0xff]
        %v5033 = vld [vmem:[%s4822 + $0x151] sm:$0xff]
        %v5034 = vld [vmem:[%s4822 + $0x161] sm:$0xff]
        %v5035 = vld [vmem:[%s4822 + $0x171] sm:$0xff]
        %v5036 = vld [vmem:[%s4822 + $0x181] sm:$0xff]
        %v5037 = vld [vmem:[%s4822 + $0x191] sm:$0xff]
        %v5038 = vld [vmem:[%s4822 + $0x1a1] sm:$0xff]
        %v5039 = vld [vmem:[%s4822 + $0x1b1] sm:$0xff]
        %v5040 = vld [vmem:[%s4822 + $0x1e1] sm:$0xff]
        %v5041 = vld [vmem:[%s4822 + $0x1f1] sm:$0xff]
        %v5042 = vld [vmem:[%s4822 + $0x201] sm:$0xff]
        %v5043 = vld [vmem:[%s4822 + $0x211] sm:$0xff]
        %v5044 = vld [vmem:[%s4822 + $0x221] sm:$0xff]
        %v5045 = vld [vmem:[%s4822 + $0x231] sm:$0xff]
        %v5046 = vld [vmem:[%s4822 + $0x241] sm:$0xff]
        %v5047 = vld [vmem:[%s4822 + $0x251] sm:$0xff]
        %v5048 = vld [vmem:[%s4822 + $0x281] sm:$0xff]
        %v5049 = vld [vmem:[%s4822 + $0x291] sm:$0xff]
        %v5050 = vld [vmem:[%s4822 + $0x2a1] sm:$0xff]
        %v5051 = vld [vmem:[%s4822 + $0x2b1] sm:$0xff]
        %v5052 = vld [vmem:[%s4822 + $0x2c1] sm:$0xff]
        %v5053 = vld [vmem:[%s4822 + $0x2d1] sm:$0xff]
        %v5054 = vld [vmem:[%s4822 + $0x2e1] sm:$0xff]
        %v5055 = vld [vmem:[%s4822 + $0x2f1] sm:$0xff]
        %v5056 = vld [vmem:[%s4822 + $0x321] sm:$0xff]
        %v5057 = vld [vmem:[%s4822 + $0x331] sm:$0xff]
        %v5058 = vld [vmem:[%s4822 + $0x341] sm:$0xff]
        %v5059 = vld [vmem:[%s4822 + $0x351] sm:$0xff]
        %v5060 = vld [vmem:[%s4822 + $0x361] sm:$0xff]
        %v5061 = vld [vmem:[%s4822 + $0x371] sm:$0xff]
        %v5062 = vld [vmem:[%s4822 + $0x381] sm:$0xff]
        %v5063 = vld [vmem:[%s4822 + $0x391] sm:$0xff]
        %v5064 = vld [vmem:[%s4822 + $0x3c1] sm:$0xff]
        %v5065 = vld [vmem:[%s4822 + $0x3d1] sm:$0xff]
        %v5066 = vld [vmem:[%s4822 + $0x3e1] sm:$0xff]
        %v5067 = vld [vmem:[%s4822 + $0x3f1] sm:$0xff]
        %v5068 = vld [vmem:[%s4822 + $0x401] sm:$0xff]
        %v5069 = vld [vmem:[%s4822 + $0x411] sm:$0xff]
        %v5070 = vld [vmem:[%s4822 + $0x421] sm:$0xff]
        %v5071 = vld [vmem:[%s4822 + $0x431] sm:$0xff]
        %v5072 = vld [vmem:[%s4822 + $0x461] sm:$0xff]
        %v5073 = vld [vmem:[%s4822 + $0x471] sm:$0xff]
        %v5074 = vld [vmem:[%s4822 + $0x481] sm:$0xff]
        %v5075 = vld [vmem:[%s4822 + $0x491] sm:$0xff]
        %v5076 = vld [vmem:[%s4822 + $0x4a1] sm:$0xff]
        %v5077 = vld [vmem:[%s4822 + $0x4b1] sm:$0xff]
        %v5078 = vld [vmem:[%s4822 + $0x4c1] sm:$0xff]
        %v5079 = vld [vmem:[%s4822 + $0x4d1] sm:$0xff]
        %v5080 = vperm.slane %v178, 1
        %v5081 = vmul.f32 %v5016, %v5080
        %v5082 = vmul.f32 %v5017, %v5080
        %v5083 = vmul.f32 %v5018, %v5080
        %v5084 = vmul.f32 %v5019, %v5080
        %v5085 = vmul.f32 %v5020, %v5080
        %v5086 = vmul.f32 %v5021, %v5080
        %v5087 = vmul.f32 %v5022, %v5080
        %v5088 = vmul.f32 %v5023, %v5080
        %v5089 = vmul.f32 %v5024, %v5080
        %v5090 = vmul.f32 %v5025, %v5080
        %v5091 = vmul.f32 %v5026, %v5080
        %v5092 = vmul.f32 %v5027, %v5080
        %v5093 = vmul.f32 %v5028, %v5080
        %v5094 = vmul.f32 %v5029, %v5080
        %v5095 = vmul.f32 %v5030, %v5080
        %v5096 = vmul.f32 %v5031, %v5080
        %v5097 = vmul.f32 %v5032, %v5080
        %v5098 = vmul.f32 %v5033, %v5080
        %v5099 = vmul.f32 %v5034, %v5080
        %v5100 = vmul.f32 %v5035, %v5080
        %v5101 = vmul.f32 %v5036, %v5080
        %v5102 = vmul.f32 %v5037, %v5080
        %v5103 = vmul.f32 %v5038, %v5080
        %v5104 = vmul.f32 %v5039, %v5080
        %v5105 = vmul.f32 %v5040, %v5080
        %v5106 = vmul.f32 %v5041, %v5080
        %v5107 = vmul.f32 %v5042, %v5080
        %v5108 = vmul.f32 %v5043, %v5080
        %v5109 = vmul.f32 %v5044, %v5080
        %v5110 = vmul.f32 %v5045, %v5080
        %v5111 = vmul.f32 %v5046, %v5080
        %v5112 = vmul.f32 %v5047, %v5080
        %v5113 = vmul.f32 %v5048, %v5080
        %v5114 = vmul.f32 %v5049, %v5080
        %v5115 = vmul.f32 %v5050, %v5080
        %v5116 = vmul.f32 %v5051, %v5080
        %v5117 = vmul.f32 %v5052, %v5080
        %v5118 = vmul.f32 %v5053, %v5080
        %v5119 = vmul.f32 %v5054, %v5080
        %v5120 = vmul.f32 %v5055, %v5080
        %v5121 = vmul.f32 %v5056, %v5080
        %v5122 = vmul.f32 %v5057, %v5080
        %v5123 = vmul.f32 %v5058, %v5080
        %v5124 = vmul.f32 %v5059, %v5080
        %v5125 = vmul.f32 %v5060, %v5080
        %v5126 = vmul.f32 %v5061, %v5080
        %v5127 = vmul.f32 %v5062, %v5080
        %v5128 = vmul.f32 %v5063, %v5080
        %v5129 = vmul.f32 %v5064, %v5080
        %v5130 = vmul.f32 %v5065, %v5080
        %v5131 = vmul.f32 %v5066, %v5080
        %v5132 = vmul.f32 %v5067, %v5080
        %v5133 = vmul.f32 %v5068, %v5080
        %v5134 = vmul.f32 %v5069, %v5080
        %v5135 = vmul.f32 %v5070, %v5080
        %v5136 = vmul.f32 %v5071, %v5080
        %v5137 = vmul.f32 %v5072, %v5080
        %v5138 = vmul.f32 %v5073, %v5080
        %v5139 = vmul.f32 %v5074, %v5080
        %v5140 = vmul.f32 %v5075, %v5080
        %v5141 = vmul.f32 %v5076, %v5080
        %v5142 = vmul.f32 %v5077, %v5080
        %v5143 = vmul.f32 %v5078, %v5080
        %v5144 = vmul.f32 %v5079, %v5080
        %v5145 = vadd.f32 %v4952, %v5081
        %v5146 = vadd.f32 %v4953, %v5082
        %v5147 = vadd.f32 %v4954, %v5083
        %v5148 = vadd.f32 %v4955, %v5084
        %v5149 = vadd.f32 %v4956, %v5085
        %v5150 = vadd.f32 %v4957, %v5086
        %v5151 = vadd.f32 %v4958, %v5087
        %v5152 = vadd.f32 %v4959, %v5088
        %v5153 = vadd.f32 %v4960, %v5089
        %v5154 = vadd.f32 %v4961, %v5090
        %v5155 = vadd.f32 %v4962, %v5091
        %v5156 = vadd.f32 %v4963, %v5092
        %v5157 = vadd.f32 %v4964, %v5093
        %v5158 = vadd.f32 %v4965, %v5094
        %v5159 = vadd.f32 %v4966, %v5095
        %v5160 = vadd.f32 %v4967, %v5096
        %v5161 = vadd.f32 %v4968, %v5097
        %v5162 = vadd.f32 %v4969, %v5098
        %v5163 = vadd.f32 %v4970, %v5099
        %v5164 = vadd.f32 %v4971, %v5100
        %v5165 = vadd.f32 %v4972, %v5101
        %v5166 = vadd.f32 %v4973, %v5102
        %v5167 = vadd.f32 %v4974, %v5103
        %v5168 = vadd.f32 %v4975, %v5104
        %v5169 = vadd.f32 %v4976, %v5105
        %v5170 = vadd.f32 %v4977, %v5106
        %v5171 = vadd.f32 %v4978, %v5107
        %v5172 = vadd.f32 %v4979, %v5108
        %v5173 = vadd.f32 %v4980, %v5109
        %v5174 = vadd.f32 %v4981, %v5110
        %v5175 = vadd.f32 %v4982, %v5111
        %v5176 = vadd.f32 %v4983, %v5112
        %v5177 = vadd.f32 %v4984, %v5113
        %v5178 = vadd.f32 %v4985, %v5114
        %v5179 = vadd.f32 %v4986, %v5115
        %v5180 = vadd.f32 %v4987, %v5116
        %v5181 = vadd.f32 %v4988, %v5117
        %v5182 = vadd.f32 %v4989, %v5118
        %v5183 = vadd.f32 %v4990, %v5119
        %v5184 = vadd.f32 %v4991, %v5120
        %v5185 = vadd.f32 %v4992, %v5121
        %v5186 = vadd.f32 %v4993, %v5122
        %v5187 = vadd.f32 %v4994, %v5123
        %v5188 = vadd.f32 %v4995, %v5124
        %v5189 = vadd.f32 %v4996, %v5125
        %v5190 = vadd.f32 %v4997, %v5126
        %v5191 = vadd.f32 %v4998, %v5127
        %v5192 = vadd.f32 %v4999, %v5128
        %v5193 = vadd.f32 %v5000, %v5129
        %v5194 = vadd.f32 %v5001, %v5130
        %v5195 = vadd.f32 %v5002, %v5131
        %v5196 = vadd.f32 %v5003, %v5132
        %v5197 = vadd.f32 %v5004, %v5133
        %v5198 = vadd.f32 %v5005, %v5134
        %v5199 = vadd.f32 %v5006, %v5135
        %v5200 = vadd.f32 %v5007, %v5136
        %v5201 = vadd.f32 %v5008, %v5137
        %v5202 = vadd.f32 %v5009, %v5138
        %v5203 = vadd.f32 %v5010, %v5139
        %v5204 = vadd.f32 %v5011, %v5140
        %v5205 = vadd.f32 %v5012, %v5141
        %v5206 = vadd.f32 %v5013, %v5142
        %v5207 = vadd.f32 %v5014, %v5143
        %v5208 = vadd.f32 %v5015, %v5144
        %v5209 = vld [vmem:[%s4822 + $0x2] sm:$0xff]
        %v5210 = vld [vmem:[%s4822 + $0x12] sm:$0xff]
        %v5211 = vld [vmem:[%s4822 + $0x22] sm:$0xff]
        %v5212 = vld [vmem:[%s4822 + $0x32] sm:$0xff]
        %v5213 = vld [vmem:[%s4822 + $0x42] sm:$0xff]
        %v5214 = vld [vmem:[%s4822 + $0x52] sm:$0xff]
        %v5215 = vld [vmem:[%s4822 + $0x62] sm:$0xff]
        %v5216 = vld [vmem:[%s4822 + $0x72] sm:$0xff]
        %v5217 = vld [vmem:[%s4822 + $0xa2] sm:$0xff]
        %v5218 = vld [vmem:[%s4822 + $0xb2] sm:$0xff]
        %v5219 = vld [vmem:[%s4822 + $0xc2] sm:$0xff]
        %v5220 = vld [vmem:[%s4822 + $0xd2] sm:$0xff]
        %v5221 = vld [vmem:[%s4822 + $0xe2] sm:$0xff]
        %v5222 = vld [vmem:[%s4822 + $0xf2] sm:$0xff]
        %v5223 = vld [vmem:[%s4822 + $0x102] sm:$0xff]
        %v5224 = vld [vmem:[%s4822 + $0x112] sm:$0xff]
        %v5225 = vld [vmem:[%s4822 + $0x142] sm:$0xff]
        %v5226 = vld [vmem:[%s4822 + $0x152] sm:$0xff]
        %v5227 = vld [vmem:[%s4822 + $0x162] sm:$0xff]
        %v5228 = vld [vmem:[%s4822 + $0x172] sm:$0xff]
        %v5229 = vld [vmem:[%s4822 + $0x182] sm:$0xff]
        %v5230 = vld [vmem:[%s4822 + $0x192] sm:$0xff]
        %v5231 = vld [vmem:[%s4822 + $0x1a2] sm:$0xff]
        %v5232 = vld [vmem:[%s4822 + $0x1b2] sm:$0xff]
        %v5233 = vld [vmem:[%s4822 + $0x1e2] sm:$0xff]
        %v5234 = vld [vmem:[%s4822 + $0x1f2] sm:$0xff]
        %v5235 = vld [vmem:[%s4822 + $0x202] sm:$0xff]
        %v5236 = vld [vmem:[%s4822 + $0x212] sm:$0xff]
        %v5237 = vld [vmem:[%s4822 + $0x222] sm:$0xff]
        %v5238 = vld [vmem:[%s4822 + $0x232] sm:$0xff]
        %v5239 = vld [vmem:[%s4822 + $0x242] sm:$0xff]
        %v5240 = vld [vmem:[%s4822 + $0x252] sm:$0xff]
        %v5241 = vld [vmem:[%s4822 + $0x282] sm:$0xff]
        %v5242 = vld [vmem:[%s4822 + $0x292] sm:$0xff]
        %v5243 = vld [vmem:[%s4822 + $0x2a2] sm:$0xff]
        %v5244 = vld [vmem:[%s4822 + $0x2b2] sm:$0xff]
        %v5245 = vld [vmem:[%s4822 + $0x2c2] sm:$0xff]
        %v5246 = vld [vmem:[%s4822 + $0x2d2] sm:$0xff]
        %v5247 = vld [vmem:[%s4822 + $0x2e2] sm:$0xff]
        %v5248 = vld [vmem:[%s4822 + $0x2f2] sm:$0xff]
        %v5249 = vld [vmem:[%s4822 + $0x322] sm:$0xff]
        %v5250 = vld [vmem:[%s4822 + $0x332] sm:$0xff]
        %v5251 = vld [vmem:[%s4822 + $0x342] sm:$0xff]
        %v5252 = vld [vmem:[%s4822 + $0x352] sm:$0xff]
        %v5253 = vld [vmem:[%s4822 + $0x362] sm:$0xff]
        %v5254 = vld [vmem:[%s4822 + $0x372] sm:$0xff]
        %v5255 = vld [vmem:[%s4822 + $0x382] sm:$0xff]
        %v5256 = vld [vmem:[%s4822 + $0x392] sm:$0xff]
        %v5257 = vld [vmem:[%s4822 + $0x3c2] sm:$0xff]
        %v5258 = vld [vmem:[%s4822 + $0x3d2] sm:$0xff]
        %v5259 = vld [vmem:[%s4822 + $0x3e2] sm:$0xff]
        %v5260 = vld [vmem:[%s4822 + $0x3f2] sm:$0xff]
        %v5261 = vld [vmem:[%s4822 + $0x402] sm:$0xff]
        %v5262 = vld [vmem:[%s4822 + $0x412] sm:$0xff]
        %v5263 = vld [vmem:[%s4822 + $0x422] sm:$0xff]
        %v5264 = vld [vmem:[%s4822 + $0x432] sm:$0xff]
        %v5265 = vld [vmem:[%s4822 + $0x462] sm:$0xff]
        %v5266 = vld [vmem:[%s4822 + $0x472] sm:$0xff]
        %v5267 = vld [vmem:[%s4822 + $0x482] sm:$0xff]
        %v5268 = vld [vmem:[%s4822 + $0x492] sm:$0xff]
        %v5269 = vld [vmem:[%s4822 + $0x4a2] sm:$0xff]
        %v5270 = vld [vmem:[%s4822 + $0x4b2] sm:$0xff]
        %v5271 = vld [vmem:[%s4822 + $0x4c2] sm:$0xff]
        %v5272 = vld [vmem:[%s4822 + $0x4d2] sm:$0xff]
        %v5273 = vperm.slane %v178, 2
        %v5274 = vmul.f32 %v5209, %v5273
        %v5275 = vmul.f32 %v5210, %v5273
        %v5276 = vmul.f32 %v5211, %v5273
        %v5277 = vmul.f32 %v5212, %v5273
        %v5278 = vmul.f32 %v5213, %v5273
        %v5279 = vmul.f32 %v5214, %v5273
        %v5280 = vmul.f32 %v5215, %v5273
        %v5281 = vmul.f32 %v5216, %v5273
        %v5282 = vmul.f32 %v5217, %v5273
        %v5283 = vmul.f32 %v5218, %v5273
        %v5284 = vmul.f32 %v5219, %v5273
        %v5285 = vmul.f32 %v5220, %v5273
        %v5286 = vmul.f32 %v5221, %v5273
        %v5287 = vmul.f32 %v5222, %v5273
        %v5288 = vmul.f32 %v5223, %v5273
        %v5289 = vmul.f32 %v5224, %v5273
        %v5290 = vmul.f32 %v5225, %v5273
        %v5291 = vmul.f32 %v5226, %v5273
        %v5292 = vmul.f32 %v5227, %v5273
        %v5293 = vmul.f32 %v5228, %v5273
        %v5294 = vmul.f32 %v5229, %v5273
        %v5295 = vmul.f32 %v5230, %v5273
        %v5296 = vmul.f32 %v5231, %v5273
        %v5297 = vmul.f32 %v5232, %v5273
        %v5298 = vmul.f32 %v5233, %v5273
        %v5299 = vmul.f32 %v5234, %v5273
        %v5300 = vmul.f32 %v5235, %v5273
        %v5301 = vmul.f32 %v5236, %v5273
        %v5302 = vmul.f32 %v5237, %v5273
        %v5303 = vmul.f32 %v5238, %v5273
        %v5304 = vmul.f32 %v5239, %v5273
        %v5305 = vmul.f32 %v5240, %v5273
        %v5306 = vmul.f32 %v5241, %v5273
        %v5307 = vmul.f32 %v5242, %v5273
        %v5308 = vmul.f32 %v5243, %v5273
        %v5309 = vmul.f32 %v5244, %v5273
        %v5310 = vmul.f32 %v5245, %v5273
        %v5311 = vmul.f32 %v5246, %v5273
        %v5312 = vmul.f32 %v5247, %v5273
        %v5313 = vmul.f32 %v5248, %v5273
        %v5314 = vmul.f32 %v5249, %v5273
        %v5315 = vmul.f32 %v5250, %v5273
        %v5316 = vmul.f32 %v5251, %v5273
        %v5317 = vmul.f32 %v5252, %v5273
        %v5318 = vmul.f32 %v5253, %v5273
        %v5319 = vmul.f32 %v5254, %v5273
        %v5320 = vmul.f32 %v5255, %v5273
        %v5321 = vmul.f32 %v5256, %v5273
        %v5322 = vmul.f32 %v5257, %v5273
        %v5323 = vmul.f32 %v5258, %v5273
        %v5324 = vmul.f32 %v5259, %v5273
        %v5325 = vmul.f32 %v5260, %v5273
        %v5326 = vmul.f32 %v5261, %v5273
        %v5327 = vmul.f32 %v5262, %v5273
        %v5328 = vmul.f32 %v5263, %v5273
        %v5329 = vmul.f32 %v5264, %v5273
        %v5330 = vmul.f32 %v5265, %v5273
        %v5331 = vmul.f32 %v5266, %v5273
        %v5332 = vmul.f32 %v5267, %v5273
        %v5333 = vmul.f32 %v5268, %v5273
        %v5334 = vmul.f32 %v5269, %v5273
        %v5335 = vmul.f32 %v5270, %v5273
        %v5336 = vmul.f32 %v5271, %v5273
        %v5337 = vmul.f32 %v5272, %v5273
        %v5338 = vadd.f32 %v5145, %v5274
        %v5339 = vadd.f32 %v5146, %v5275
        %v5340 = vadd.f32 %v5147, %v5276
        %v5341 = vadd.f32 %v5148, %v5277
        %v5342 = vadd.f32 %v5149, %v5278
        %v5343 = vadd.f32 %v5150, %v5279
        %v5344 = vadd.f32 %v5151, %v5280
        %v5345 = vadd.f32 %v5152, %v5281
        %v5346 = vadd.f32 %v5153, %v5282
        %v5347 = vadd.f32 %v5154, %v5283
        %v5348 = vadd.f32 %v5155, %v5284
        %v5349 = vadd.f32 %v5156, %v5285
        %v5350 = vadd.f32 %v5157, %v5286
        %v5351 = vadd.f32 %v5158, %v5287
        %v5352 = vadd.f32 %v5159, %v5288
        %v5353 = vadd.f32 %v5160, %v5289
        %v5354 = vadd.f32 %v5161, %v5290
        %v5355 = vadd.f32 %v5162, %v5291
        %v5356 = vadd.f32 %v5163, %v5292
        %v5357 = vadd.f32 %v5164, %v5293
        %v5358 = vadd.f32 %v5165, %v5294
        %v5359 = vadd.f32 %v5166, %v5295
        %v5360 = vadd.f32 %v5167, %v5296
        %v5361 = vadd.f32 %v5168, %v5297
        %v5362 = vadd.f32 %v5169, %v5298
        %v5363 = vadd.f32 %v5170, %v5299
        %v5364 = vadd.f32 %v5171, %v5300
        %v5365 = vadd.f32 %v5172, %v5301
        %v5366 = vadd.f32 %v5173, %v5302
        %v5367 = vadd.f32 %v5174, %v5303
        %v5368 = vadd.f32 %v5175, %v5304
        %v5369 = vadd.f32 %v5176, %v5305
        %v5370 = vadd.f32 %v5177, %v5306
        %v5371 = vadd.f32 %v5178, %v5307
        %v5372 = vadd.f32 %v5179, %v5308
        %v5373 = vadd.f32 %v5180, %v5309
        %v5374 = vadd.f32 %v5181, %v5310
        %v5375 = vadd.f32 %v5182, %v5311
        %v5376 = vadd.f32 %v5183, %v5312
        %v5377 = vadd.f32 %v5184, %v5313
        %v5378 = vadd.f32 %v5185, %v5314
        %v5379 = vadd.f32 %v5186, %v5315
        %v5380 = vadd.f32 %v5187, %v5316
        %v5381 = vadd.f32 %v5188, %v5317
        %v5382 = vadd.f32 %v5189, %v5318
        %v5383 = vadd.f32 %v5190, %v5319
        %v5384 = vadd.f32 %v5191, %v5320
        %v5385 = vadd.f32 %v5192, %v5321
        %v5386 = vadd.f32 %v5193, %v5322
        %v5387 = vadd.f32 %v5194, %v5323
        %v5388 = vadd.f32 %v5195, %v5324
        %v5389 = vadd.f32 %v5196, %v5325
        %v5390 = vadd.f32 %v5197, %v5326
        %v5391 = vadd.f32 %v5198, %v5327
        %v5392 = vadd.f32 %v5199, %v5328
        %v5393 = vadd.f32 %v5200, %v5329
        %v5394 = vadd.f32 %v5201, %v5330
        %v5395 = vadd.f32 %v5202, %v5331
        %v5396 = vadd.f32 %v5203, %v5332
        %v5397 = vadd.f32 %v5204, %v5333
        %v5398 = vadd.f32 %v5205, %v5334
        %v5399 = vadd.f32 %v5206, %v5335
        %v5400 = vadd.f32 %v5207, %v5336
        %v5401 = vadd.f32 %v5208, %v5337
        %5402 = vst [vmem:[%s166] sm:$0xff] %v5338
        %5403 = vst [vmem:[%s166 + $0x8] sm:$0xff] %v5339
        %5404 = vst [vmem:[%s166 + $0x10] sm:$0xff] %v5340
        %5405 = vst [vmem:[%s166 + $0x18] sm:$0xff] %v5341
        %5406 = vst [vmem:[%s166 + $0x20] sm:$0xff] %v5342
        %5407 = vst [vmem:[%s166 + $0x28] sm:$0xff] %v5343
        %5408 = vst [vmem:[%s166 + $0x30] sm:$0xff] %v5344
        %5409 = vst [vmem:[%s166 + $0x38] sm:$0xff] %v5345
        %5410 = vst [vmem:[%s166 + $0x40] sm:$0xff] %v5346
        %5411 = vst [vmem:[%s166 + $0x48] sm:$0xff] %v5347
        %5412 = vst [vmem:[%s166 + $0x50] sm:$0xff] %v5348
        %5413 = vst [vmem:[%s166 + $0x58] sm:$0xff] %v5349
        %5414 = vst [vmem:[%s166 + $0x60] sm:$0xff] %v5350
        %5415 = vst [vmem:[%s166 + $0x68] sm:$0xff] %v5351
        %5416 = vst [vmem:[%s166 + $0x70] sm:$0xff] %v5352
        %5417 = vst [vmem:[%s166 + $0x78] sm:$0xff] %v5353
        %5418 = vst [vmem:[%s166 + $0x80] sm:$0xff] %v5354
        %5419 = vst [vmem:[%s166 + $0x88] sm:$0xff] %v5355
        %5420 = vst [vmem:[%s166 + $0x90] sm:$0xff] %v5356
        %5421 = vst [vmem:[%s166 + $0x98] sm:$0xff] %v5357
        %5422 = vst [vmem:[%s166 + $0xa0] sm:$0xff] %v5358
        %5423 = vst [vmem:[%s166 + $0xa8] sm:$0xff] %v5359
        %5424 = vst [vmem:[%s166 + $0xb0] sm:$0xff] %v5360
        %5425 = vst [vmem:[%s166 + $0xb8] sm:$0xff] %v5361
        %5426 = vst [vmem:[%s166 + $0xc0] sm:$0xff] %v5362
        %5427 = vst [vmem:[%s166 + $0xc8] sm:$0xff] %v5363
        %5428 = vst [vmem:[%s166 + $0xd0] sm:$0xff] %v5364
        %5429 = vst [vmem:[%s166 + $0xd8] sm:$0xff] %v5365
        %5430 = vst [vmem:[%s166 + $0xe0] sm:$0xff] %v5366
        %5431 = vst [vmem:[%s166 + $0xe8] sm:$0xff] %v5367
        %5432 = vst [vmem:[%s166 + $0xf0] sm:$0xff] %v5368
        %5433 = vst [vmem:[%s166 + $0xf8] sm:$0xff] %v5369
        %5434 = vst [vmem:[%s166 + $0x100] sm:$0xff] %v5370
        %5435 = vst [vmem:[%s166 + $0x108] sm:$0xff] %v5371
        %5436 = vst [vmem:[%s166 + $0x110] sm:$0xff] %v5372
        %5437 = vst [vmem:[%s166 + $0x118] sm:$0xff] %v5373
        %5438 = vst [vmem:[%s166 + $0x120] sm:$0xff] %v5374
        %5439 = vst [vmem:[%s166 + $0x128] sm:$0xff] %v5375
        %5440 = vst [vmem:[%s166 + $0x130] sm:$0xff] %v5376
        %5441 = vst [vmem:[%s166 + $0x138] sm:$0xff] %v5377
        %5442 = vst [vmem:[%s166 + $0x140] sm:$0xff] %v5378
        %5443 = vst [vmem:[%s166 + $0x148] sm:$0xff] %v5379
        %5444 = vst [vmem:[%s166 + $0x150] sm:$0xff] %v5380
        %5445 = vst [vmem:[%s166 + $0x158] sm:$0xff] %v5381
        %5446 = vst [vmem:[%s166 + $0x160] sm:$0xff] %v5382
        %5447 = vst [vmem:[%s166 + $0x168] sm:$0xff] %v5383
        %5448 = vst [vmem:[%s166 + $0x170] sm:$0xff] %v5384
        %5449 = vst [vmem:[%s166 + $0x178] sm:$0xff] %v5385
        %5450 = vst [vmem:[%s166 + $0x180] sm:$0xff] %v5386
        %5451 = vst [vmem:[%s166 + $0x188] sm:$0xff] %v5387
        %5452 = vst [vmem:[%s166 + $0x190] sm:$0xff] %v5388
        %5453 = vst [vmem:[%s166 + $0x198] sm:$0xff] %v5389
        %5454 = vst [vmem:[%s166 + $0x1a0] sm:$0xff] %v5390
        %5455 = vst [vmem:[%s166 + $0x1a8] sm:$0xff] %v5391
        %5456 = vst [vmem:[%s166 + $0x1b0] sm:$0xff] %v5392
        %5457 = vst [vmem:[%s166 + $0x1b8] sm:$0xff] %v5393
        %5458 = vst [vmem:[%s166 + $0x1c0] sm:$0xff] %v5394
        %5459 = vst [vmem:[%s166 + $0x1c8] sm:$0xff] %v5395
        %5460 = vst [vmem:[%s166 + $0x1d0] sm:$0xff] %v5396
        %5461 = vst [vmem:[%s166 + $0x1d8] sm:$0xff] %v5397
        %5462 = vst [vmem:[%s166 + $0x1e0] sm:$0xff] %v5398
        %5463 = vst [vmem:[%s166 + $0x1e8] sm:$0xff] %v5399
        %5464 = vst [vmem:[%s166 + $0x1f0] sm:$0xff] %v5400
        %5465 = vst [vmem:[%s166 + $0x1f8] sm:$0xff] %v5401
        %s5466 = sand.u32 %s93, 1
        %s5467 = scalar_lea.sflag [#allocation3], %s5466
        %s5468 = sand.u32 %s93, 1
        %s5469 = smul.addr %s5468, 512
        %s5470 = scalar_lea.vmem [#allocation2], %s5469
        // Predicated region
        $region33: #{tpu_custom_call.1} parent=31 // pred_check
          %p5471 = pneg %p103
        $region34: #{tpu_custom_call.1} parent=31 // pred_check_branch
          %5473 = sbr.rel (%p5471) target = $region36
        $region35: #{tpu_custom_call.1} parent=31 // pred_region
          %s5474 = smul.u32 8, %s17
          %5476 = vsyncadd %s5467, 0
          %s5477 = smul.addr %s5474, 8
          %s5478 = smul.addr %s5477, 8
          %s5479 = scalar_lea.hbm %s3, %s5478
          %s5480 = sshll.u32 %s5470, 4
          %s5481 = int_to_ptr.vmem [resolvable:$true] %s5480
          %s5482 = sshll.u32 %s5479, 4
          %s5483 = int_to_ptr.hbm [resolvable:$true] %s5482
          %5488 = dma.vmem_to_hbm [thread:$0]  %s5481, 8192, %s5483, %s5467, 128, 128, 8
        $region36: #{tpu_custom_call.1} parent=31 // pred_fallthru
          _
      $region32: #{tpu_custom_call.1} parent=5 // pred_fallthru
        _
      %p5489 = scmp.le.s32.totalorder 2, %s12
      // Predicated region
      $region37: #{tpu_custom_call.1} parent=5 // pred_check
        %p5490 = pneg %p5489
      $region38: #{tpu_custom_call.1} parent=5 // pred_check_branch
        %5492 = sbr.rel (%p5490) target = $region40
      $region39: #{tpu_custom_call.1} parent=5 // pred_region
        %s5493 = ssub.s32 %s12, 2
        // Predicated region
        $region41: #{tpu_custom_call.1} parent=39 // pred_check
          %p5494 = pneg %p109
        $region42: #{tpu_custom_call.1} parent=39 // pred_check_branch
          %5496 = sbr.rel (%p5494) target = $region44
        $region43: #{tpu_custom_call.1} parent=39 // pred_region
          %s5497 = sand.u32 %s94, 1
          %s5498 = scalar_lea.sflag [#allocation3], %s5497
          %s5499 = sand.u32 %s94, 1
          %s5500 = smul.addr %s5499, 512
          %s5501 = scalar_lea.vmem [#allocation2], %s5500
          %5503 = dma.done %s5498, 8192
        $region44: #{tpu_custom_call.1} parent=39 // pred_fallthru
          _
      $region40: #{tpu_custom_call.1} parent=5 // pred_fallthru
        _
    $region6: #{tpu_custom_call.1} parent=1 // loop_footer
      %s16 = sadd.s32 1, %s12
    $region7: #{tpu_custom_call.1} parent=1 // loop_footer_branch
      %11 = sbr.rel target = $region3
    $region8: #{tpu_custom_call.1} parent=1 // loop_exit
      _
    %5504 = vsyncpa [#allocation3], 1
    %s5505 = scalar_lea.sflag [#allocation3], 1
    %5506 = vsyncpa %s5505, 1

</llo_original>
